<compile_context>
chip_gen: v6e
topology: v6e:2x2x1
jax: 0.10.0
libtpu: 0.0.40
codegen_flags: <defaults>
</compile_context>

<pallas_src>
import math
import jax
import jax.numpy as jnp
from jax.experimental import pallas as pl
from jax.experimental.pallas import tpu as pltpu

# ---------------- configuration (the "args" of AU) ----------------
B = 2            # batch
L = 16           # seq_len
ENC_IN = 7       # args.enc_in
D_MODEL = 32     # args.d_model
N_HEADS = 4      # args.n_heads
D_FF = 64        # args.d_ff
E_LAYERS = 2     # args.e_layers
OUT_SIZE = 7     # args.out_size
E_HEAD = D_MODEL // N_HEADS
EPS = 1e-5

# TODO(synk): args.distil=True path (ConvLayer: conv3 + BatchNorm1d + ELU + MaxPool) is
# intentionally disabled (distil=False), matching the optional branch in __init__.

# rows of the per-layer packed parameter slab ([E_LAYERS, 8, 128])
_R_BQKV, _R_BO, _R_LN1W, _R_LN1B, _R_B1, _R_B2, _R_LN2W, _R_LN2B = range(8)
# rows of the final packed parameter slab ([8, 128])
_F_LNW, _F_LNB, _F_BP = range(3)


def _layer_norm(x, w, b):
    mu = jnp.mean(x, axis=-1, keepdims=True)
    var = jnp.mean((x - mu) ** 2, axis=-1, keepdims=True)
    return (x - mu) * jax.lax.rsqrt(var + EPS) * w + b


def _softmax_last(s):
    s = s - jnp.max(s, axis=-1, keepdims=True)
    p = jnp.exp(s)
    return p * pl.reciprocal(jnp.sum(p, axis=-1, keepdims=True), approx=True)


# ---------------- single fused Pallas kernel ----------------
def au_fused_kernel(xp_ref, wemb_ref, pe_ref, wqkv_ref, wo_ref, w1_ref, w2_ref,
                    vec_ref, wp_ref, fin_ref, o_ref):
    # ---- token embedding (3 circular taps packed into one matmul) + positional emb ----
    h = (jnp.dot(xp_ref[...], wemb_ref[...], preferred_element_type=jnp.float32)
         + pe_ref[...])                                               # [B*L, D]

    def unpack_layer(l):
        vec = vec_ref[l]                                              # [8, 128]
        return (vec[_R_BQKV:_R_BQKV + 1, :3 * D_MODEL],
                vec[_R_BO:_R_BO + 1, :D_MODEL],
                vec[_R_LN1W:_R_LN1W + 1, :D_MODEL],
                vec[_R_LN1B:_R_LN1B + 1, :D_MODEL],
                vec[_R_B1:_R_B1 + 1, :D_FF],
                vec[_R_B2:_R_B2 + 1, :D_MODEL],
                vec[_R_LN2W:_R_LN2W + 1, :D_MODEL],
                vec[_R_LN2B:_R_LN2B + 1, :D_MODEL])

    def ffn_block(hn, w1, w2, b1, b2, ln2w, ln2b):
        y = jnp.maximum(jnp.dot(hn, w1, preferred_element_type=jnp.float32) + b1, 0.0)
        y = jnp.dot(y, w2, preferred_element_type=jnp.float32) + b2
        return _layer_norm(hn + y, ln2w, ln2b)

    # ---- full-length encoder layers (all but the last), statically unrolled ----
    for l in range(E_LAYERS - 1):
        bqkv, bo, ln1w, ln1b, b1, b2, ln2w, ln2b = unpack_layer(l)
        wo_l = wo_ref[l]                                              # [D, D]
        # fused QKV projection (1/sqrt(E_HEAD) folded into the Q block of W/b)
        qkv = jnp.dot(h, wqkv_ref[l], preferred_element_type=jnp.float32) + bqkv
        qkv3 = qkv.reshape(B, L, 3 * D_MODEL)                         # [B, L, 3D]

        attn = None
        for hh in range(N_HEADS):                                     # static, 4 iters
            q_sl = slice(hh * E_HEAD, (hh + 1) * E_HEAD)
            k_sl = slice(D_MODEL + hh * E_HEAD, D_MODEL + (hh + 1) * E_HEAD)
            v_sl = slice(2 * D_MODEL + hh * E_HEAD, 2 * D_MODEL + (hh + 1) * E_HEAD)
            qh = qkv3[:, :, q_sl]                                     # [B, L, E]
            kh = qkv3[:, :, k_sl]
            vh = qkv3[:, :, v_sl]
            p = _softmax_last(jnp.einsum('ble,bse->bls', qh, kh,
                                         preferred_element_type=jnp.float32))
            oh = jnp.einsum('bls,bse->ble', p, vh,
                            preferred_element_type=jnp.float32).reshape(B * L, E_HEAD)
            # per-head slice of W_o (== concat-heads @ W_o, without the lane concat)
            proj = jnp.dot(oh, wo_l[q_sl, :], preferred_element_type=jnp.float32)
            attn = proj if attn is None else attn + proj

        h = h + attn + bo                                             # residual
        hn = _layer_norm(h, ln1w, ln1b)
        h = ffn_block(hn, w1_ref[l], w2_ref[l], b1, b2, ln2w, ln2b)

    # ---- last encoder layer, truncated to the last time step per batch ----
    # Only enc_out[:, -1, :] is consumed downstream (output_attention=False,
    # distil=False), so queries / residual / FFN / norms run on B rows only;
    # keys/values still use the full sequence.
    l = E_LAYERS - 1
    bqkv, bo, ln1w, ln1b, b1, b2, ln2w, ln2b = unpack_layer(l)
    wqkv_l = wqkv_ref[l]
    wo_l = wo_ref[l]
    h_last = h.reshape(B, L, D_MODEL)[:, L - 1, :]                    # [B, D]
    kv = (jnp.dot(h, wqkv_l[:, D_MODEL:], preferred_element_type=jnp.float32)
          + bqkv[:, D_MODEL:])                                        # [B*L, 2D]
    q_last = (jnp.dot(h_last, wqkv_l[:, :D_MODEL],
                      preferred_element_type=jnp.float32) + bqkv[:, :D_MODEL])  # [B, D]
    kv3 = kv.reshape(B, L, 2 * D_MODEL)

    attn = None
    for hh in range(N_HEADS):
        hd_sl = slice(hh * E_HEAD, (hh + 1) * E_HEAD)
        v_sl = slice(D_MODEL + hh * E_HEAD, D_MODEL + (hh + 1) * E_HEAD)
        qh = q_last[:, hd_sl].reshape(B, 1, E_HEAD)                   # [B, 1, E]
        kh = kv3[:, :, hd_sl]                                         # [B, L, E]
        vh = kv3[:, :, v_sl]
        p = _softmax_last(jnp.einsum('ble,bse->bls', qh, kh,
                                     preferred_element_type=jnp.float32))  # [B, 1, L]
        oh = jnp.einsum('bls,bse->ble', p, vh,
                        preferred_element_type=jnp.float32).reshape(B, E_HEAD)
        proj = jnp.dot(oh, wo_l[hd_sl, :], preferred_element_type=jnp.float32)
        attn = proj if attn is None else attn + proj

    hl = h_last + attn + bo                                           # [B, D]
    hn = _layer_norm(hl, ln1w, ln1b)
    h_out = ffn_block(hn, w1_ref[l], w2_ref[l], b1, b2, ln2w, ln2b)   # [B, D]

    # ---- final LayerNorm + projection on the last time step ----
    fin = fin_ref[...]
    lnw = fin[_F_LNW:_F_LNW + 1, :D_MODEL]
    lnb = fin[_F_LNB:_F_LNB + 1, :D_MODEL]
    bp = fin[_F_BP:_F_BP + 1, :OUT_SIZE]
    last_n = _layer_norm(h_out, lnw, lnb)
    out = jnp.dot(last_n, wp_ref[...], preferred_element_type=jnp.float32) + bp
    o_ref[...] = out.reshape(B, 1, OUT_SIZE)


# ---------------- one-time parameter packing (hoisted out of the per-call path) -------
def pack_params(params, pe):
    """Pack all weights / PE into kernel operand layout.  Data-independent: call ONCE."""
    scale = 1.0 / math.sqrt(E_HEAD)
    w_emb = jnp.concatenate([params['w0'], params['w1'], params['w2']], axis=0)
    pe_tiled = jnp.tile(pe, (B, 1))                                   # [B*L, D]

    wqkv, wo, w1, w2, vecs = [], [], [], [], []
    for lp in params['layers']:
        wqkv.append(jnp.concatenate([lp['wq'] * scale, lp['wk'], lp['wv']], axis=1))
        wo.append(lp['wo'])
        w1.append(lp['w1'])
        w2.append(lp['w2'])
        slab = jnp.zeros((8, 128), jnp.float32)
        slab = slab.at[_R_BQKV, :3 * D_MODEL].set(
            jnp.concatenate([lp['bq'][0] * scale, lp['bk'][0], lp['bv'][0]]))
        slab = slab.at[_R_BO, :D_MODEL].set(lp['bo'][0])
        slab = slab.at[_R_LN1W, :D_MODEL].set(lp['ln1w'][0])
        slab = slab.at[_R_LN1B, :D_MODEL].set(lp['ln1b'][0])
        slab = slab.at[_R_B1, :D_FF].set(lp['b1'][0])
        slab = slab.at[_R_B2, :D_MODEL].set(lp['b2'][0])
        slab = slab.at[_R_LN2W, :D_MODEL].set(lp['ln2w'][0])
        slab = slab.at[_R_LN2B, :D_MODEL].set(lp['ln2b'][0])
        vecs.append(slab)

    fin = jnp.zeros((8, 128), jnp.float32)
    fin = fin.at[_F_LNW, :D_MODEL].set(params['lnw'][0])
    fin = fin.at[_F_LNB, :D_MODEL].set(params['lnb'][0])
    fin = fin.at[_F_BP, :OUT_SIZE].set(params['bp'][0])

    return {
        'w_emb': w_emb,                 # [3*ENC_IN, D]
        'pe': pe_tiled,                 # [B*L, D]
        'wqkv': jnp.stack(wqkv),        # [E_LAYERS, D, 3D]
        'wo': jnp.stack(wo),            # [E_LAYERS, D, D]
        'w1': jnp.stack(w1),            # [E_LAYERS, D, D_FF]
        'w2': jnp.stack(w2),            # [E_LAYERS, D_FF, D]
        'vecs': jnp.stack(vecs),        # [E_LAYERS, 8, 128]
        'wp': params['wp'],             # [D, OUT_SIZE]
        'fin': fin,                     # [8, 128]
    }


# ---------------- jitted forward: only x-dependent work + the fused kernel -----------
@jax.jit
def au_forward(x_enc, packed):
    # circular-conv taps: x[t-1], x[t], x[t+1] packed along channels -> one matmul
    xm = jnp.roll(x_enc, 1, axis=1)
    xp = jnp.roll(x_enc, -1, axis=1)
    x_packed = jnp.concatenate([xm, x_enc, xp], axis=-1).reshape(B * L, 3 * ENC_IN)

    vmem = pl.BlockSpec(memory_space=pltpu.MemorySpace.VMEM)
    return pl.pallas_call(
        au_fused_kernel,
        out_shape=jax.ShapeDtypeStruct((B, 1, OUT_SIZE), jnp.float32),
        in_specs=[vmem] * 10,
        out_specs=vmem,
    )(x_packed, packed['w_emb'], packed['pe'], packed['wqkv'], packed['wo'],
      packed['w1'], packed['w2'], packed['vecs'], packed['wp'], packed['fin'])


# ---------------- parameter / PE construction (glue) ----------------
def make_positional_embedding(seq_len, d_model):
    pos = jnp.arange(seq_len, dtype=jnp.float32)[:, None]
    div = jnp.exp(jnp.arange(0, d_model, 2, dtype=jnp.float32)
                  * -(math.log(10000.0) / d_model))
    pe = jnp.zeros((seq_len, d_model), jnp.float32)
    pe = pe.at[:, 0::2].set(jnp.sin(pos * div))
    pe = pe.at[:, 1::2].set(jnp.cos(pos * div))
    return pe


def init_params(key):
    keys = iter(jax.random.split(key, 64))

    def rnd(shape, scale):
        return jax.random.normal(next(keys), shape, jnp.float32) * scale

    params = {
        # TokenEmbedding Conv1d weight [d_model, enc_in, 3] stored as 3 x [enc_in, d_model]
        'w0': rnd((ENC_IN, D_MODEL), 0.3),
        'w1': rnd((ENC_IN, D_MODEL), 0.3),
        'w2': rnd((ENC_IN, D_MODEL), 0.3),
        'layers': [],
        # encoder final LayerNorm (PyTorch default init)
        'lnw': jnp.ones((1, D_MODEL), jnp.float32),
        'lnb': jnp.zeros((1, D_MODEL), jnp.float32),
        # projection Linear(d_model, out_size)
        'wp': rnd((D_MODEL, OUT_SIZE), 0.1),
        'bp': rnd((1, OUT_SIZE), 0.1),
    }
    for _ in range(E_LAYERS):
        params['layers'].append({
            'wq': rnd((D_MODEL, D_MODEL), 0.15), 'bq': rnd((1, D_MODEL), 0.05),
            'wk': rnd((D_MODEL, D_MODEL), 0.15), 'bk': rnd((1, D_MODEL), 0.05),
            'wv': rnd((D_MODEL, D_MODEL), 0.15), 'bv': rnd((1, D_MODEL), 0.05),
            'wo': rnd((D_MODEL, D_MODEL), 0.15), 'bo': rnd((1, D_MODEL), 0.05),
            'ln1w': jnp.ones((1, D_MODEL), jnp.float32),
            'ln1b': jnp.zeros((1, D_MODEL), jnp.float32),
            'w1': rnd((D_MODEL, D_FF), 0.15), 'b1': rnd((1, D_FF), 0.05),
            'w2': rnd((D_FF, D_MODEL), 0.1), 'b2': rnd((1, D_MODEL), 0.05),
            'ln2w': jnp.ones((1, D_MODEL), jnp.float32),
            'ln2b': jnp.zeros((1, D_MODEL), jnp.float32),
        })
    return params


# ---------------- pure-JAX reference (for correctness check) ----------------
def reference_forward(x, params, pe):
    xm = jnp.roll(x, 1, axis=1)
    xp = jnp.roll(x, -1, axis=1)
    h = xm @ params['w0'] + x @ params['w1'] + xp @ params['w2'] + pe[None]
    for lp in params['layers']:
        q = (h @ lp['wq'] + lp['bq']).reshape(B, L, N_HEADS, E_HEAD)
        k = (h @ lp['wk'] + lp['bk']).reshape(B, L, N_HEADS, E_HEAD)
        v = (h @ lp['wv'] + lp['bv']).reshape(B, L, N_HEADS, E_HEAD)
        s = jnp.einsum('blhe,bshe->bhls', q, k) / math.sqrt(E_HEAD)
        a = jax.nn.softmax(s, axis=-1)
        o = jnp.einsum('bhls,bshe->blhe', a, v).reshape(B, L, D_MODEL)
        o = o @ lp['wo'] + lp['bo']
        h = h + o
        hn = _layer_norm(h, lp['ln1w'], lp['ln1b'])
        y = jax.nn.relu(hn @ lp['w1'] + lp['b1']) @ lp['w2'] + lp['b2']
        h = _layer_norm(hn + y, lp['ln2w'], lp['ln2b'])
    hn = _layer_norm(h, params['lnw'], params['lnb'])
    return hn[:, -1:, :] @ params['wp'] + params['bp']


if __name__ == "__main__":
    key = jax.random.PRNGKey(0)
    kx, kp = jax.random.split(key)
    x_enc = jax.random.normal(kx, (B, L, ENC_IN), jnp.float32)   # (batch, seq, enc_in)
    params = init_params(kp)
    pe = make_positional_embedding(L, D_MODEL)

    packed = pack_params(params, pe)          # one-time packing, NOT in the per-call path
    packed = jax.block_until_ready(packed)

    out = au_forward(x_enc, packed)
    out = jax.block_until_ready(out)
    assert out.shape == (B, 1, OUT_SIZE)

    ref = reference_forward(x_enc, params, pe)
    if not bool(jnp.allclose(out, ref, atol=5e-2, rtol=5e-2)):
        raise AssertionError("Pallas output mismatch vs JAX reference")

    print("KERNEL_OK")
</pallas_src>

<mosaic_0001>
module attributes {stable_mosaic.version = 11 : i64} {
  func.func @au_fused_kernel(%arg0: memref<32x21xf32, #tpu.memory_space<vmem>>, %arg1: memref<21x32xf32, #tpu.memory_space<vmem>>, %arg2: memref<32x32xf32, #tpu.memory_space<vmem>>, %arg3: memref<2x32x96xf32, #tpu.memory_space<vmem>>, %arg4: memref<2x32x32xf32, #tpu.memory_space<vmem>>, %arg5: memref<2x32x64xf32, #tpu.memory_space<vmem>>, %arg6: memref<2x64x32xf32, #tpu.memory_space<vmem>>, %arg7: memref<2x8x128xf32, #tpu.memory_space<vmem>>, %arg8: memref<32x7xf32, #tpu.memory_space<vmem>>, %arg9: memref<8x128xf32, #tpu.memory_space<vmem>>, %arg10: memref<2x1x7xf32, #tpu.memory_space<vmem>>) attributes {dimension_semantics = [], scalar_prefetch = 0 : i64, scratch_operands = 0 : i64, tpu.core_type = #tpu.core_type<tc>} {
    %c0 = arith.constant 0 : index
    %c0_0 = arith.constant 0 : index
    %0 = vector.load %arg0[%c0, %c0_0] : memref<32x21xf32, #tpu.memory_space<vmem>>, vector<32x21xf32>
    %c0_1 = arith.constant 0 : index
    %c0_2 = arith.constant 0 : index
    %1 = vector.load %arg1[%c0_1, %c0_2] : memref<21x32xf32, #tpu.memory_space<vmem>>, vector<21x32xf32>
    %cst = arith.constant dense<0.000000e+00> : vector<32x32xf32>
    %2 = tpu.matmul %0, %1, %cst {dimension_numbers = #tpu.dot_dimension_numbers<[1], [0], [0], [1], [0, 0, 1, 1], [], []>} : vector<32x21xf32>, vector<21x32xf32>, vector<32x32xf32> -> vector<32x32xf32>
    %c0_3 = arith.constant 0 : index
    %c0_4 = arith.constant 0 : index
    %3 = vector.load %arg2[%c0_3, %c0_4] : memref<32x32xf32, #tpu.memory_space<vmem>>, vector<32x32xf32>
    %4 = arith.addf %2, %3 : vector<32x32xf32>
    %c0_5 = arith.constant 0 : index
    %c0_6 = arith.constant 0 : index
    %c0_7 = arith.constant 0 : index
    %5 = vector.load %arg7[%c0_5, %c0_6, %c0_7] : memref<2x8x128xf32, #tpu.memory_space<vmem>>, vector<1x8x128xf32>
    %6 = vector.shape_cast %5 : vector<1x8x128xf32> to vector<8x128xf32>
    %7 = vector.extract_strided_slice %6 {offsets = [0, 0], sizes = [1, 96], strides = [1, 1]} : vector<8x128xf32> to vector<1x96xf32>
    %8 = vector.extract_strided_slice %6 {offsets = [1, 0], sizes = [1, 32], strides = [1, 1]} : vector<8x128xf32> to vector<1x32xf32>
    %9 = vector.extract_strided_slice %6 {offsets = [2, 0], sizes = [1, 32], strides = [1, 1]} : vector<8x128xf32> to vector<1x32xf32>
    %10 = vector.extract_strided_slice %6 {offsets = [3, 0], sizes = [1, 32], strides = [1, 1]} : vector<8x128xf32> to vector<1x32xf32>
    %11 = vector.extract_strided_slice %6 {offsets = [4, 0], sizes = [1, 64], strides = [1, 1]} : vector<8x128xf32> to vector<1x64xf32>
    %12 = vector.extract_strided_slice %6 {offsets = [5, 0], sizes = [1, 32], strides = [1, 1]} : vector<8x128xf32> to vector<1x32xf32>
    %13 = vector.extract_strided_slice %6 {offsets = [6, 0], sizes = [1, 32], strides = [1, 1]} : vector<8x128xf32> to vector<1x32xf32>
    %14 = vector.extract_strided_slice %6 {offsets = [7, 0], sizes = [1, 32], strides = [1, 1]} : vector<8x128xf32> to vector<1x32xf32>
    %c0_8 = arith.constant 0 : index
    %c0_9 = arith.constant 0 : index
    %c0_10 = arith.constant 0 : index
    %15 = vector.load %arg4[%c0_8, %c0_9, %c0_10] : memref<2x32x32xf32, #tpu.memory_space<vmem>>, vector<1x32x32xf32>
    %16 = vector.shape_cast %15 : vector<1x32x32xf32> to vector<32x32xf32>
    %c0_11 = arith.constant 0 : index
    %c0_12 = arith.constant 0 : index
    %c0_13 = arith.constant 0 : index
    %17 = vector.load %arg3[%c0_11, %c0_12, %c0_13] : memref<2x32x96xf32, #tpu.memory_space<vmem>>, vector<1x32x96xf32>
    %18 = vector.shape_cast %17 : vector<1x32x96xf32> to vector<32x96xf32>
    %cst_14 = arith.constant dense<0.000000e+00> : vector<32x96xf32>
    %19 = tpu.matmul %4, %18, %cst_14 {dimension_numbers = #tpu.dot_dimension_numbers<[1], [0], [0], [1], [0, 0, 1, 1], [], []>} : vector<32x32xf32>, vector<32x96xf32>, vector<32x96xf32> -> vector<32x96xf32>
    %20 = vector.broadcast %7 : vector<1x96xf32> to vector<32x96xf32>
    %21 = arith.addf %19, %20 : vector<32x96xf32>
    %22 = vector.shape_cast %21 : vector<32x96xf32> to vector<2x16x96xf32>
    %23 = vector.extract_strided_slice %22 {offsets = [0, 0, 0], sizes = [2, 16, 8], strides = [1, 1, 1]} : vector<2x16x96xf32> to vector<2x16x8xf32>
    %24 = vector.extract_strided_slice %22 {offsets = [0, 0, 32], sizes = [2, 16, 8], strides = [1, 1, 1]} : vector<2x16x96xf32> to vector<2x16x8xf32>
    %25 = vector.extract_strided_slice %22 {offsets = [0, 0, 64], sizes = [2, 16, 8], strides = [1, 1, 1]} : vector<2x16x96xf32> to vector<2x16x8xf32>
    "tpu.trace_start"() <{level = 10 : i32, message = "ble,bse->bls"}> : () -> ()
    %cst_15 = arith.constant dense<0.000000e+00> : vector<2x16x16xf32>
    %26 = tpu.matmul %23, %24, %cst_15 {dimension_numbers = #tpu.dot_dimension_numbers<[2], [2], [1], [1], [0, 0, 0, 1, 1, 1], [0], [0]>} : vector<2x16x8xf32>, vector<2x16x8xf32>, vector<2x16x16xf32> -> vector<2x16x16xf32>
    "tpu.trace_stop"() : () -> ()
    %cst_16 = arith.constant dense<0xFF800000> : vector<2x16xf32>
    %27 = vector.multi_reduction <maximumf>, %26, %cst_16 [2] : vector<2x16x16xf32> to vector<2x16xf32>
    %28 = vector.shape_cast %27 : vector<2x16xf32> to vector<2x16x1xf32>
    %29 = vector.broadcast %28 : vector<2x16x1xf32> to vector<2x16x16xf32>
    %30 = arith.subf %26, %29 : vector<2x16x16xf32>
    %31 = math.exp %30 : vector<2x16x16xf32>
    %cst_17 = arith.constant dense<0.000000e+00> : vector<2x16xf32>
    %32 = vector.multi_reduction <add>, %31, %cst_17 [2] : vector<2x16x16xf32> to vector<2x16xf32>
    %33 = vector.shape_cast %32 : vector<2x16xf32> to vector<2x16x1xf32>
    %34 = tpu.reciprocal %33 {approx = true} : vector<2x16x1xf32> -> vector<2x16x1xf32>
    %35 = vector.broadcast %34 : vector<2x16x1xf32> to vector<2x16x16xf32>
    %36 = arith.mulf %31, %35 : vector<2x16x16xf32>
    "tpu.trace_start"() <{level = 10 : i32, message = "bls,bse->ble"}> : () -> ()
    %cst_18 = arith.constant dense<0.000000e+00> : vector<2x16x8xf32>
    %37 = tpu.matmul %36, %25, %cst_18 {dimension_numbers = #tpu.dot_dimension_numbers<[2], [1], [1], [2], [0, 0, 0, 1, 1, 2], [0], [0]>} : vector<2x16x16xf32>, vector<2x16x8xf32>, vector<2x16x8xf32> -> vector<2x16x8xf32>
    "tpu.trace_stop"() : () -> ()
    %38 = vector.shape_cast %37 : vector<2x16x8xf32> to vector<32x8xf32>
    %39 = vector.extract_strided_slice %16 {offsets = [0, 0], sizes = [8, 32], strides = [1, 1]} : vector<32x32xf32> to vector<8x32xf32>
    %cst_19 = arith.constant dense<0.000000e+00> : vector<32x32xf32>
    %40 = tpu.matmul %38, %39, %cst_19 {dimension_numbers = #tpu.dot_dimension_numbers<[1], [0], [0], [1], [0, 0, 1, 1], [], []>} : vector<32x8xf32>, vector<8x32xf32>, vector<32x32xf32> -> vector<32x32xf32>
    %41 = vector.extract_strided_slice %22 {offsets = [0, 0, 8], sizes = [2, 16, 8], strides = [1, 1, 1]} : vector<2x16x96xf32> to vector<2x16x8xf32>
    %42 = vector.extract_strided_slice %22 {offsets = [0, 0, 40], sizes = [2, 16, 8], strides = [1, 1, 1]} : vector<2x16x96xf32> to vector<2x16x8xf32>
    %43 = vector.extract_strided_slice %22 {offsets = [0, 0, 72], sizes = [2, 16, 8], strides = [1, 1, 1]} : vector<2x16x96xf32> to vector<2x16x8xf32>
    "tpu.trace_start"() <{level = 10 : i32, message = "ble,bse->bls"}> : () -> ()
    %cst_20 = arith.constant dense<0.000000e+00> : vector<2x16x16xf32>
    %44 = tpu.matmul %41, %42, %cst_20 {dimension_numbers = #tpu.dot_dimension_numbers<[2], [2], [1], [1], [0, 0, 0, 1, 1, 1], [0], [0]>} : vector<2x16x8xf32>, vector<2x16x8xf32>, vector<2x16x16xf32> -> vector<2x16x16xf32>
    "tpu.trace_stop"() : () -> ()
    %cst_21 = arith.constant dense<0xFF800000> : vector<2x16xf32>
    %45 = vector.multi_reduction <maximumf>, %44, %cst_21 [2] : vector<2x16x16xf32> to vector<2x16xf32>
    %46 = vector.shape_cast %45 : vector<2x16xf32> to vector<2x16x1xf32>
    %47 = vector.broadcast %46 : vector<2x16x1xf32> to vector<2x16x16xf32>
    %48 = arith.subf %44, %47 : vector<2x16x16xf32>
    %49 = math.exp %48 : vector<2x16x16xf32>
    %cst_22 = arith.constant dense<0.000000e+00> : vector<2x16xf32>
    %50 = vector.multi_reduction <add>, %49, %cst_22 [2] : vector<2x16x16xf32> to vector<2x16xf32>
    %51 = vector.shape_cast %50 : vector<2x16xf32> to vector<2x16x1xf32>
    %52 = tpu.reciprocal %51 {approx = true} : vector<2x16x1xf32> -> vector<2x16x1xf32>
    %53 = vector.broadcast %52 : vector<2x16x1xf32> to vector<2x16x16xf32>
    %54 = arith.mulf %49, %53 : vector<2x16x16xf32>
    "tpu.trace_start"() <{level = 10 : i32, message = "bls,bse->ble"}> : () -> ()
    %cst_23 = arith.constant dense<0.000000e+00> : vector<2x16x8xf32>
    %55 = tpu.matmul %54, %43, %cst_23 {dimension_numbers = #tpu.dot_dimension_numbers<[2], [1], [1], [2], [0, 0, 0, 1, 1, 2], [0], [0]>} : vector<2x16x16xf32>, vector<2x16x8xf32>, vector<2x16x8xf32> -> vector<2x16x8xf32>
    "tpu.trace_stop"() : () -> ()
    %56 = vector.shape_cast %55 : vector<2x16x8xf32> to vector<32x8xf32>
    %57 = vector.extract_strided_slice %16 {offsets = [8, 0], sizes = [8, 32], strides = [1, 1]} : vector<32x32xf32> to vector<8x32xf32>
    %cst_24 = arith.constant dense<0.000000e+00> : vector<32x32xf32>
    %58 = tpu.matmul %56, %57, %cst_24 {dimension_numbers = #tpu.dot_dimension_numbers<[1], [0], [0], [1], [0, 0, 1, 1], [], []>} : vector<32x8xf32>, vector<8x32xf32>, vector<32x32xf32> -> vector<32x32xf32>
    %59 = arith.addf %40, %58 : vector<32x32xf32>
    %60 = vector.extract_strided_slice %22 {offsets = [0, 0, 16], sizes = [2, 16, 8], strides = [1, 1, 1]} : vector<2x16x96xf32> to vector<2x16x8xf32>
    %61 = vector.extract_strided_slice %22 {offsets = [0, 0, 48], sizes = [2, 16, 8], strides = [1, 1, 1]} : vector<2x16x96xf32> to vector<2x16x8xf32>
    %62 = vector.extract_strided_slice %22 {offsets = [0, 0, 80], sizes = [2, 16, 8], strides = [1, 1, 1]} : vector<2x16x96xf32> to vector<2x16x8xf32>
    "tpu.trace_start"() <{level = 10 : i32, message = "ble,bse->bls"}> : () -> ()
    %cst_25 = arith.constant dense<0.000000e+00> : vector<2x16x16xf32>
    %63 = tpu.matmul %60, %61, %cst_25 {dimension_numbers = #tpu.dot_dimension_numbers<[2], [2], [1], [1], [0, 0, 0, 1, 1, 1], [0], [0]>} : vector<2x16x8xf32>, vector<2x16x8xf32>, vector<2x16x16xf32> -> vector<2x16x16xf32>
    "tpu.trace_stop"() : () -> ()
    %cst_26 = arith.constant dense<0xFF800000> : vector<2x16xf32>
    %64 = vector.multi_reduction <maximumf>, %63, %cst_26 [2] : vector<2x16x16xf32> to vector<2x16xf32>
    %65 = vector.shape_cast %64 : vector<2x16xf32> to vector<2x16x1xf32>
    %66 = vector.broadcast %65 : vector<2x16x1xf32> to vector<2x16x16xf32>
    %67 = arith.subf %63, %66 : vector<2x16x16xf32>
    %68 = math.exp %67 : vector<2x16x16xf32>
    %cst_27 = arith.constant dense<0.000000e+00> : vector<2x16xf32>
    %69 = vector.multi_reduction <add>, %68, %cst_27 [2] : vector<2x16x16xf32> to vector<2x16xf32>
    %70 = vector.shape_cast %69 : vector<2x16xf32> to vector<2x16x1xf32>
    %71 = tpu.reciprocal %70 {approx = true} : vector<2x16x1xf32> -> vector<2x16x1xf32>
    %72 = vector.broadcast %71 : vector<2x16x1xf32> to vector<2x16x16xf32>
    %73 = arith.mulf %68, %72 : vector<2x16x16xf32>
    "tpu.trace_start"() <{level = 10 : i32, message = "bls,bse->ble"}> : () -> ()
    %cst_28 = arith.constant dense<0.000000e+00> : vector<2x16x8xf32>
    %74 = tpu.matmul %73, %62, %cst_28 {dimension_numbers = #tpu.dot_dimension_numbers<[2], [1], [1], [2], [0, 0, 0, 1, 1, 2], [0], [0]>} : vector<2x16x16xf32>, vector<2x16x8xf32>, vector<2x16x8xf32> -> vector<2x16x8xf32>
    "tpu.trace_stop"() : () -> ()
    %75 = vector.shape_cast %74 : vector<2x16x8xf32> to vector<32x8xf32>
    %76 = vector.extract_strided_slice %16 {offsets = [16, 0], sizes = [8, 32], strides = [1, 1]} : vector<32x32xf32> to vector<8x32xf32>
    %cst_29 = arith.constant dense<0.000000e+00> : vector<32x32xf32>
    %77 = tpu.matmul %75, %76, %cst_29 {dimension_numbers = #tpu.dot_dimension_numbers<[1], [0], [0], [1], [0, 0, 1, 1], [], []>} : vector<32x8xf32>, vector<8x32xf32>, vector<32x32xf32> -> vector<32x32xf32>
    %78 = arith.addf %59, %77 : vector<32x32xf32>
    %79 = vector.extract_strided_slice %22 {offsets = [0, 0, 24], sizes = [2, 16, 8], strides = [1, 1, 1]} : vector<2x16x96xf32> to vector<2x16x8xf32>
    %80 = vector.extract_strided_slice %22 {offsets = [0, 0, 56], sizes = [2, 16, 8], strides = [1, 1, 1]} : vector<2x16x96xf32> to vector<2x16x8xf32>
    %81 = vector.extract_strided_slice %22 {offsets = [0, 0, 88], sizes = [2, 16, 8], strides = [1, 1, 1]} : vector<2x16x96xf32> to vector<2x16x8xf32>
    "tpu.trace_start"() <{level = 10 : i32, message = "ble,bse->bls"}> : () -> ()
    %cst_30 = arith.constant dense<0.000000e+00> : vector<2x16x16xf32>
    %82 = tpu.matmul %79, %80, %cst_30 {dimension_numbers = #tpu.dot_dimension_numbers<[2], [2], [1], [1], [0, 0, 0, 1, 1, 1], [0], [0]>} : vector<2x16x8xf32>, vector<2x16x8xf32>, vector<2x16x16xf32> -> vector<2x16x16xf32>
    "tpu.trace_stop"() : () -> ()
    %cst_31 = arith.constant dense<0xFF800000> : vector<2x16xf32>
    %83 = vector.multi_reduction <maximumf>, %82, %cst_31 [2] : vector<2x16x16xf32> to vector<2x16xf32>
    %84 = vector.shape_cast %83 : vector<2x16xf32> to vector<2x16x1xf32>
    %85 = vector.broadcast %84 : vector<2x16x1xf32> to vector<2x16x16xf32>
    %86 = arith.subf %82, %85 : vector<2x16x16xf32>
    %87 = math.exp %86 : vector<2x16x16xf32>
    %cst_32 = arith.constant dense<0.000000e+00> : vector<2x16xf32>
    %88 = vector.multi_reduction <add>, %87, %cst_32 [2] : vector<2x16x16xf32> to vector<2x16xf32>
    %89 = vector.shape_cast %88 : vector<2x16xf32> to vector<2x16x1xf32>
    %90 = tpu.reciprocal %89 {approx = true} : vector<2x16x1xf32> -> vector<2x16x1xf32>
    %91 = vector.broadcast %90 : vector<2x16x1xf32> to vector<2x16x16xf32>
    %92 = arith.mulf %87, %91 : vector<2x16x16xf32>
    "tpu.trace_start"() <{level = 10 : i32, message = "bls,bse->ble"}> : () -> ()
    %cst_33 = arith.constant dense<0.000000e+00> : vector<2x16x8xf32>
    %93 = tpu.matmul %92, %81, %cst_33 {dimension_numbers = #tpu.dot_dimension_numbers<[2], [1], [1], [2], [0, 0, 0, 1, 1, 2], [0], [0]>} : vector<2x16x16xf32>, vector<2x16x8xf32>, vector<2x16x8xf32> -> vector<2x16x8xf32>
    "tpu.trace_stop"() : () -> ()
    %94 = vector.shape_cast %93 : vector<2x16x8xf32> to vector<32x8xf32>
    %95 = vector.extract_strided_slice %16 {offsets = [24, 0], sizes = [8, 32], strides = [1, 1]} : vector<32x32xf32> to vector<8x32xf32>
    %cst_34 = arith.constant dense<0.000000e+00> : vector<32x32xf32>
    %96 = tpu.matmul %94, %95, %cst_34 {dimension_numbers = #tpu.dot_dimension_numbers<[1], [0], [0], [1], [0, 0, 1, 1], [], []>} : vector<32x8xf32>, vector<8x32xf32>, vector<32x32xf32> -> vector<32x32xf32>
    %97 = arith.addf %78, %96 : vector<32x32xf32>
    %98 = arith.addf %4, %97 : vector<32x32xf32>
    %99 = vector.broadcast %8 : vector<1x32xf32> to vector<32x32xf32>
    %100 = arith.addf %98, %99 : vector<32x32xf32>
    %cst_35 = arith.constant dense<0.000000e+00> : vector<32xf32>
    %101 = vector.multi_reduction <add>, %100, %cst_35 [1] : vector<32x32xf32> to vector<32xf32>
    %102 = vector.shape_cast %101 : vector<32xf32> to vector<32x1xf32>
    %cst_36 = arith.constant 3.200000e+01 : f32
    %103 = vector.broadcast %cst_36 : f32 to vector<32x1xf32>
    %104 = arith.divf %102, %103 : vector<32x1xf32>
    %105 = vector.broadcast %104 : vector<32x1xf32> to vector<32x32xf32>
    %106 = arith.subf %100, %105 : vector<32x32xf32>
    %107 = arith.mulf %106, %106 : vector<32x32xf32>
    %cst_37 = arith.constant dense<0.000000e+00> : vector<32xf32>
    %108 = vector.multi_reduction <add>, %107, %cst_37 [1] : vector<32x32xf32> to vector<32xf32>
    %109 = vector.shape_cast %108 : vector<32xf32> to vector<32x1xf32>
    %cst_38 = arith.constant 3.200000e+01 : f32
    %110 = vector.broadcast %cst_38 : f32 to vector<32x1xf32>
    %111 = arith.divf %109, %110 : vector<32x1xf32>
    %112 = vector.broadcast %104 : vector<32x1xf32> to vector<32x32xf32>
    %113 = arith.subf %100, %112 : vector<32x32xf32>
    %cst_39 = arith.constant 9.99999974E-6 : f32
    %114 = vector.broadcast %cst_39 : f32 to vector<32x1xf32>
    %115 = arith.addf %111, %114 : vector<32x1xf32>
    %116 = math.rsqrt %115 : vector<32x1xf32>
    %117 = vector.broadcast %116 : vector<32x1xf32> to vector<32x32xf32>
    %118 = arith.mulf %113, %117 : vector<32x32xf32>
    %119 = vector.broadcast %9 : vector<1x32xf32> to vector<32x32xf32>
    %120 = arith.mulf %118, %119 : vector<32x32xf32>
    %121 = vector.broadcast %10 : vector<1x32xf32> to vector<32x32xf32>
    %122 = arith.addf %120, %121 : vector<32x32xf32>
    %c0_40 = arith.constant 0 : index
    %c0_41 = arith.constant 0 : index
    %c0_42 = arith.constant 0 : index
    %123 = vector.load %arg5[%c0_40, %c0_41, %c0_42] : memref<2x32x64xf32, #tpu.memory_space<vmem>>, vector<1x32x64xf32>
    %124 = vector.shape_cast %123 : vector<1x32x64xf32> to vector<32x64xf32>
    %c0_43 = arith.constant 0 : index
    %c0_44 = arith.constant 0 : index
    %c0_45 = arith.constant 0 : index
    %125 = vector.load %arg6[%c0_43, %c0_44, %c0_45] : memref<2x64x32xf32, #tpu.memory_space<vmem>>, vector<1x64x32xf32>
    %126 = vector.shape_cast %125 : vector<1x64x32xf32> to vector<64x32xf32>
    %cst_46 = arith.constant dense<0.000000e+00> : vector<32x64xf32>
    %127 = tpu.matmul %122, %124, %cst_46 {dimension_numbers = #tpu.dot_dimension_numbers<[1], [0], [0], [1], [0, 0, 1, 1], [], []>} : vector<32x32xf32>, vector<32x64xf32>, vector<32x64xf32> -> vector<32x64xf32>
    %128 = vector.broadcast %11 : vector<1x64xf32> to vector<32x64xf32>
    %129 = arith.addf %127, %128 : vector<32x64xf32>
    %cst_47 = arith.constant 0.000000e+00 : f32
    %130 = vector.broadcast %cst_47 : f32 to vector<32x64xf32>
    %131 = arith.maximumf %129, %130 : vector<32x64xf32>
    %cst_48 = arith.constant dense<0.000000e+00> : vector<32x32xf32>
    %132 = tpu.matmul %131, %126, %cst_48 {dimension_numbers = #tpu.dot_dimension_numbers<[1], [0], [0], [1], [0, 0, 1, 1], [], []>} : vector<32x64xf32>, vector<64x32xf32>, vector<32x32xf32> -> vector<32x32xf32>
    %133 = vector.broadcast %12 : vector<1x32xf32> to vector<32x32xf32>
    %134 = arith.addf %132, %133 : vector<32x32xf32>
    %135 = arith.addf %122, %134 : vector<32x32xf32>
    %cst_49 = arith.constant dense<0.000000e+00> : vector<32xf32>
    %136 = vector.multi_reduction <add>, %135, %cst_49 [1] : vector<32x32xf32> to vector<32xf32>
    %137 = vector.shape_cast %136 : vector<32xf32> to vector<32x1xf32>
    %cst_50 = arith.constant 3.200000e+01 : f32
    %138 = vector.broadcast %cst_50 : f32 to vector<32x1xf32>
    %139 = arith.divf %137, %138 : vector<32x1xf32>
    %140 = vector.broadcast %139 : vector<32x1xf32> to vector<32x32xf32>
    %141 = arith.subf %135, %140 : vector<32x32xf32>
    %142 = arith.mulf %141, %141 : vector<32x32xf32>
    %cst_51 = arith.constant dense<0.000000e+00> : vector<32xf32>
    %143 = vector.multi_reduction <add>, %142, %cst_51 [1] : vector<32x32xf32> to vector<32xf32>
    %144 = vector.shape_cast %143 : vector<32xf32> to vector<32x1xf32>
    %cst_52 = arith.constant 3.200000e+01 : f32
    %145 = vector.broadcast %cst_52 : f32 to vector<32x1xf32>
    %146 = arith.divf %144, %145 : vector<32x1xf32>
    %147 = vector.broadcast %139 : vector<32x1xf32> to vector<32x32xf32>
    %148 = arith.subf %135, %147 : vector<32x32xf32>
    %cst_53 = arith.constant 9.99999974E-6 : f32
    %149 = vector.broadcast %cst_53 : f32 to vector<32x1xf32>
    %150 = arith.addf %146, %149 : vector<32x1xf32>
    %151 = math.rsqrt %150 : vector<32x1xf32>
    %152 = vector.broadcast %151 : vector<32x1xf32> to vector<32x32xf32>
    %153 = arith.mulf %148, %152 : vector<32x32xf32>
    %154 = vector.broadcast %13 : vector<1x32xf32> to vector<32x32xf32>
    %155 = arith.mulf %153, %154 : vector<32x32xf32>
    %156 = vector.broadcast %14 : vector<1x32xf32> to vector<32x32xf32>
    %157 = arith.addf %155, %156 : vector<32x32xf32>
    %c1 = arith.constant 1 : index
    %c0_54 = arith.constant 0 : index
    %c0_55 = arith.constant 0 : index
    %158 = vector.load %arg7[%c1, %c0_54, %c0_55] : memref<2x8x128xf32, #tpu.memory_space<vmem>>, vector<1x8x128xf32>
    %159 = vector.shape_cast %158 : vector<1x8x128xf32> to vector<8x128xf32>
    %160 = vector.extract_strided_slice %159 {offsets = [0, 0], sizes = [1, 96], strides = [1, 1]} : vector<8x128xf32> to vector<1x96xf32>
    %161 = vector.extract_strided_slice %159 {offsets = [1, 0], sizes = [1, 32], strides = [1, 1]} : vector<8x128xf32> to vector<1x32xf32>
    %162 = vector.extract_strided_slice %159 {offsets = [2, 0], sizes = [1, 32], strides = [1, 1]} : vector<8x128xf32> to vector<1x32xf32>
    %163 = vector.extract_strided_slice %159 {offsets = [3, 0], sizes = [1, 32], strides = [1, 1]} : vector<8x128xf32> to vector<1x32xf32>
    %164 = vector.extract_strided_slice %159 {offsets = [4, 0], sizes = [1, 64], strides = [1, 1]} : vector<8x128xf32> to vector<1x64xf32>
    %165 = vector.extract_strided_slice %159 {offsets = [5, 0], sizes = [1, 32], strides = [1, 1]} : vector<8x128xf32> to vector<1x32xf32>
    %166 = vector.extract_strided_slice %159 {offsets = [6, 0], sizes = [1, 32], strides = [1, 1]} : vector<8x128xf32> to vector<1x32xf32>
    %167 = vector.extract_strided_slice %159 {offsets = [7, 0], sizes = [1, 32], strides = [1, 1]} : vector<8x128xf32> to vector<1x32xf32>
    %c1_56 = arith.constant 1 : index
    %c0_57 = arith.constant 0 : index
    %c0_58 = arith.constant 0 : index
    %168 = vector.load %arg3[%c1_56, %c0_57, %c0_58] : memref<2x32x96xf32, #tpu.memory_space<vmem>>, vector<1x32x96xf32>
    %169 = vector.shape_cast %168 : vector<1x32x96xf32> to vector<32x96xf32>
    %c1_59 = arith.constant 1 : index
    %c0_60 = arith.constant 0 : index
    %c0_61 = arith.constant 0 : index
    %170 = vector.load %arg4[%c1_59, %c0_60, %c0_61] : memref<2x32x32xf32, #tpu.memory_space<vmem>>, vector<1x32x32xf32>
    %171 = vector.shape_cast %170 : vector<1x32x32xf32> to vector<32x32xf32>
    %172 = vector.shape_cast %157 : vector<32x32xf32> to vector<2x16x32xf32>
    %173 = vector.extract_strided_slice %172 {offsets = [0, 15, 0], sizes = [2, 1, 32], strides = [1, 1, 1]} : vector<2x16x32xf32> to vector<2x1x32xf32>
    %174 = vector.shape_cast %173 : vector<2x1x32xf32> to vector<2x32xf32>
    %175 = vector.extract_strided_slice %169 {offsets = [0, 32], sizes = [32, 64], strides = [1, 1]} : vector<32x96xf32> to vector<32x64xf32>
    %cst_62 = arith.constant dense<0.000000e+00> : vector<32x64xf32>
    %176 = tpu.matmul %157, %175, %cst_62 {dimension_numbers = #tpu.dot_dimension_numbers<[1], [0], [0], [1], [0, 0, 1, 1], [], []>} : vector<32x32xf32>, vector<32x64xf32>, vector<32x64xf32> -> vector<32x64xf32>
    %177 = vector.extract_strided_slice %160 {offsets = [0, 32], sizes = [1, 64], strides = [1, 1]} : vector<1x96xf32> to vector<1x64xf32>
    %178 = vector.broadcast %177 : vector<1x64xf32> to vector<32x64xf32>
    %179 = arith.addf %176, %178 : vector<32x64xf32>
    %180 = vector.extract_strided_slice %169 {offsets = [0, 0], sizes = [32, 32], strides = [1, 1]} : vector<32x96xf32> to vector<32x32xf32>
    %cst_63 = arith.constant dense<0.000000e+00> : vector<2x32xf32>
    %181 = tpu.matmul %174, %180, %cst_63 {dimension_numbers = #tpu.dot_dimension_numbers<[1], [0], [0], [1], [0, 0, 1, 1], [], []>} : vector<2x32xf32>, vector<32x32xf32>, vector<2x32xf32> -> vector<2x32xf32>
    %182 = vector.extract_strided_slice %160 {offsets = [0, 0], sizes = [1, 32], strides = [1, 1]} : vector<1x96xf32> to vector<1x32xf32>
    %183 = vector.broadcast %182 : vector<1x32xf32> to vector<2x32xf32>
    %184 = arith.addf %181, %183 : vector<2x32xf32>
    %185 = vector.shape_cast %179 : vector<32x64xf32> to vector<2x16x64xf32>
    %186 = vector.extract_strided_slice %184 {offsets = [0, 0], sizes = [2, 8], strides = [1, 1]} : vector<2x32xf32> to vector<2x8xf32>
    %187 = vector.shape_cast %186 : vector<2x8xf32> to vector<2x1x8xf32>
    %188 = vector.extract_strided_slice %185 {offsets = [0, 0, 0], sizes = [2, 16, 8], strides = [1, 1, 1]} : vector<2x16x64xf32> to vector<2x16x8xf32>
    %189 = vector.extract_strided_slice %185 {offsets = [0, 0, 32], sizes = [2, 16, 8], strides = [1, 1, 1]} : vector<2x16x64xf32> to vector<2x16x8xf32>
    "tpu.trace_start"() <{level = 10 : i32, message = "ble,bse->bls"}> : () -> ()
    %cst_64 = arith.constant dense<0.000000e+00> : vector<2x1x16xf32>
    %190 = tpu.matmul %187, %188, %cst_64 {dimension_numbers = #tpu.dot_dimension_numbers<[2], [2], [1], [1], [0, 0, 0, 1, 1, 1], [0], [0]>} : vector<2x1x8xf32>, vector<2x16x8xf32>, vector<2x1x16xf32> -> vector<2x1x16xf32>
    "tpu.trace_stop"() : () -> ()
    %cst_65 = arith.constant dense<0xFF800000> : vector<2x1xf32>
    %191 = vector.multi_reduction <maximumf>, %190, %cst_65 [2] : vector<2x1x16xf32> to vector<2x1xf32>
    %192 = vector.shape_cast %191 : vector<2x1xf32> to vector<2x1x1xf32>
    %193 = vector.broadcast %192 : vector<2x1x1xf32> to vector<2x1x16xf32>
    %194 = arith.subf %190, %193 : vector<2x1x16xf32>
    %195 = math.exp %194 : vector<2x1x16xf32>
    %cst_66 = arith.constant dense<0.000000e+00> : vector<2x1xf32>
    %196 = vector.multi_reduction <add>, %195, %cst_66 [2] : vector<2x1x16xf32> to vector<2x1xf32>
    %197 = vector.shape_cast %196 : vector<2x1xf32> to vector<2x1x1xf32>
    %198 = tpu.reciprocal %197 {approx = true} : vector<2x1x1xf32> -> vector<2x1x1xf32>
    %199 = vector.broadcast %198 : vector<2x1x1xf32> to vector<2x1x16xf32>
    %200 = arith.mulf %195, %199 : vector<2x1x16xf32>
    "tpu.trace_start"() <{level = 10 : i32, message = "bls,bse->ble"}> : () -> ()
    %cst_67 = arith.constant dense<0.000000e+00> : vector<2x1x8xf32>
    %201 = tpu.matmul %200, %189, %cst_67 {dimension_numbers = #tpu.dot_dimension_numbers<[2], [1], [1], [2], [0, 0, 0, 1, 1, 2], [0], [0]>} : vector<2x1x16xf32>, vector<2x16x8xf32>, vector<2x1x8xf32> -> vector<2x1x8xf32>
    "tpu.trace_stop"() : () -> ()
    %202 = vector.shape_cast %201 : vector<2x1x8xf32> to vector<2x8xf32>
    %203 = vector.extract_strided_slice %171 {offsets = [0, 0], sizes = [8, 32], strides = [1, 1]} : vector<32x32xf32> to vector<8x32xf32>
    %cst_68 = arith.constant dense<0.000000e+00> : vector<2x32xf32>
    %204 = tpu.matmul %202, %203, %cst_68 {dimension_numbers = #tpu.dot_dimension_numbers<[1], [0], [0], [1], [0, 0, 1, 1], [], []>} : vector<2x8xf32>, vector<8x32xf32>, vector<2x32xf32> -> vector<2x32xf32>
    %205 = vector.extract_strided_slice %184 {offsets = [0, 8], sizes = [2, 8], strides = [1, 1]} : vector<2x32xf32> to vector<2x8xf32>
    %206 = vector.shape_cast %205 : vector<2x8xf32> to vector<2x1x8xf32>
    %207 = vector.extract_strided_slice %185 {offsets = [0, 0, 8], sizes = [2, 16, 8], strides = [1, 1, 1]} : vector<2x16x64xf32> to vector<2x16x8xf32>
    %208 = vector.extract_strided_slice %185 {offsets = [0, 0, 40], sizes = [2, 16, 8], strides = [1, 1, 1]} : vector<2x16x64xf32> to vector<2x16x8xf32>
    "tpu.trace_start"() <{level = 10 : i32, message = "ble,bse->bls"}> : () -> ()
    %cst_69 = arith.constant dense<0.000000e+00> : vector<2x1x16xf32>
    %209 = tpu.matmul %206, %207, %cst_69 {dimension_numbers = #tpu.dot_dimension_numbers<[2], [2], [1], [1], [0, 0, 0, 1, 1, 1], [0], [0]>} : vector<2x1x8xf32>, vector<2x16x8xf32>, vector<2x1x16xf32> -> vector<2x1x16xf32>
    "tpu.trace_stop"() : () -> ()
    %cst_70 = arith.constant dense<0xFF800000> : vector<2x1xf32>
    %210 = vector.multi_reduction <maximumf>, %209, %cst_70 [2] : vector<2x1x16xf32> to vector<2x1xf32>
    %211 = vector.shape_cast %210 : vector<2x1xf32> to vector<2x1x1xf32>
    %212 = vector.broadcast %211 : vector<2x1x1xf32> to vector<2x1x16xf32>
    %213 = arith.subf %209, %212 : vector<2x1x16xf32>
    %214 = math.exp %213 : vector<2x1x16xf32>
    %cst_71 = arith.constant dense<0.000000e+00> : vector<2x1xf32>
    %215 = vector.multi_reduction <add>, %214, %cst_71 [2] : vector<2x1x16xf32> to vector<2x1xf32>
    %216 = vector.shape_cast %215 : vector<2x1xf32> to vector<2x1x1xf32>
    %217 = tpu.reciprocal %216 {approx = true} : vector<2x1x1xf32> -> vector<2x1x1xf32>
    %218 = vector.broadcast %217 : vector<2x1x1xf32> to vector<2x1x16xf32>
    %219 = arith.mulf %214, %218 : vector<2x1x16xf32>
    "tpu.trace_start"() <{level = 10 : i32, message = "bls,bse->ble"}> : () -> ()
    %cst_72 = arith.constant dense<0.000000e+00> : vector<2x1x8xf32>
    %220 = tpu.matmul %219, %208, %cst_72 {dimension_numbers = #tpu.dot_dimension_numbers<[2], [1], [1], [2], [0, 0, 0, 1, 1, 2], [0], [0]>} : vector<2x1x16xf32>, vector<2x16x8xf32>, vector<2x1x8xf32> -> vector<2x1x8xf32>
    "tpu.trace_stop"() : () -> ()
    %221 = vector.shape_cast %220 : vector<2x1x8xf32> to vector<2x8xf32>
    %222 = vector.extract_strided_slice %171 {offsets = [8, 0], sizes = [8, 32], strides = [1, 1]} : vector<32x32xf32> to vector<8x32xf32>
    %cst_73 = arith.constant dense<0.000000e+00> : vector<2x32xf32>
    %223 = tpu.matmul %221, %222, %cst_73 {dimension_numbers = #tpu.dot_dimension_numbers<[1], [0], [0], [1], [0, 0, 1, 1], [], []>} : vector<2x8xf32>, vector<8x32xf32>, vector<2x32xf32> -> vector<2x32xf32>
    %224 = arith.addf %204, %223 : vector<2x32xf32>
    %225 = vector.extract_strided_slice %184 {offsets = [0, 16], sizes = [2, 8], strides = [1, 1]} : vector<2x32xf32> to vector<2x8xf32>
    %226 = vector.shape_cast %225 : vector<2x8xf32> to vector<2x1x8xf32>
    %227 = vector.extract_strided_slice %185 {offsets = [0, 0, 16], sizes = [2, 16, 8], strides = [1, 1, 1]} : vector<2x16x64xf32> to vector<2x16x8xf32>
    %228 = vector.extract_strided_slice %185 {offsets = [0, 0, 48], sizes = [2, 16, 8], strides = [1, 1, 1]} : vector<2x16x64xf32> to vector<2x16x8xf32>
    "tpu.trace_start"() <{level = 10 : i32, message = "ble,bse->bls"}> : () -> ()
    %cst_74 = arith.constant dense<0.000000e+00> : vector<2x1x16xf32>
    %229 = tpu.matmul %226, %227, %cst_74 {dimension_numbers = #tpu.dot_dimension_numbers<[2], [2], [1], [1], [0, 0, 0, 1, 1, 1], [0], [0]>} : vector<2x1x8xf32>, vector<2x16x8xf32>, vector<2x1x16xf32> -> vector<2x1x16xf32>
    "tpu.trace_stop"() : () -> ()
    %cst_75 = arith.constant dense<0xFF800000> : vector<2x1xf32>
    %230 = vector.multi_reduction <maximumf>, %229, %cst_75 [2] : vector<2x1x16xf32> to vector<2x1xf32>
    %231 = vector.shape_cast %230 : vector<2x1xf32> to vector<2x1x1xf32>
    %232 = vector.broadcast %231 : vector<2x1x1xf32> to vector<2x1x16xf32>
    %233 = arith.subf %229, %232 : vector<2x1x16xf32>
    %234 = math.exp %233 : vector<2x1x16xf32>
    %cst_76 = arith.constant dense<0.000000e+00> : vector<2x1xf32>
    %235 = vector.multi_reduction <add>, %234, %cst_76 [2] : vector<2x1x16xf32> to vector<2x1xf32>
    %236 = vector.shape_cast %235 : vector<2x1xf32> to vector<2x1x1xf32>
    %237 = tpu.reciprocal %236 {approx = true} : vector<2x1x1xf32> -> vector<2x1x1xf32>
    %238 = vector.broadcast %237 : vector<2x1x1xf32> to vector<2x1x16xf32>
    %239 = arith.mulf %234, %238 : vector<2x1x16xf32>
    "tpu.trace_start"() <{level = 10 : i32, message = "bls,bse->ble"}> : () -> ()
    %cst_77 = arith.constant dense<0.000000e+00> : vector<2x1x8xf32>
    %240 = tpu.matmul %239, %228, %cst_77 {dimension_numbers = #tpu.dot_dimension_numbers<[2], [1], [1], [2], [0, 0, 0, 1, 1, 2], [0], [0]>} : vector<2x1x16xf32>, vector<2x16x8xf32>, vector<2x1x8xf32> -> vector<2x1x8xf32>
    "tpu.trace_stop"() : () -> ()
    %241 = vector.shape_cast %240 : vector<2x1x8xf32> to vector<2x8xf32>
    %242 = vector.extract_strided_slice %171 {offsets = [16, 0], sizes = [8, 32], strides = [1, 1]} : vector<32x32xf32> to vector<8x32xf32>
    %cst_78 = arith.constant dense<0.000000e+00> : vector<2x32xf32>
    %243 = tpu.matmul %241, %242, %cst_78 {dimension_numbers = #tpu.dot_dimension_numbers<[1], [0], [0], [1], [0, 0, 1, 1], [], []>} : vector<2x8xf32>, vector<8x32xf32>, vector<2x32xf32> -> vector<2x32xf32>
    %244 = arith.addf %224, %243 : vector<2x32xf32>
    %245 = vector.extract_strided_slice %184 {offsets = [0, 24], sizes = [2, 8], strides = [1, 1]} : vector<2x32xf32> to vector<2x8xf32>
    %246 = vector.shape_cast %245 : vector<2x8xf32> to vector<2x1x8xf32>
    %247 = vector.extract_strided_slice %185 {offsets = [0, 0, 24], sizes = [2, 16, 8], strides = [1, 1, 1]} : vector<2x16x64xf32> to vector<2x16x8xf32>
    %248 = vector.extract_strided_slice %185 {offsets = [0, 0, 56], sizes = [2, 16, 8], strides = [1, 1, 1]} : vector<2x16x64xf32> to vector<2x16x8xf32>
    "tpu.trace_start"() <{level = 10 : i32, message = "ble,bse->bls"}> : () -> ()
    %cst_79 = arith.constant dense<0.000000e+00> : vector<2x1x16xf32>
    %249 = tpu.matmul %246, %247, %cst_79 {dimension_numbers = #tpu.dot_dimension_numbers<[2], [2], [1], [1], [0, 0, 0, 1, 1, 1], [0], [0]>} : vector<2x1x8xf32>, vector<2x16x8xf32>, vector<2x1x16xf32> -> vector<2x1x16xf32>
    "tpu.trace_stop"() : () -> ()
    %cst_80 = arith.constant dense<0xFF800000> : vector<2x1xf32>
    %250 = vector.multi_reduction <maximumf>, %249, %cst_80 [2] : vector<2x1x16xf32> to vector<2x1xf32>
    %251 = vector.shape_cast %250 : vector<2x1xf32> to vector<2x1x1xf32>
    %252 = vector.broadcast %251 : vector<2x1x1xf32> to vector<2x1x16xf32>
    %253 = arith.subf %249, %252 : vector<2x1x16xf32>
    %254 = math.exp %253 : vector<2x1x16xf32>
    %cst_81 = arith.constant dense<0.000000e+00> : vector<2x1xf32>
    %255 = vector.multi_reduction <add>, %254, %cst_81 [2] : vector<2x1x16xf32> to vector<2x1xf32>
    %256 = vector.shape_cast %255 : vector<2x1xf32> to vector<2x1x1xf32>
    %257 = tpu.reciprocal %256 {approx = true} : vector<2x1x1xf32> -> vector<2x1x1xf32>
    %258 = vector.broadcast %257 : vector<2x1x1xf32> to vector<2x1x16xf32>
    %259 = arith.mulf %254, %258 : vector<2x1x16xf32>
    "tpu.trace_start"() <{level = 10 : i32, message = "bls,bse->ble"}> : () -> ()
    %cst_82 = arith.constant dense<0.000000e+00> : vector<2x1x8xf32>
    %260 = tpu.matmul %259, %248, %cst_82 {dimension_numbers = #tpu.dot_dimension_numbers<[2], [1], [1], [2], [0, 0, 0, 1, 1, 2], [0], [0]>} : vector<2x1x16xf32>, vector<2x16x8xf32>, vector<2x1x8xf32> -> vector<2x1x8xf32>
    "tpu.trace_stop"() : () -> ()
    %261 = vector.shape_cast %260 : vector<2x1x8xf32> to vector<2x8xf32>
    %262 = vector.extract_strided_slice %171 {offsets = [24, 0], sizes = [8, 32], strides = [1, 1]} : vector<32x32xf32> to vector<8x32xf32>
    %cst_83 = arith.constant dense<0.000000e+00> : vector<2x32xf32>
    %263 = tpu.matmul %261, %262, %cst_83 {dimension_numbers = #tpu.dot_dimension_numbers<[1], [0], [0], [1], [0, 0, 1, 1], [], []>} : vector<2x8xf32>, vector<8x32xf32>, vector<2x32xf32> -> vector<2x32xf32>
    %264 = arith.addf %244, %263 : vector<2x32xf32>
    %265 = arith.addf %174, %264 : vector<2x32xf32>
    %266 = vector.broadcast %161 : vector<1x32xf32> to vector<2x32xf32>
    %267 = arith.addf %265, %266 : vector<2x32xf32>
    %cst_84 = arith.constant dense<0.000000e+00> : vector<2xf32>
    %268 = vector.multi_reduction <add>, %267, %cst_84 [1] : vector<2x32xf32> to vector<2xf32>
    %269 = vector.shape_cast %268 : vector<2xf32> to vector<2x1xf32>
    %cst_85 = arith.constant 3.200000e+01 : f32
    %270 = vector.broadcast %cst_85 : f32 to vector<2x1xf32>
    %271 = arith.divf %269, %270 : vector<2x1xf32>
    %272 = vector.broadcast %271 : vector<2x1xf32> to vector<2x32xf32>
    %273 = arith.subf %267, %272 : vector<2x32xf32>
    %274 = arith.mulf %273, %273 : vector<2x32xf32>
    %cst_86 = arith.constant dense<0.000000e+00> : vector<2xf32>
    %275 = vector.multi_reduction <add>, %274, %cst_86 [1] : vector<2x32xf32> to vector<2xf32>
    %276 = vector.shape_cast %275 : vector<2xf32> to vector<2x1xf32>
    %cst_87 = arith.constant 3.200000e+01 : f32
    %277 = vector.broadcast %cst_87 : f32 to vector<2x1xf32>
    %278 = arith.divf %276, %277 : vector<2x1xf32>
    %279 = vector.broadcast %271 : vector<2x1xf32> to vector<2x32xf32>
    %280 = arith.subf %267, %279 : vector<2x32xf32>
    %cst_88 = arith.constant 9.99999974E-6 : f32
    %281 = vector.broadcast %cst_88 : f32 to vector<2x1xf32>
    %282 = arith.addf %278, %281 : vector<2x1xf32>
    %283 = math.rsqrt %282 : vector<2x1xf32>
    %284 = vector.broadcast %283 : vector<2x1xf32> to vector<2x32xf32>
    %285 = arith.mulf %280, %284 : vector<2x32xf32>
    %286 = vector.broadcast %162 : vector<1x32xf32> to vector<2x32xf32>
    %287 = arith.mulf %285, %286 : vector<2x32xf32>
    %288 = vector.broadcast %163 : vector<1x32xf32> to vector<2x32xf32>
    %289 = arith.addf %287, %288 : vector<2x32xf32>
    %c1_89 = arith.constant 1 : index
    %c0_90 = arith.constant 0 : index
    %c0_91 = arith.constant 0 : index
    %290 = vector.load %arg5[%c1_89, %c0_90, %c0_91] : memref<2x32x64xf32, #tpu.memory_space<vmem>>, vector<1x32x64xf32>
    %291 = vector.shape_cast %290 : vector<1x32x64xf32> to vector<32x64xf32>
    %c1_92 = arith.constant 1 : index
    %c0_93 = arith.constant 0 : index
    %c0_94 = arith.constant 0 : index
    %292 = vector.load %arg6[%c1_92, %c0_93, %c0_94] : memref<2x64x32xf32, #tpu.memory_space<vmem>>, vector<1x64x32xf32>
    %293 = vector.shape_cast %292 : vector<1x64x32xf32> to vector<64x32xf32>
    %cst_95 = arith.constant dense<0.000000e+00> : vector<2x64xf32>
    %294 = tpu.matmul %289, %291, %cst_95 {dimension_numbers = #tpu.dot_dimension_numbers<[1], [0], [0], [1], [0, 0, 1, 1], [], []>} : vector<2x32xf32>, vector<32x64xf32>, vector<2x64xf32> -> vector<2x64xf32>
    %295 = vector.broadcast %164 : vector<1x64xf32> to vector<2x64xf32>
    %296 = arith.addf %294, %295 : vector<2x64xf32>
    %cst_96 = arith.constant 0.000000e+00 : f32
    %297 = vector.broadcast %cst_96 : f32 to vector<2x64xf32>
    %298 = arith.maximumf %296, %297 : vector<2x64xf32>
    %cst_97 = arith.constant dense<0.000000e+00> : vector<2x32xf32>
    %299 = tpu.matmul %298, %293, %cst_97 {dimension_numbers = #tpu.dot_dimension_numbers<[1], [0], [0], [1], [0, 0, 1, 1], [], []>} : vector<2x64xf32>, vector<64x32xf32>, vector<2x32xf32> -> vector<2x32xf32>
    %300 = vector.broadcast %165 : vector<1x32xf32> to vector<2x32xf32>
    %301 = arith.addf %299, %300 : vector<2x32xf32>
    %302 = arith.addf %289, %301 : vector<2x32xf32>
    %cst_98 = arith.constant dense<0.000000e+00> : vector<2xf32>
    %303 = vector.multi_reduction <add>, %302, %cst_98 [1] : vector<2x32xf32> to vector<2xf32>
    %304 = vector.shape_cast %303 : vector<2xf32> to vector<2x1xf32>
    %cst_99 = arith.constant 3.200000e+01 : f32
    %305 = vector.broadcast %cst_99 : f32 to vector<2x1xf32>
    %306 = arith.divf %304, %305 : vector<2x1xf32>
    %307 = vector.broadcast %306 : vector<2x1xf32> to vector<2x32xf32>
    %308 = arith.subf %302, %307 : vector<2x32xf32>
    %309 = arith.mulf %308, %308 : vector<2x32xf32>
    %cst_100 = arith.constant dense<0.000000e+00> : vector<2xf32>
    %310 = vector.multi_reduction <add>, %309, %cst_100 [1] : vector<2x32xf32> to vector<2xf32>
    %311 = vector.shape_cast %310 : vector<2xf32> to vector<2x1xf32>
    %cst_101 = arith.constant 3.200000e+01 : f32
    %312 = vector.broadcast %cst_101 : f32 to vector<2x1xf32>
    %313 = arith.divf %311, %312 : vector<2x1xf32>
    %314 = vector.broadcast %306 : vector<2x1xf32> to vector<2x32xf32>
    %315 = arith.subf %302, %314 : vector<2x32xf32>
    %cst_102 = arith.constant 9.99999974E-6 : f32
    %316 = vector.broadcast %cst_102 : f32 to vector<2x1xf32>
    %317 = arith.addf %313, %316 : vector<2x1xf32>
    %318 = math.rsqrt %317 : vector<2x1xf32>
    %319 = vector.broadcast %318 : vector<2x1xf32> to vector<2x32xf32>
    %320 = arith.mulf %315, %319 : vector<2x32xf32>
    %321 = vector.broadcast %166 : vector<1x32xf32> to vector<2x32xf32>
    %322 = arith.mulf %320, %321 : vector<2x32xf32>
    %323 = vector.broadcast %167 : vector<1x32xf32> to vector<2x32xf32>
    %324 = arith.addf %322, %323 : vector<2x32xf32>
    %c0_103 = arith.constant 0 : index
    %c0_104 = arith.constant 0 : index
    %325 = vector.load %arg9[%c0_103, %c0_104] : memref<8x128xf32, #tpu.memory_space<vmem>>, vector<8x128xf32>
    %326 = vector.extract_strided_slice %325 {offsets = [0, 0], sizes = [1, 32], strides = [1, 1]} : vector<8x128xf32> to vector<1x32xf32>
    %327 = vector.extract_strided_slice %325 {offsets = [1, 0], sizes = [1, 32], strides = [1, 1]} : vector<8x128xf32> to vector<1x32xf32>
    %328 = vector.extract_strided_slice %325 {offsets = [2, 0], sizes = [1, 7], strides = [1, 1]} : vector<8x128xf32> to vector<1x7xf32>
    %cst_105 = arith.constant dense<0.000000e+00> : vector<2xf32>
    %329 = vector.multi_reduction <add>, %324, %cst_105 [1] : vector<2x32xf32> to vector<2xf32>
    %330 = vector.shape_cast %329 : vector<2xf32> to vector<2x1xf32>
    %cst_106 = arith.constant 3.200000e+01 : f32
    %331 = vector.broadcast %cst_106 : f32 to vector<2x1xf32>
    %332 = arith.divf %330, %331 : vector<2x1xf32>
    %333 = vector.broadcast %332 : vector<2x1xf32> to vector<2x32xf32>
    %334 = arith.subf %324, %333 : vector<2x32xf32>
    %335 = arith.mulf %334, %334 : vector<2x32xf32>
    %cst_107 = arith.constant dense<0.000000e+00> : vector<2xf32>
    %336 = vector.multi_reduction <add>, %335, %cst_107 [1] : vector<2x32xf32> to vector<2xf32>
    %337 = vector.shape_cast %336 : vector<2xf32> to vector<2x1xf32>
    %cst_108 = arith.constant 3.200000e+01 : f32
    %338 = vector.broadcast %cst_108 : f32 to vector<2x1xf32>
    %339 = arith.divf %337, %338 : vector<2x1xf32>
    %340 = vector.broadcast %332 : vector<2x1xf32> to vector<2x32xf32>
    %341 = arith.subf %324, %340 : vector<2x32xf32>
    %cst_109 = arith.constant 9.99999974E-6 : f32
    %342 = vector.broadcast %cst_109 : f32 to vector<2x1xf32>
    %343 = arith.addf %339, %342 : vector<2x1xf32>
    %344 = math.rsqrt %343 : vector<2x1xf32>
    %345 = vector.broadcast %344 : vector<2x1xf32> to vector<2x32xf32>
    %346 = arith.mulf %341, %345 : vector<2x32xf32>
    %347 = vector.broadcast %326 : vector<1x32xf32> to vector<2x32xf32>
    %348 = arith.mulf %346, %347 : vector<2x32xf32>
    %349 = vector.broadcast %327 : vector<1x32xf32> to vector<2x32xf32>
    %350 = arith.addf %348, %349 : vector<2x32xf32>
    %c0_110 = arith.constant 0 : index
    %c0_111 = arith.constant 0 : index
    %351 = vector.load %arg8[%c0_110, %c0_111] : memref<32x7xf32, #tpu.memory_space<vmem>>, vector<32x7xf32>
    %cst_112 = arith.constant dense<0.000000e+00> : vector<2x7xf32>
    %352 = tpu.matmul %350, %351, %cst_112 {dimension_numbers = #tpu.dot_dimension_numbers<[1], [0], [0], [1], [0, 0, 1, 1], [], []>} : vector<2x32xf32>, vector<32x7xf32>, vector<2x7xf32> -> vector<2x7xf32>
    %353 = vector.broadcast %328 : vector<1x7xf32> to vector<2x7xf32>
    %354 = arith.addf %352, %353 : vector<2x7xf32>
    %355 = vector.shape_cast %354 : vector<2x7xf32> to vector<2x1x7xf32>
    %c0_113 = arith.constant 0 : index
    %c0_114 = arith.constant 0 : index
    %c0_115 = arith.constant 0 : index
    %356 = vector.load %arg10[%c0_113, %c0_114, %c0_115] : memref<2x1x7xf32, #tpu.memory_space<vmem>>, vector<2x1x7xf32>
    tpu.vector_store %arg10[%c0_113, %c0_114, %c0_115], %355 {strides = array<i32>} : memref<2x1x7xf32, #tpu.memory_space<vmem>>, vector<2x1x7xf32>,
    return
  }
}

</mosaic_0001>

<llo_original>
// kernel: au_forward.1
$region0: #{au_forward.1}
  #allocation0 [shape = 'u32[]', space=smem, size = 0x4, offset = 0x4, fixed_abs, tag = 'smem constant byte address 0x4 - core index']
  #allocation1 [shape = 'u32[144,128]{1,0:T(1,128)}', space=vmem, size = 0x12000, scoped, tag = 'internal scratch']
  %s0 = inlined_call_operand.vmem [shape: f32[32,21], index: 0, kind: input, shape index: {}]
  %s1 = inlined_call_operand.vmem [shape: f32[21,32], index: 1, kind: input, shape index: {}]
  %s2 = inlined_call_operand.vmem [shape: f32[32,32], index: 2, kind: input, shape index: {}]
  %s3 = inlined_call_operand.vmem [shape: f32[2,32,96], index: 3, kind: input, shape index: {}]
  %s4 = inlined_call_operand.vmem [shape: f32[2,32,32], index: 4, kind: input, shape index: {}]
  %s5 = inlined_call_operand.vmem [shape: f32[2,32,64], index: 5, kind: input, shape index: {}]
  %s6 = inlined_call_operand.vmem [shape: f32[2,64,32], index: 6, kind: input, shape index: {}]
  %s7 = inlined_call_operand.vmem [shape: f32[2,8,128], index: 7, kind: input, shape index: {}]
  %s8 = inlined_call_operand.vmem [shape: f32[32,7], index: 8, kind: input, shape index: {}]
  %s9 = inlined_call_operand.vmem [shape: f32[8,128], index: 9, kind: input, shape index: {}]
  %s10 = inlined_call_operand.hbm [shape: f32[2,1,7], index: 10, kind: output, shape index: {}]
  %s11 = sld [smem:[#allocation0]]
  $region50: #{au_forward.1} parent=0
    _
  %s13 = ssub.s32 1, %s11
  %s14 = scalar_select 0, %s13, %s11
  $region1: #{au_forward.1} parent=0
    #allocation2 [shape = 'u8[1024]{0}', space=vmem, size = 0x400, scoped, tag = 'output window, operand 0, single buffered']
    #allocation3 [shape = 's32[1]{0}', space=sflag, size = 0x4, scoped, tag = 'scoped memory for au_forward.1']
    %15 = vsyncpa [#allocation3], 0
    // Predicated region
    $region2: #{au_forward.1} parent=1 // pred_check
      _
    $region3: #{au_forward.1} parent=1 // pred_check_branch
      %17 = sbr.rel (0) target = $region5
    $region4: #{au_forward.1} parent=1 // pred_region
      _
    $region5: #{au_forward.1} parent=1 // pred_fallthru
      _
    // Predicated region
    $region6: #{au_forward.1} parent=1 // pred_check
      _
    $region7: #{au_forward.1} parent=1 // pred_check_branch
      %19 = sbr.rel (0) target = $region9
    $region8: #{au_forward.1} parent=1 // pred_region
      _
    $region9: #{au_forward.1} parent=1 // pred_fallthru
      _
    // Predicated region
    $region10: #{au_forward.1} parent=1 // pred_check
      _
    $region11: #{au_forward.1} parent=1 // pred_check_branch
      %21 = sbr.rel (0) target = $region13
    $region12: #{au_forward.1} parent=1 // pred_region
      _
    $region13: #{au_forward.1} parent=1 // pred_fallthru
      _
    // Predicated region
    $region14: #{au_forward.1} parent=1 // pred_check
      _
    $region15: #{au_forward.1} parent=1 // pred_check_branch
      %23 = sbr.rel (0) target = $region17
    $region16: #{au_forward.1} parent=1 // pred_region
      _
    $region17: #{au_forward.1} parent=1 // pred_fallthru
      _
    // Predicated region
    $region18: #{au_forward.1} parent=1 // pred_check
      _
    $region19: #{au_forward.1} parent=1 // pred_check_branch
      %25 = sbr.rel (0) target = $region21
    $region20: #{au_forward.1} parent=1 // pred_region
      _
    $region21: #{au_forward.1} parent=1 // pred_fallthru
      _
    // Predicated region
    $region22: #{au_forward.1} parent=1 // pred_check
      _
    $region23: #{au_forward.1} parent=1 // pred_check_branch
      %27 = sbr.rel (0) target = $region25
    $region24: #{au_forward.1} parent=1 // pred_region
      _
    $region25: #{au_forward.1} parent=1 // pred_fallthru
      _
    // Predicated region
    $region26: #{au_forward.1} parent=1 // pred_check
      _
    $region27: #{au_forward.1} parent=1 // pred_check_branch
      %29 = sbr.rel (0) target = $region29
    $region28: #{au_forward.1} parent=1 // pred_region
      _
    $region29: #{au_forward.1} parent=1 // pred_fallthru
      _
    // Predicated region
    $region30: #{au_forward.1} parent=1 // pred_check
      _
    $region31: #{au_forward.1} parent=1 // pred_check_branch
      %31 = sbr.rel (0) target = $region33
    $region32: #{au_forward.1} parent=1 // pred_region
      _
    $region33: #{au_forward.1} parent=1 // pred_fallthru
      _
    // Predicated region
    $region34: #{au_forward.1} parent=1 // pred_check
      _
    $region35: #{au_forward.1} parent=1 // pred_check_branch
      %33 = sbr.rel (0) target = $region37
    $region36: #{au_forward.1} parent=1 // pred_region
      _
    $region37: #{au_forward.1} parent=1 // pred_fallthru
      _
    // Predicated region
    $region38: #{au_forward.1} parent=1 // pred_check
      _
    $region39: #{au_forward.1} parent=1 // pred_check_branch
      %35 = sbr.rel (0) target = $region41
    $region40: #{au_forward.1} parent=1 // pred_region
      _
    $region41: #{au_forward.1} parent=1 // pred_fallthru
      _
    %v36 = vld [vmem:[%s0] sm:$0xff]
    %v37 = vld [vmem:[%s0 + $0x8] sm:$0xff]
    %v38 = vld [vmem:[%s0 + $0x10] sm:$0xff]
    %v39 = vld [vmem:[%s0 + $0x18] sm:$0xff]
    %v40 = vld [vmem:[%s1] sm:$0xff]
    %v41 = vld [vmem:[%s1 + $0x8] sm:$0xff]
    %v42 = vld [vmem:[%s1 + $0x10] sm:$0x1f]
    %v43 = vld [vmem:[%s2] sm:$0xff]
    %v44 = vld [vmem:[%s2 + $0x8] sm:$0xff]
    %v45 = vld [vmem:[%s2 + $0x10] sm:$0xff]
    %v46 = vld [vmem:[%s2 + $0x18] sm:$0xff]
    %vm47 = vcmask 171008
    %v49 = vsel %vm47, %v36, 0
    %v52 = vsel %vm47, %v37, 0
    %v55 = vsel %vm47, %v38, 0
    %v58 = vsel %vm47, %v39, 0
    %vm60 = vcmask 1044480
    %v62 = vsel %vm60, %v42, 0
    %64 = vmatprep.subr.mxu0 0.0
    %65 = vmatpush1.msra.mxu0 0.0
    %66 = vmatprep.subr.mxu0 0.0
    %67 = vmatpush1.msra.mxu0 0.0
    %68 = vmatprep.subr.mxu0 0.0
    %69 = vmatpush1.msra.mxu0 0.0
    %70 = vmatprep.subr.mxu0 0.0
    %71 = vmatpush1.msra.mxu0 0.0
    %72 = vmatprep.subr.mxu0 0.0
    %73 = vmatpush1.msra.mxu0 0.0
    %74 = vmatprep.subr.mxu0 0.0
    %75 = vmatpush1.msra.mxu0 0.0
    %76 = vmatprep.subr.mxu0 0.0
    %77 = vmatpush1.msra.mxu0 0.0
    %78 = vmatprep.subr.mxu0 0.0
    %79 = vmatpush1.msra.mxu0 0.0
    %80 = vmatprep.subr.mxu0 0.0
    %81 = vmatpush1.msra.mxu0 0.0
    %82 = vmatprep.subr.mxu0 0.0
    %83 = vmatpush1.msra.mxu0 0.0
    %84 = vmatprep.subr.mxu0 0.0
    %85 = vmatpush1.msra.mxu0 0.0
    %86 = vmatprep.subr.mxu0 0.0
    %87 = vmatpush1.msra.mxu0 0.0
    %88 = vmatprep.subr.mxu0 0.0
    %89 = vmatpush1.msra.mxu0 0.0
    %90 = vmatprep.subr.mxu0 0.0
    %91 = vmatpush1.msra.mxu0 %v62
    %92 = vmatprep.subr.mxu0 0.0
    %93 = vmatpush1.msra.mxu0 %v41
    %94 = vmatprep.subr.mxu0 0.0
    %95 = vmatpush1.msra.mxu0 %v40
    %96 = vmatprep.subr.mxu0 0.0
    %97 = vmatpush2.msra.mxu0 0.0
    %98 = vmatprep.subr.mxu0 0.0
    %99 = vmatpush2.msra.mxu0 0.0
    %100 = vmatprep.subr.mxu0 0.0
    %101 = vmatpush2.msra.mxu0 0.0
    %102 = vmatprep.subr.mxu0 0.0
    %103 = vmatpush2.msra.mxu0 0.0
    %104 = vmatprep.subr.mxu0 0.0
    %105 = vmatpush2.msra.mxu0 0.0
    %106 = vmatprep.subr.mxu0 0.0
    %107 = vmatpush2.msra.mxu0 0.0
    %108 = vmatprep.subr.mxu0 0.0
    %109 = vmatpush2.msra.mxu0 0.0
    %110 = vmatprep.subr.mxu0 0.0
    %111 = vmatpush2.msra.mxu0 0.0
    %112 = vmatprep.subr.mxu0 0.0
    %113 = vmatpush2.msra.mxu0 0.0
    %114 = vmatprep.subr.mxu0 0.0
    %115 = vmatpush2.msra.mxu0 0.0
    %116 = vmatprep.subr.mxu0 0.0
    %117 = vmatpush2.msra.mxu0 0.0
    %118 = vmatprep.subr.mxu0 0.0
    %119 = vmatpush2.msra.mxu0 0.0
    %120 = vmatprep.subr.mxu0 0.0
    %121 = vmatpush2.msra.mxu0 0.0
    %122 = vmatprep.subr.mxu0 0.0
    %123 = vmatpush2.msra.mxu0 0.0
    %124 = vmatprep.subr.mxu0 0.0
    %125 = vmatpush2.msra.mxu0 0.0
    %126 = vmatprep.subr.mxu0 0.0
    %127 = vmatpush2.msra.mxu0 0.0
    %128 = vmatprep.mubr.f32.mxu0 0.0
    %129 = vmatmul.mubr.f32.gmra.mxu0 %v49
    %v130 = vpop.f32.mrf.mxu0
    %v131 = vadd.f32 %v43, %v130
    %v132 = vpop.f32.mrf.mxu0
    %133 = vmatprep.mubr.f32.mxu0 0.0
    %134 = vmatmul.mubr.f32.gmra.mxu0 %v52
    %v135 = vpop.f32.mrf.mxu0
    %v136 = vadd.f32 %v44, %v135
    %v137 = vpop.f32.mrf.mxu0
    %138 = vmatprep.mubr.f32.mxu0 0.0
    %139 = vmatmul.mubr.f32.gmra.mxu0 %v55
    %v140 = vpop.f32.mrf.mxu0
    %v141 = vadd.f32 %v45, %v140
    %v142 = vpop.f32.mrf.mxu0
    %143 = vmatprep.mubr.f32.mxu0 0.0
    %144 = vmatmul.mubr.f32.gmra.mxu0 %v58
    %v145 = vpop.f32.mrf.mxu0
    %v146 = vadd.f32 %v46, %v145
    %v147 = vpop.f32.mrf.mxu0
    %148 = vdwg.mxu0
    %v149 = vld [vmem:[%s7] sm:$0xff]
    %v150 = vld [vmem:[%s4] sm:$0xff]
    %v151 = vld [vmem:[%s4 + $0x8] sm:$0xff]
    %v152 = vld [vmem:[%s4 + $0x10] sm:$0xff]
    %v153 = vld [vmem:[%s4 + $0x18] sm:$0xff]
    %v154 = vld [vmem:[%s3] sm:$0xff]
    %v155 = vld [vmem:[%s3 + $0x8] sm:$0xff]
    %v156 = vld [vmem:[%s3 + $0x10] sm:$0xff]
    %v157 = vld [vmem:[%s3 + $0x18] sm:$0xff]
    %v158 = vlaneseq
    %v159 = vshrl.u32 %v158, 7
    %v160 = vsub.s32 0, %v159
    %v161 = vrot.slane %v149, %v160
    %vm162 = vcmask 261120
    %v164 = vsel %vm162, %v131, 0
    %v167 = vsel %vm162, %v136, 0
    %v170 = vsel %vm162, %v141, 0
    %v173 = vsel %vm162, %v146, 0
    %175 = vmatprep.subr.mxu0 0.0
    %176 = vmatpush1.msra.mxu0 0.0
    %177 = vmatprep.subr.mxu0 0.0
    %178 = vmatpush1.msra.mxu0 0.0
    %179 = vmatprep.subr.mxu0 0.0
    %180 = vmatpush1.msra.mxu0 0.0
    %181 = vmatprep.subr.mxu0 0.0
    %182 = vmatpush1.msra.mxu0 0.0
    %183 = vmatprep.subr.mxu0 0.0
    %184 = vmatpush1.msra.mxu0 0.0
    %185 = vmatprep.subr.mxu0 0.0
    %186 = vmatpush1.msra.mxu0 0.0
    %187 = vmatprep.subr.mxu0 0.0
    %188 = vmatpush1.msra.mxu0 0.0
    %189 = vmatprep.subr.mxu0 0.0
    %190 = vmatpush1.msra.mxu0 0.0
    %191 = vmatprep.subr.mxu0 0.0
    %192 = vmatpush1.msra.mxu0 0.0
    %193 = vmatprep.subr.mxu0 0.0
    %194 = vmatpush1.msra.mxu0 0.0
    %195 = vmatprep.subr.mxu0 0.0
    %196 = vmatpush1.msra.mxu0 0.0
    %197 = vmatprep.subr.mxu0 0.0
    %198 = vmatpush1.msra.mxu0 0.0
    %199 = vmatprep.subr.mxu0 0.0
    %200 = vmatpush1.msra.mxu0 %v157
    %201 = vmatprep.subr.mxu0 0.0
    %202 = vmatpush1.msra.mxu0 %v156
    %203 = vmatprep.subr.mxu0 0.0
    %204 = vmatpush1.msra.mxu0 %v155
    %205 = vmatprep.subr.mxu0 0.0
    %206 = vmatpush1.msra.mxu0 %v154
    %207 = vmatprep.subr.mxu0 0.0
    %208 = vmatpush2.msra.mxu0 0.0
    %209 = vmatprep.subr.mxu0 0.0
    %210 = vmatpush2.msra.mxu0 0.0
    %211 = vmatprep.subr.mxu0 0.0
    %212 = vmatpush2.msra.mxu0 0.0
    %213 = vmatprep.subr.mxu0 0.0
    %214 = vmatpush2.msra.mxu0 0.0
    %215 = vmatprep.subr.mxu0 0.0
    %216 = vmatpush2.msra.mxu0 0.0
    %217 = vmatprep.subr.mxu0 0.0
    %218 = vmatpush2.msra.mxu0 0.0
    %219 = vmatprep.subr.mxu0 0.0
    %220 = vmatpush2.msra.mxu0 0.0
    %221 = vmatprep.subr.mxu0 0.0
    %222 = vmatpush2.msra.mxu0 0.0
    %223 = vmatprep.subr.mxu0 0.0
    %224 = vmatpush2.msra.mxu0 0.0
    %225 = vmatprep.subr.mxu0 0.0
    %226 = vmatpush2.msra.mxu0 0.0
    %227 = vmatprep.subr.mxu0 0.0
    %228 = vmatpush2.msra.mxu0 0.0
    %229 = vmatprep.subr.mxu0 0.0
    %230 = vmatpush2.msra.mxu0 0.0
    %231 = vmatprep.subr.mxu0 0.0
    %232 = vmatpush2.msra.mxu0 0.0
    %233 = vmatprep.subr.mxu0 0.0
    %234 = vmatpush2.msra.mxu0 0.0
    %235 = vmatprep.subr.mxu0 0.0
    %236 = vmatpush2.msra.mxu0 0.0
    %237 = vmatprep.subr.mxu0 0.0
    %238 = vmatpush2.msra.mxu0 0.0
    %239 = vmatprep.mubr.f32.mxu0 0.0
    %240 = vmatmul.mubr.f32.gmra.mxu0 %v164
    %v241 = vpop.f32.mrf.mxu0
    %v242 = vadd.f32 %v161, %v241
    %v243 = vpop.f32.mrf.mxu0
    %244 = vmatprep.mubr.f32.mxu0 0.0
    %245 = vmatmul.mubr.f32.gmra.mxu0 %v167
    %v246 = vpop.f32.mrf.mxu0
    %v247 = vadd.f32 %v161, %v246
    %v248 = vpop.f32.mrf.mxu0
    %249 = vmatprep.mubr.f32.mxu0 0.0
    %250 = vmatmul.mubr.f32.gmra.mxu0 %v170
    %v251 = vpop.f32.mrf.mxu0
    %v252 = vadd.f32 %v161, %v251
    %v253 = vpop.f32.mrf.mxu0
    %254 = vmatprep.mubr.f32.mxu0 0.0
    %255 = vmatmul.mubr.f32.gmra.mxu0 %v173
    %v256 = vpop.f32.mrf.mxu0
    %v257 = vadd.f32 %v161, %v256
    %v258 = vpop.f32.mrf.mxu0
    %259 = vdwg.mxu0
    %262 = vrot.lane.b32.xlu0 %v242, 96
    %v263 = vpop.permute.xlu0 %262
    %264 = vrot.lane.b32.xlu0 %v247, 96
    %v265 = vpop.permute.xlu0 %264
    %vm266 = vcmask 64512
    %v267 = vsel %vm266, %v242, 0
    %v269 = vsel %vm266, %v247, 0
    %v271 = vsel %vm266, %v263, 0
    %v273 = vsel %vm266, %v265, 0
    %275 = vmatprep.subr.mxu0 0.0
    %276 = vmatpush1.xpose.msra.mxu0 0.0
    %277 = vmatprep.subr.mxu0 0.0
    %278 = vmatpush1.xpose.msra.mxu0 0.0
    %279 = vmatprep.subr.mxu0 0.0
    %280 = vmatpush1.xpose.msra.mxu0 0.0
    %281 = vmatprep.subr.mxu0 0.0
    %282 = vmatpush1.xpose.msra.mxu0 0.0
    %283 = vmatprep.subr.mxu0 0.0
    %284 = vmatpush1.xpose.msra.mxu0 0.0
    %285 = vmatprep.subr.mxu0 0.0
    %286 = vmatpush1.xpose.msra.mxu0 0.0
    %287 = vmatprep.subr.mxu0 0.0
    %288 = vmatpush1.xpose.msra.mxu0 0.0
    %289 = vmatprep.subr.mxu0 0.0
    %290 = vmatpush1.xpose.msra.mxu0 0.0
    %291 = vmatprep.subr.mxu0 0.0
    %292 = vmatpush1.xpose.msra.mxu0 0.0
    %293 = vmatprep.subr.mxu0 0.0
    %294 = vmatpush1.xpose.msra.mxu0 0.0
    %295 = vmatprep.subr.mxu0 0.0
    %296 = vmatpush1.xpose.msra.mxu0 0.0
    %297 = vmatprep.subr.mxu0 0.0
    %298 = vmatpush1.xpose.msra.mxu0 0.0
    %299 = vmatprep.subr.mxu0 0.0
    %300 = vmatpush1.xpose.msra.mxu0 0.0
    %301 = vmatprep.subr.mxu0 0.0
    %302 = vmatpush1.xpose.msra.mxu0 0.0
    %303 = vmatprep.subr.mxu0 0.0
    %304 = vmatpush1.xpose.msra.mxu0 %v273
    %305 = vmatprep.subr.mxu0 0.0
    %306 = vmatpush1.xpose.msra.mxu0 %v271
    %307 = vmatprep.subr.mxu0 0.0
    %308 = vmatpush2.xpose.msra.mxu0 0.0
    %309 = vmatprep.subr.mxu0 0.0
    %310 = vmatpush2.xpose.msra.mxu0 0.0
    %311 = vmatprep.subr.mxu0 0.0
    %312 = vmatpush2.xpose.msra.mxu0 0.0
    %313 = vmatprep.subr.mxu0 0.0
    %314 = vmatpush2.xpose.msra.mxu0 0.0
    %315 = vmatprep.subr.mxu0 0.0
    %316 = vmatpush2.xpose.msra.mxu0 0.0
    %317 = vmatprep.subr.mxu0 0.0
    %318 = vmatpush2.xpose.msra.mxu0 0.0
    %319 = vmatprep.subr.mxu0 0.0
    %320 = vmatpush2.xpose.msra.mxu0 0.0
    %321 = vmatprep.subr.mxu0 0.0
    %322 = vmatpush2.xpose.msra.mxu0 0.0
    %323 = vmatprep.subr.mxu0 0.0
    %324 = vmatpush2.xpose.msra.mxu0 0.0
    %325 = vmatprep.subr.mxu0 0.0
    %326 = vmatpush2.xpose.msra.mxu0 0.0
    %327 = vmatprep.subr.mxu0 0.0
    %328 = vmatpush2.xpose.msra.mxu0 0.0
    %329 = vmatprep.subr.mxu0 0.0
    %330 = vmatpush2.xpose.msra.mxu0 0.0
    %331 = vmatprep.subr.mxu0 0.0
    %332 = vmatpush2.xpose.msra.mxu0 0.0
    %333 = vmatprep.subr.mxu0 0.0
    %334 = vmatpush2.xpose.msra.mxu0 0.0
    %335 = vmatprep.subr.mxu0 0.0
    %336 = vmatpush2.xpose.msra.mxu0 0.0
    %337 = vmatprep.subr.mxu0 0.0
    %338 = vmatpush2.xpose.msra.mxu0 0.0
    %339 = vmatprep.mubr.f32.mxu0 0.0
    %340 = vmatmul.mubr.f32.gmra.mxu0 %v267
    %v341 = vpop.f32.mrf.mxu0
    %v342 = vadd.f32 0.0, %v341
    %v343 = vpop.f32.mrf.mxu0
    %344 = vmatprep.mubr.f32.mxu0 0.0
    %345 = vmatmul.mubr.f32.gmra.mxu0 %v269
    %v346 = vpop.f32.mrf.mxu0
    %v347 = vadd.f32 0.0, %v346
    %v348 = vpop.f32.mrf.mxu0
    %349 = vdwg.mxu0
    %352 = vrot.lane.b32.xlu0 %v252, 96
    %v353 = vpop.permute.xlu0 %352
    %354 = vrot.lane.b32.xlu0 %v257, 96
    %v355 = vpop.permute.xlu0 %354
    %v356 = vsel %vm266, %v252, 0
    %v358 = vsel %vm266, %v257, 0
    %v360 = vsel %vm266, %v353, 0
    %v362 = vsel %vm266, %v355, 0
    %364 = vmatprep.subr.mxu0 0.0
    %365 = vmatpush1.xpose.msra.mxu0 0.0
    %366 = vmatprep.subr.mxu0 0.0
    %367 = vmatpush1.xpose.msra.mxu0 0.0
    %368 = vmatprep.subr.mxu0 0.0
    %369 = vmatpush1.xpose.msra.mxu0 0.0
    %370 = vmatprep.subr.mxu0 0.0
    %371 = vmatpush1.xpose.msra.mxu0 0.0
    %372 = vmatprep.subr.mxu0 0.0
    %373 = vmatpush1.xpose.msra.mxu0 0.0
    %374 = vmatprep.subr.mxu0 0.0
    %375 = vmatpush1.xpose.msra.mxu0 0.0
    %376 = vmatprep.subr.mxu0 0.0
    %377 = vmatpush1.xpose.msra.mxu0 0.0
    %378 = vmatprep.subr.mxu0 0.0
    %379 = vmatpush1.xpose.msra.mxu0 0.0
    %380 = vmatprep.subr.mxu0 0.0
    %381 = vmatpush1.xpose.msra.mxu0 0.0
    %382 = vmatprep.subr.mxu0 0.0
    %383 = vmatpush1.xpose.msra.mxu0 0.0
    %384 = vmatprep.subr.mxu0 0.0
    %385 = vmatpush1.xpose.msra.mxu0 0.0
    %386 = vmatprep.subr.mxu0 0.0
    %387 = vmatpush1.xpose.msra.mxu0 0.0
    %388 = vmatprep.subr.mxu0 0.0
    %389 = vmatpush1.xpose.msra.mxu0 0.0
    %390 = vmatprep.subr.mxu0 0.0
    %391 = vmatpush1.xpose.msra.mxu0 0.0
    %392 = vmatprep.subr.mxu0 0.0
    %393 = vmatpush1.xpose.msra.mxu0 %v362
    %394 = vmatprep.subr.mxu0 0.0
    %395 = vmatpush1.xpose.msra.mxu0 %v360
    %396 = vmatprep.subr.mxu0 0.0
    %397 = vmatpush2.xpose.msra.mxu0 0.0
    %398 = vmatprep.subr.mxu0 0.0
    %399 = vmatpush2.xpose.msra.mxu0 0.0
    %400 = vmatprep.subr.mxu0 0.0
    %401 = vmatpush2.xpose.msra.mxu0 0.0
    %402 = vmatprep.subr.mxu0 0.0
    %403 = vmatpush2.xpose.msra.mxu0 0.0
    %404 = vmatprep.subr.mxu0 0.0
    %405 = vmatpush2.xpose.msra.mxu0 0.0
    %406 = vmatprep.subr.mxu0 0.0
    %407 = vmatpush2.xpose.msra.mxu0 0.0
    %408 = vmatprep.subr.mxu0 0.0
    %409 = vmatpush2.xpose.msra.mxu0 0.0
    %410 = vmatprep.subr.mxu0 0.0
    %411 = vmatpush2.xpose.msra.mxu0 0.0
    %412 = vmatprep.subr.mxu0 0.0
    %413 = vmatpush2.xpose.msra.mxu0 0.0
    %414 = vmatprep.subr.mxu0 0.0
    %415 = vmatpush2.xpose.msra.mxu0 0.0
    %416 = vmatprep.subr.mxu0 0.0
    %417 = vmatpush2.xpose.msra.mxu0 0.0
    %418 = vmatprep.subr.mxu0 0.0
    %419 = vmatpush2.xpose.msra.mxu0 0.0
    %420 = vmatprep.subr.mxu0 0.0
    %421 = vmatpush2.xpose.msra.mxu0 0.0
    %422 = vmatprep.subr.mxu0 0.0
    %423 = vmatpush2.xpose.msra.mxu0 0.0
    %424 = vmatprep.subr.mxu0 0.0
    %425 = vmatpush2.xpose.msra.mxu0 0.0
    %426 = vmatprep.subr.mxu0 0.0
    %427 = vmatpush2.xpose.msra.mxu0 0.0
    %428 = vmatprep.mubr.f32.mxu0 0.0
    %429 = vmatmul.mubr.f32.gmra.mxu0 %v356
    %v430 = vpop.f32.mrf.mxu0
    %v431 = vadd.f32 0.0, %v430
    %v432 = vpop.f32.mrf.mxu0
    %433 = vmatprep.mubr.f32.mxu0 0.0
    %434 = vmatmul.mubr.f32.gmra.mxu0 %v358
    %v435 = vpop.f32.mrf.mxu0
    %v436 = vadd.f32 0.0, %v435
    %v437 = vpop.f32.mrf.mxu0
    %438 = vdwg.mxu0
    %vm439 = vcmask 130048
    %v440 = vsel %vm439, %v342, -inf
    %441 = vmax.xlane.f32.xlu0 %v440
    %v442 = vpop.xlane.xlu0 %441
    %v443 = vsel %vm439, %v347, -inf
    %444 = vmax.xlane.f32.xlu0 %v443
    %v445 = vpop.xlane.xlu0 %444
    %v446 = vsel %vm439, %v431, -inf
    %447 = vmax.xlane.f32.xlu0 %v446
    %v448 = vpop.xlane.xlu0 %447
    %v449 = vsel %vm439, %v436, -inf
    %450 = vmax.xlane.f32.xlu0 %v449
    %v451 = vpop.xlane.xlu0 %450
    %v452 = vsub.f32 %v342, %v442
    %v453 = vsub.f32 %v347, %v445
    %v454 = vsub.f32 %v431, %v448
    %v455 = vsub.f32 %v436, %v451
    %v456 = vmul.f32 %v452, 1.442695
    %v457 = vpow.pop %v456
    %v458 = vmul.f32 %v453, 1.442695
    %v459 = vpow.pop %v458
    %v460 = vmul.f32 %v454, 1.442695
    %v461 = vpow.pop %v460
    %v462 = vmul.f32 %v455, 1.442695
    %v463 = vpow.pop %v462
    %v464 = vsel %vm439, %v457, 0.0
    %465 = vadd.xlane.f32.xlu0 %v464
    %v466 = vpop.xlane.xlu0 %465
    %v467 = vsel %vm439, %v459, 0.0
    %468 = vadd.xlane.f32.xlu0 %v467
    %v469 = vpop.xlane.xlu0 %468
    %v470 = vsel %vm439, %v461, 0.0
    %471 = vadd.xlane.f32.xlu0 %v470
    %v472 = vpop.xlane.xlu0 %471
    %v473 = vsel %vm439, %v463, 0.0
    %474 = vadd.xlane.f32.xlu0 %v473
    %v475 = vpop.xlane.xlu0 %474
    %v476 = vrcp.pop %v466
    %v477 = vrcp.pop %v469
    %v478 = vrcp.pop %v472
    %v479 = vrcp.pop %v475
    %v480 = vmul.f32 %v457, %v476
    %v481 = vmul.f32 %v459, %v477
    %v482 = vmul.f32 %v461, %v478
    %v483 = vmul.f32 %v463, %v479
    %484 = vrot.lane.b32.xlu0 %v242, 64
    %v485 = vpop.permute.xlu0 %484
    %486 = vrot.lane.b32.xlu0 %v247, 64
    %v487 = vpop.permute.xlu0 %486
    %v491 = vsel %vm439, %v480, 0
    %v494 = vsel %vm439, %v481, 0
    %496 = vmatprep.subr.mxu0 0.0
    %497 = vmatpush1.msra.mxu0 0.0
    %498 = vmatprep.subr.mxu0 0.0
    %499 = vmatpush1.msra.mxu0 0.0
    %500 = vmatprep.subr.mxu0 0.0
    %501 = vmatpush1.msra.mxu0 0.0
    %502 = vmatprep.subr.mxu0 0.0
    %503 = vmatpush1.msra.mxu0 0.0
    %504 = vmatprep.subr.mxu0 0.0
    %505 = vmatpush1.msra.mxu0 0.0
    %506 = vmatprep.subr.mxu0 0.0
    %507 = vmatpush1.msra.mxu0 0.0
    %508 = vmatprep.subr.mxu0 0.0
    %509 = vmatpush1.msra.mxu0 0.0
    %510 = vmatprep.subr.mxu0 0.0
    %511 = vmatpush1.msra.mxu0 0.0
    %512 = vmatprep.subr.mxu0 0.0
    %513 = vmatpush1.msra.mxu0 0.0
    %514 = vmatprep.subr.mxu0 0.0
    %515 = vmatpush1.msra.mxu0 0.0
    %516 = vmatprep.subr.mxu0 0.0
    %517 = vmatpush1.msra.mxu0 0.0
    %518 = vmatprep.subr.mxu0 0.0
    %519 = vmatpush1.msra.mxu0 0.0
    %520 = vmatprep.subr.mxu0 0.0
    %521 = vmatpush1.msra.mxu0 0.0
    %522 = vmatprep.subr.mxu0 0.0
    %523 = vmatpush1.msra.mxu0 0.0
    %524 = vmatprep.subr.mxu0 0.0
    %525 = vmatpush1.msra.mxu0 %v487
    %526 = vmatprep.subr.mxu0 0.0
    %527 = vmatpush1.msra.mxu0 %v485
    %528 = vmatprep.subr.mxu0 0.0
    %529 = vmatpush2.msra.mxu0 0.0
    %530 = vmatprep.subr.mxu0 0.0
    %531 = vmatpush2.msra.mxu0 0.0
    %532 = vmatprep.subr.mxu0 0.0
    %533 = vmatpush2.msra.mxu0 0.0
    %534 = vmatprep.subr.mxu0 0.0
    %535 = vmatpush2.msra.mxu0 0.0
    %536 = vmatprep.subr.mxu0 0.0
    %537 = vmatpush2.msra.mxu0 0.0
    %538 = vmatprep.subr.mxu0 0.0
    %539 = vmatpush2.msra.mxu0 0.0
    %540 = vmatprep.subr.mxu0 0.0
    %541 = vmatpush2.msra.mxu0 0.0
    %542 = vmatprep.subr.mxu0 0.0
    %543 = vmatpush2.msra.mxu0 0.0
    %544 = vmatprep.subr.mxu0 0.0
    %545 = vmatpush2.msra.mxu0 0.0
    %546 = vmatprep.subr.mxu0 0.0
    %547 = vmatpush2.msra.mxu0 0.0
    %548 = vmatprep.subr.mxu0 0.0
    %549 = vmatpush2.msra.mxu0 0.0
    %550 = vmatprep.subr.mxu0 0.0
    %551 = vmatpush2.msra.mxu0 0.0
    %552 = vmatprep.subr.mxu0 0.0
    %553 = vmatpush2.msra.mxu0 0.0
    %554 = vmatprep.subr.mxu0 0.0
    %555 = vmatpush2.msra.mxu0 0.0
    %556 = vmatprep.subr.mxu0 0.0
    %557 = vmatpush2.msra.mxu0 0.0
    %558 = vmatprep.subr.mxu0 0.0
    %559 = vmatpush2.msra.mxu0 0.0
    %560 = vmatprep.mubr.f32.mxu0 0.0
    %561 = vmatmul.mubr.f32.gmra.mxu0 %v491
    %v562 = vpop.f32.mrf.mxu0
    %v563 = vadd.f32 0.0, %v562
    %v564 = vpop.f32.mrf.mxu0
    %565 = vmatprep.mubr.f32.mxu0 0.0
    %566 = vmatmul.mubr.f32.gmra.mxu0 %v494
    %v567 = vpop.f32.mrf.mxu0
    %v568 = vadd.f32 0.0, %v567
    %v569 = vpop.f32.mrf.mxu0
    %570 = vdwg.mxu0
    %571 = vrot.lane.b32.xlu0 %v252, 64
    %v572 = vpop.permute.xlu0 %571
    %573 = vrot.lane.b32.xlu0 %v257, 64
    %v574 = vpop.permute.xlu0 %573
    %v578 = vsel %vm439, %v482, 0
    %v581 = vsel %vm439, %v483, 0
    %583 = vmatprep.subr.mxu0 0.0
    %584 = vmatpush1.msra.mxu0 0.0
    %585 = vmatprep.subr.mxu0 0.0
    %586 = vmatpush1.msra.mxu0 0.0
    %587 = vmatprep.subr.mxu0 0.0
    %588 = vmatpush1.msra.mxu0 0.0
    %589 = vmatprep.subr.mxu0 0.0
    %590 = vmatpush1.msra.mxu0 0.0
    %591 = vmatprep.subr.mxu0 0.0
    %592 = vmatpush1.msra.mxu0 0.0
    %593 = vmatprep.subr.mxu0 0.0
    %594 = vmatpush1.msra.mxu0 0.0
    %595 = vmatprep.subr.mxu0 0.0
    %596 = vmatpush1.msra.mxu0 0.0
    %597 = vmatprep.subr.mxu0 0.0
    %598 = vmatpush1.msra.mxu0 0.0
    %599 = vmatprep.subr.mxu0 0.0
    %600 = vmatpush1.msra.mxu0 0.0
    %601 = vmatprep.subr.mxu0 0.0
    %602 = vmatpush1.msra.mxu0 0.0
    %603 = vmatprep.subr.mxu0 0.0
    %604 = vmatpush1.msra.mxu0 0.0
    %605 = vmatprep.subr.mxu0 0.0
    %606 = vmatpush1.msra.mxu0 0.0
    %607 = vmatprep.subr.mxu0 0.0
    %608 = vmatpush1.msra.mxu0 0.0
    %609 = vmatprep.subr.mxu0 0.0
    %610 = vmatpush1.msra.mxu0 0.0
    %611 = vmatprep.subr.mxu0 0.0
    %612 = vmatpush1.msra.mxu0 %v574
    %613 = vmatprep.subr.mxu0 0.0
    %614 = vmatpush1.msra.mxu0 %v572
    %615 = vmatprep.subr.mxu0 0.0
    %616 = vmatpush2.msra.mxu0 0.0
    %617 = vmatprep.subr.mxu0 0.0
    %618 = vmatpush2.msra.mxu0 0.0
    %619 = vmatprep.subr.mxu0 0.0
    %620 = vmatpush2.msra.mxu0 0.0
    %621 = vmatprep.subr.mxu0 0.0
    %622 = vmatpush2.msra.mxu0 0.0
    %623 = vmatprep.subr.mxu0 0.0
    %624 = vmatpush2.msra.mxu0 0.0
    %625 = vmatprep.subr.mxu0 0.0
    %626 = vmatpush2.msra.mxu0 0.0
    %627 = vmatprep.subr.mxu0 0.0
    %628 = vmatpush2.msra.mxu0 0.0
    %629 = vmatprep.subr.mxu0 0.0
    %630 = vmatpush2.msra.mxu0 0.0
    %631 = vmatprep.subr.mxu0 0.0
    %632 = vmatpush2.msra.mxu0 0.0
    %633 = vmatprep.subr.mxu0 0.0
    %634 = vmatpush2.msra.mxu0 0.0
    %635 = vmatprep.subr.mxu0 0.0
    %636 = vmatpush2.msra.mxu0 0.0
    %637 = vmatprep.subr.mxu0 0.0
    %638 = vmatpush2.msra.mxu0 0.0
    %639 = vmatprep.subr.mxu0 0.0
    %640 = vmatpush2.msra.mxu0 0.0
    %641 = vmatprep.subr.mxu0 0.0
    %642 = vmatpush2.msra.mxu0 0.0
    %643 = vmatprep.subr.mxu0 0.0
    %644 = vmatpush2.msra.mxu0 0.0
    %645 = vmatprep.subr.mxu0 0.0
    %646 = vmatpush2.msra.mxu0 0.0
    %647 = vmatprep.mubr.f32.mxu0 0.0
    %648 = vmatmul.mubr.f32.gmra.mxu0 %v578
    %v649 = vpop.f32.mrf.mxu0
    %v650 = vadd.f32 0.0, %v649
    %v651 = vpop.f32.mrf.mxu0
    %652 = vmatprep.mubr.f32.mxu0 0.0
    %653 = vmatmul.mubr.f32.gmra.mxu0 %v581
    %v654 = vpop.f32.mrf.mxu0
    %v655 = vadd.f32 0.0, %v654
    %v656 = vpop.f32.mrf.mxu0
    %657 = vdwg.mxu0
    %658 = vrot.lane.b32.xlu0 %v242, 120
    %v659 = vpop.permute.xlu0 %658
    %660 = vrot.lane.b32.xlu0 %v247, 120
    %v661 = vpop.permute.xlu0 %660
    %662 = vrot.lane.b32.xlu0 %v242, 88
    %v663 = vpop.permute.xlu0 %662
    %664 = vrot.lane.b32.xlu0 %v247, 88
    %v665 = vpop.permute.xlu0 %664
    %v666 = vsel %vm266, %v659, 0
    %v668 = vsel %vm266, %v661, 0
    %v670 = vsel %vm266, %v663, 0
    %v672 = vsel %vm266, %v665, 0
    %674 = vmatprep.subr.mxu0 0.0
    %675 = vmatpush1.xpose.msra.mxu0 0.0
    %676 = vmatprep.subr.mxu0 0.0
    %677 = vmatpush1.xpose.msra.mxu0 0.0
    %678 = vmatprep.subr.mxu0 0.0
    %679 = vmatpush1.xpose.msra.mxu0 0.0
    %680 = vmatprep.subr.mxu0 0.0
    %681 = vmatpush1.xpose.msra.mxu0 0.0
    %682 = vmatprep.subr.mxu0 0.0
    %683 = vmatpush1.xpose.msra.mxu0 0.0
    %684 = vmatprep.subr.mxu0 0.0
    %685 = vmatpush1.xpose.msra.mxu0 0.0
    %686 = vmatprep.subr.mxu0 0.0
    %687 = vmatpush1.xpose.msra.mxu0 0.0
    %688 = vmatprep.subr.mxu0 0.0
    %689 = vmatpush1.xpose.msra.mxu0 0.0
    %690 = vmatprep.subr.mxu0 0.0
    %691 = vmatpush1.xpose.msra.mxu0 0.0
    %692 = vmatprep.subr.mxu0 0.0
    %693 = vmatpush1.xpose.msra.mxu0 0.0
    %694 = vmatprep.subr.mxu0 0.0
    %695 = vmatpush1.xpose.msra.mxu0 0.0
    %696 = vmatprep.subr.mxu0 0.0
    %697 = vmatpush1.xpose.msra.mxu0 0.0
    %698 = vmatprep.subr.mxu0 0.0
    %699 = vmatpush1.xpose.msra.mxu0 0.0
    %700 = vmatprep.subr.mxu0 0.0
    %701 = vmatpush1.xpose.msra.mxu0 0.0
    %702 = vmatprep.subr.mxu0 0.0
    %703 = vmatpush1.xpose.msra.mxu0 %v672
    %704 = vmatprep.subr.mxu0 0.0
    %705 = vmatpush1.xpose.msra.mxu0 %v670
    %706 = vmatprep.subr.mxu0 0.0
    %707 = vmatpush2.xpose.msra.mxu0 0.0
    %708 = vmatprep.subr.mxu0 0.0
    %709 = vmatpush2.xpose.msra.mxu0 0.0
    %710 = vmatprep.subr.mxu0 0.0
    %711 = vmatpush2.xpose.msra.mxu0 0.0
    %712 = vmatprep.subr.mxu0 0.0
    %713 = vmatpush2.xpose.msra.mxu0 0.0
    %714 = vmatprep.subr.mxu0 0.0
    %715 = vmatpush2.xpose.msra.mxu0 0.0
    %716 = vmatprep.subr.mxu0 0.0
    %717 = vmatpush2.xpose.msra.mxu0 0.0
    %718 = vmatprep.subr.mxu0 0.0
    %719 = vmatpush2.xpose.msra.mxu0 0.0
    %720 = vmatprep.subr.mxu0 0.0
    %721 = vmatpush2.xpose.msra.mxu0 0.0
    %722 = vmatprep.subr.mxu0 0.0
    %723 = vmatpush2.xpose.msra.mxu0 0.0
    %724 = vmatprep.subr.mxu0 0.0
    %725 = vmatpush2.xpose.msra.mxu0 0.0
    %726 = vmatprep.subr.mxu0 0.0
    %727 = vmatpush2.xpose.msra.mxu0 0.0
    %728 = vmatprep.subr.mxu0 0.0
    %729 = vmatpush2.xpose.msra.mxu0 0.0
    %730 = vmatprep.subr.mxu0 0.0
    %731 = vmatpush2.xpose.msra.mxu0 0.0
    %732 = vmatprep.subr.mxu0 0.0
    %733 = vmatpush2.xpose.msra.mxu0 0.0
    %734 = vmatprep.subr.mxu0 0.0
    %735 = vmatpush2.xpose.msra.mxu0 0.0
    %736 = vmatprep.subr.mxu0 0.0
    %737 = vmatpush2.xpose.msra.mxu0 0.0
    %738 = vmatprep.mubr.f32.mxu0 0.0
    %739 = vmatmul.mubr.f32.gmra.mxu0 %v666
    %v740 = vpop.f32.mrf.mxu0
    %v741 = vadd.f32 0.0, %v740
    %v742 = vpop.f32.mrf.mxu0
    %743 = vmatprep.mubr.f32.mxu0 0.0
    %744 = vmatmul.mubr.f32.gmra.mxu0 %v668
    %v745 = vpop.f32.mrf.mxu0
    %v746 = vadd.f32 0.0, %v745
    %v747 = vpop.f32.mrf.mxu0
    %748 = vdwg.mxu0
    %749 = vrot.lane.b32.xlu0 %v252, 120
    %v750 = vpop.permute.xlu0 %749
    %751 = vrot.lane.b32.xlu0 %v257, 120
    %v752 = vpop.permute.xlu0 %751
    %753 = vrot.lane.b32.xlu0 %v252, 88
    %v754 = vpop.permute.xlu0 %753
    %755 = vrot.lane.b32.xlu0 %v257, 88
    %v756 = vpop.permute.xlu0 %755
    %v757 = vsel %vm266, %v750, 0
    %v759 = vsel %vm266, %v752, 0
    %v761 = vsel %vm266, %v754, 0
    %v763 = vsel %vm266, %v756, 0
    %765 = vmatprep.subr.mxu0 0.0
    %766 = vmatpush1.xpose.msra.mxu0 0.0
    %767 = vmatprep.subr.mxu0 0.0
    %768 = vmatpush1.xpose.msra.mxu0 0.0
    %769 = vmatprep.subr.mxu0 0.0
    %770 = vmatpush1.xpose.msra.mxu0 0.0
    %771 = vmatprep.subr.mxu0 0.0
    %772 = vmatpush1.xpose.msra.mxu0 0.0
    %773 = vmatprep.subr.mxu0 0.0
    %774 = vmatpush1.xpose.msra.mxu0 0.0
    %775 = vmatprep.subr.mxu0 0.0
    %776 = vmatpush1.xpose.msra.mxu0 0.0
    %777 = vmatprep.subr.mxu0 0.0
    %778 = vmatpush1.xpose.msra.mxu0 0.0
    %779 = vmatprep.subr.mxu0 0.0
    %780 = vmatpush1.xpose.msra.mxu0 0.0
    %781 = vmatprep.subr.mxu0 0.0
    %782 = vmatpush1.xpose.msra.mxu0 0.0
    %783 = vmatprep.subr.mxu0 0.0
    %784 = vmatpush1.xpose.msra.mxu0 0.0
    %785 = vmatprep.subr.mxu0 0.0
    %786 = vmatpush1.xpose.msra.mxu0 0.0
    %787 = vmatprep.subr.mxu0 0.0
    %788 = vmatpush1.xpose.msra.mxu0 0.0
    %789 = vmatprep.subr.mxu0 0.0
    %790 = vmatpush1.xpose.msra.mxu0 0.0
    %791 = vmatprep.subr.mxu0 0.0
    %792 = vmatpush1.xpose.msra.mxu0 0.0
    %793 = vmatprep.subr.mxu0 0.0
    %794 = vmatpush1.xpose.msra.mxu0 %v763
    %795 = vmatprep.subr.mxu0 0.0
    %796 = vmatpush1.xpose.msra.mxu0 %v761
    %797 = vmatprep.subr.mxu0 0.0
    %798 = vmatpush2.xpose.msra.mxu0 0.0
    %799 = vmatprep.subr.mxu0 0.0
    %800 = vmatpush2.xpose.msra.mxu0 0.0
    %801 = vmatprep.subr.mxu0 0.0
    %802 = vmatpush2.xpose.msra.mxu0 0.0
    %803 = vmatprep.subr.mxu0 0.0
    %804 = vmatpush2.xpose.msra.mxu0 0.0
    %805 = vmatprep.subr.mxu0 0.0
    %806 = vmatpush2.xpose.msra.mxu0 0.0
    %807 = vmatprep.subr.mxu0 0.0
    %808 = vmatpush2.xpose.msra.mxu0 0.0
    %809 = vmatprep.subr.mxu0 0.0
    %810 = vmatpush2.xpose.msra.mxu0 0.0
    %811 = vmatprep.subr.mxu0 0.0
    %812 = vmatpush2.xpose.msra.mxu0 0.0
    %813 = vmatprep.subr.mxu0 0.0
    %814 = vmatpush2.xpose.msra.mxu0 0.0
    %815 = vmatprep.subr.mxu0 0.0
    %816 = vmatpush2.xpose.msra.mxu0 0.0
    %817 = vmatprep.subr.mxu0 0.0
    %818 = vmatpush2.xpose.msra.mxu0 0.0
    %819 = vmatprep.subr.mxu0 0.0
    %820 = vmatpush2.xpose.msra.mxu0 0.0
    %821 = vmatprep.subr.mxu0 0.0
    %822 = vmatpush2.xpose.msra.mxu0 0.0
    %823 = vmatprep.subr.mxu0 0.0
    %824 = vmatpush2.xpose.msra.mxu0 0.0
    %825 = vmatprep.subr.mxu0 0.0
    %826 = vmatpush2.xpose.msra.mxu0 0.0
    %827 = vmatprep.subr.mxu0 0.0
    %828 = vmatpush2.xpose.msra.mxu0 0.0
    %829 = vmatprep.mubr.f32.mxu0 0.0
    %830 = vmatmul.mubr.f32.gmra.mxu0 %v757
    %v831 = vpop.f32.mrf.mxu0
    %v832 = vadd.f32 0.0, %v831
    %v833 = vpop.f32.mrf.mxu0
    %834 = vmatprep.mubr.f32.mxu0 0.0
    %835 = vmatmul.mubr.f32.gmra.mxu0 %v759
    %v836 = vpop.f32.mrf.mxu0
    %v837 = vadd.f32 0.0, %v836
    %v838 = vpop.f32.mrf.mxu0
    %839 = vdwg.mxu0
    %v840 = vsel %vm439, %v741, -inf
    %841 = vmax.xlane.f32.xlu0 %v840
    %v842 = vpop.xlane.xlu0 %841
    %v843 = vsel %vm439, %v746, -inf
    %844 = vmax.xlane.f32.xlu0 %v843
    %v845 = vpop.xlane.xlu0 %844
    %v846 = vsel %vm439, %v832, -inf
    %847 = vmax.xlane.f32.xlu0 %v846
    %v848 = vpop.xlane.xlu0 %847
    %v849 = vsel %vm439, %v837, -inf
    %850 = vmax.xlane.f32.xlu0 %v849
    %v851 = vpop.xlane.xlu0 %850
    %v852 = vsub.f32 %v741, %v842
    %v853 = vsub.f32 %v746, %v845
    %v854 = vsub.f32 %v832, %v848
    %v855 = vsub.f32 %v837, %v851
    %v856 = vmul.f32 %v852, 1.442695
    %v857 = vpow.pop %v856
    %v858 = vmul.f32 %v853, 1.442695
    %v859 = vpow.pop %v858
    %v860 = vmul.f32 %v854, 1.442695
    %v861 = vpow.pop %v860
    %v862 = vmul.f32 %v855, 1.442695
    %v863 = vpow.pop %v862
    %v864 = vsel %vm439, %v857, 0.0
    %865 = vadd.xlane.f32.xlu0 %v864
    %v866 = vpop.xlane.xlu0 %865
    %v867 = vsel %vm439, %v859, 0.0
    %868 = vadd.xlane.f32.xlu0 %v867
    %v869 = vpop.xlane.xlu0 %868
    %v870 = vsel %vm439, %v861, 0.0
    %871 = vadd.xlane.f32.xlu0 %v870
    %v872 = vpop.xlane.xlu0 %871
    %v873 = vsel %vm439, %v863, 0.0
    %874 = vadd.xlane.f32.xlu0 %v873
    %v875 = vpop.xlane.xlu0 %874
    %v876 = vrcp.pop %v866
    %v877 = vrcp.pop %v869
    %v878 = vrcp.pop %v872
    %v879 = vrcp.pop %v875
    %v880 = vmul.f32 %v857, %v876
    %v881 = vmul.f32 %v859, %v877
    %v882 = vmul.f32 %v861, %v878
    %v883 = vmul.f32 %v863, %v879
    %884 = vrot.lane.b32.xlu0 %v242, 56
    %v885 = vpop.permute.xlu0 %884
    %886 = vrot.lane.b32.xlu0 %v247, 56
    %v887 = vpop.permute.xlu0 %886
    %v891 = vsel %vm439, %v880, 0
    %v894 = vsel %vm439, %v881, 0
    %896 = vmatprep.subr.mxu0 0.0
    %897 = vmatpush1.msra.mxu0 0.0
    %898 = vmatprep.subr.mxu0 0.0
    %899 = vmatpush1.msra.mxu0 0.0
    %900 = vmatprep.subr.mxu0 0.0
    %901 = vmatpush1.msra.mxu0 0.0
    %902 = vmatprep.subr.mxu0 0.0
    %903 = vmatpush1.msra.mxu0 0.0
    %904 = vmatprep.subr.mxu0 0.0
    %905 = vmatpush1.msra.mxu0 0.0
    %906 = vmatprep.subr.mxu0 0.0
    %907 = vmatpush1.msra.mxu0 0.0
    %908 = vmatprep.subr.mxu0 0.0
    %909 = vmatpush1.msra.mxu0 0.0
    %910 = vmatprep.subr.mxu0 0.0
    %911 = vmatpush1.msra.mxu0 0.0
    %912 = vmatprep.subr.mxu0 0.0
    %913 = vmatpush1.msra.mxu0 0.0
    %914 = vmatprep.subr.mxu0 0.0
    %915 = vmatpush1.msra.mxu0 0.0
    %916 = vmatprep.subr.mxu0 0.0
    %917 = vmatpush1.msra.mxu0 0.0
    %918 = vmatprep.subr.mxu0 0.0
    %919 = vmatpush1.msra.mxu0 0.0
    %920 = vmatprep.subr.mxu0 0.0
    %921 = vmatpush1.msra.mxu0 0.0
    %922 = vmatprep.subr.mxu0 0.0
    %923 = vmatpush1.msra.mxu0 0.0
    %924 = vmatprep.subr.mxu0 0.0
    %925 = vmatpush1.msra.mxu0 %v887
    %926 = vmatprep.subr.mxu0 0.0
    %927 = vmatpush1.msra.mxu0 %v885
    %928 = vmatprep.subr.mxu0 0.0
    %929 = vmatpush2.msra.mxu0 0.0
    %930 = vmatprep.subr.mxu0 0.0
    %931 = vmatpush2.msra.mxu0 0.0
    %932 = vmatprep.subr.mxu0 0.0
    %933 = vmatpush2.msra.mxu0 0.0
    %934 = vmatprep.subr.mxu0 0.0
    %935 = vmatpush2.msra.mxu0 0.0
    %936 = vmatprep.subr.mxu0 0.0
    %937 = vmatpush2.msra.mxu0 0.0
    %938 = vmatprep.subr.mxu0 0.0
    %939 = vmatpush2.msra.mxu0 0.0
    %940 = vmatprep.subr.mxu0 0.0
    %941 = vmatpush2.msra.mxu0 0.0
    %942 = vmatprep.subr.mxu0 0.0
    %943 = vmatpush2.msra.mxu0 0.0
    %944 = vmatprep.subr.mxu0 0.0
    %945 = vmatpush2.msra.mxu0 0.0
    %946 = vmatprep.subr.mxu0 0.0
    %947 = vmatpush2.msra.mxu0 0.0
    %948 = vmatprep.subr.mxu0 0.0
    %949 = vmatpush2.msra.mxu0 0.0
    %950 = vmatprep.subr.mxu0 0.0
    %951 = vmatpush2.msra.mxu0 0.0
    %952 = vmatprep.subr.mxu0 0.0
    %953 = vmatpush2.msra.mxu0 0.0
    %954 = vmatprep.subr.mxu0 0.0
    %955 = vmatpush2.msra.mxu0 0.0
    %956 = vmatprep.subr.mxu0 0.0
    %957 = vmatpush2.msra.mxu0 0.0
    %958 = vmatprep.subr.mxu0 0.0
    %959 = vmatpush2.msra.mxu0 0.0
    %960 = vmatprep.mubr.f32.mxu0 0.0
    %961 = vmatmul.mubr.f32.gmra.mxu0 %v891
    %v962 = vpop.f32.mrf.mxu0
    %v963 = vadd.f32 0.0, %v962
    %v964 = vpop.f32.mrf.mxu0
    %965 = vmatprep.mubr.f32.mxu0 0.0
    %966 = vmatmul.mubr.f32.gmra.mxu0 %v894
    %v967 = vpop.f32.mrf.mxu0
    %v968 = vadd.f32 0.0, %v967
    %v969 = vpop.f32.mrf.mxu0
    %970 = vdwg.mxu0
    %971 = vrot.lane.b32.xlu0 %v252, 56
    %v972 = vpop.permute.xlu0 %971
    %973 = vrot.lane.b32.xlu0 %v257, 56
    %v974 = vpop.permute.xlu0 %973
    %v978 = vsel %vm439, %v882, 0
    %v981 = vsel %vm439, %v883, 0
    %983 = vmatprep.subr.mxu0 0.0
    %984 = vmatpush1.msra.mxu0 0.0
    %985 = vmatprep.subr.mxu0 0.0
    %986 = vmatpush1.msra.mxu0 0.0
    %987 = vmatprep.subr.mxu0 0.0
    %988 = vmatpush1.msra.mxu0 0.0
    %989 = vmatprep.subr.mxu0 0.0
    %990 = vmatpush1.msra.mxu0 0.0
    %991 = vmatprep.subr.mxu0 0.0
    %992 = vmatpush1.msra.mxu0 0.0
    %993 = vmatprep.subr.mxu0 0.0
    %994 = vmatpush1.msra.mxu0 0.0
    %995 = vmatprep.subr.mxu0 0.0
    %996 = vmatpush1.msra.mxu0 0.0
    %997 = vmatprep.subr.mxu0 0.0
    %998 = vmatpush1.msra.mxu0 0.0
    %999 = vmatprep.subr.mxu0 0.0
    %1000 = vmatpush1.msra.mxu0 0.0
    %1001 = vmatprep.subr.mxu0 0.0
    %1002 = vmatpush1.msra.mxu0 0.0
    %1003 = vmatprep.subr.mxu0 0.0
    %1004 = vmatpush1.msra.mxu0 0.0
    %1005 = vmatprep.subr.mxu0 0.0
    %1006 = vmatpush1.msra.mxu0 0.0
    %1007 = vmatprep.subr.mxu0 0.0
    %1008 = vmatpush1.msra.mxu0 0.0
    %1009 = vmatprep.subr.mxu0 0.0
    %1010 = vmatpush1.msra.mxu0 0.0
    %1011 = vmatprep.subr.mxu0 0.0
    %1012 = vmatpush1.msra.mxu0 %v974
    %1013 = vmatprep.subr.mxu0 0.0
    %1014 = vmatpush1.msra.mxu0 %v972
    %1015 = vmatprep.subr.mxu0 0.0
    %1016 = vmatpush2.msra.mxu0 0.0
    %1017 = vmatprep.subr.mxu0 0.0
    %1018 = vmatpush2.msra.mxu0 0.0
    %1019 = vmatprep.subr.mxu0 0.0
    %1020 = vmatpush2.msra.mxu0 0.0
    %1021 = vmatprep.subr.mxu0 0.0
    %1022 = vmatpush2.msra.mxu0 0.0
    %1023 = vmatprep.subr.mxu0 0.0
    %1024 = vmatpush2.msra.mxu0 0.0
    %1025 = vmatprep.subr.mxu0 0.0
    %1026 = vmatpush2.msra.mxu0 0.0
    %1027 = vmatprep.subr.mxu0 0.0
    %1028 = vmatpush2.msra.mxu0 0.0
    %1029 = vmatprep.subr.mxu0 0.0
    %1030 = vmatpush2.msra.mxu0 0.0
    %1031 = vmatprep.subr.mxu0 0.0
    %1032 = vmatpush2.msra.mxu0 0.0
    %1033 = vmatprep.subr.mxu0 0.0
    %1034 = vmatpush2.msra.mxu0 0.0
    %1035 = vmatprep.subr.mxu0 0.0
    %1036 = vmatpush2.msra.mxu0 0.0
    %1037 = vmatprep.subr.mxu0 0.0
    %1038 = vmatpush2.msra.mxu0 0.0
    %1039 = vmatprep.subr.mxu0 0.0
    %1040 = vmatpush2.msra.mxu0 0.0
    %1041 = vmatprep.subr.mxu0 0.0
    %1042 = vmatpush2.msra.mxu0 0.0
    %1043 = vmatprep.subr.mxu0 0.0
    %1044 = vmatpush2.msra.mxu0 0.0
    %1045 = vmatprep.subr.mxu0 0.0
    %1046 = vmatpush2.msra.mxu0 0.0
    %1047 = vmatprep.mubr.f32.mxu0 0.0
    %1048 = vmatmul.mubr.f32.gmra.mxu0 %v978
    %v1049 = vpop.f32.mrf.mxu0
    %v1050 = vadd.f32 0.0, %v1049
    %v1051 = vpop.f32.mrf.mxu0
    %1052 = vmatprep.mubr.f32.mxu0 0.0
    %1053 = vmatmul.mubr.f32.gmra.mxu0 %v981
    %v1054 = vpop.f32.mrf.mxu0
    %v1055 = vadd.f32 0.0, %v1054
    %v1056 = vpop.f32.mrf.mxu0
    %1057 = vdwg.mxu0
    %v1059 = vsel %vm266, %v963, 0
    %v1062 = vsel %vm266, %v968, 0
    %v1065 = vsel %vm266, %v1050, 0
    %v1068 = vsel %vm266, %v1055, 0
    %1070 = vmatprep.subr.mxu0 0.0
    %1071 = vmatpush1.msra.mxu0 0.0
    %1072 = vmatprep.subr.mxu0 0.0
    %1073 = vmatpush1.msra.mxu0 0.0
    %1074 = vmatprep.subr.mxu0 0.0
    %1075 = vmatpush1.msra.mxu0 0.0
    %1076 = vmatprep.subr.mxu0 0.0
    %1077 = vmatpush1.msra.mxu0 0.0
    %1078 = vmatprep.subr.mxu0 0.0
    %1079 = vmatpush1.msra.mxu0 0.0
    %1080 = vmatprep.subr.mxu0 0.0
    %1081 = vmatpush1.msra.mxu0 0.0
    %1082 = vmatprep.subr.mxu0 0.0
    %1083 = vmatpush1.msra.mxu0 0.0
    %1084 = vmatprep.subr.mxu0 0.0
    %1085 = vmatpush1.msra.mxu0 0.0
    %1086 = vmatprep.subr.mxu0 0.0
    %1087 = vmatpush1.msra.mxu0 0.0
    %1088 = vmatprep.subr.mxu0 0.0
    %1089 = vmatpush1.msra.mxu0 0.0
    %1090 = vmatprep.subr.mxu0 0.0
    %1091 = vmatpush1.msra.mxu0 0.0
    %1092 = vmatprep.subr.mxu0 0.0
    %1093 = vmatpush1.msra.mxu0 0.0
    %1094 = vmatprep.subr.mxu0 0.0
    %1095 = vmatpush1.msra.mxu0 0.0
    %1096 = vmatprep.subr.mxu0 0.0
    %1097 = vmatpush1.msra.mxu0 0.0
    %1098 = vmatprep.subr.mxu0 0.0
    %1099 = vmatpush1.msra.mxu0 0.0
    %1100 = vmatprep.subr.mxu0 0.0
    %1101 = vmatpush1.msra.mxu0 %v151
    %1102 = vmatprep.subr.mxu0 0.0
    %1103 = vmatpush2.msra.mxu0 0.0
    %1104 = vmatprep.subr.mxu0 0.0
    %1105 = vmatpush2.msra.mxu0 0.0
    %1106 = vmatprep.subr.mxu0 0.0
    %1107 = vmatpush2.msra.mxu0 0.0
    %1108 = vmatprep.subr.mxu0 0.0
    %1109 = vmatpush2.msra.mxu0 0.0
    %1110 = vmatprep.subr.mxu0 0.0
    %1111 = vmatpush2.msra.mxu0 0.0
    %1112 = vmatprep.subr.mxu0 0.0
    %1113 = vmatpush2.msra.mxu0 0.0
    %1114 = vmatprep.subr.mxu0 0.0
    %1115 = vmatpush2.msra.mxu0 0.0
    %1116 = vmatprep.subr.mxu0 0.0
    %1117 = vmatpush2.msra.mxu0 0.0
    %1118 = vmatprep.subr.mxu0 0.0
    %1119 = vmatpush2.msra.mxu0 0.0
    %1120 = vmatprep.subr.mxu0 0.0
    %1121 = vmatpush2.msra.mxu0 0.0
    %1122 = vmatprep.subr.mxu0 0.0
    %1123 = vmatpush2.msra.mxu0 0.0
    %1124 = vmatprep.subr.mxu0 0.0
    %1125 = vmatpush2.msra.mxu0 0.0
    %1126 = vmatprep.subr.mxu0 0.0
    %1127 = vmatpush2.msra.mxu0 0.0
    %1128 = vmatprep.subr.mxu0 0.0
    %1129 = vmatpush2.msra.mxu0 0.0
    %1130 = vmatprep.subr.mxu0 0.0
    %1131 = vmatpush2.msra.mxu0 0.0
    %1132 = vmatprep.subr.mxu0 0.0
    %1133 = vmatpush2.msra.mxu0 0.0
    %1134 = vmatprep.mubr.f32.mxu0 0.0
    %1135 = vmatmul.mubr.f32.gmra.mxu0 %v1059
    %v1136 = vpop.f32.mrf.mxu0
    %v1137 = vadd.f32 0.0, %v1136
    %v1138 = vpop.f32.mrf.mxu0
    %1139 = vmatprep.mubr.f32.mxu0 0.0
    %1140 = vmatmul.mubr.f32.gmra.mxu0 %v1062
    %v1141 = vpop.f32.mrf.mxu0
    %v1142 = vadd.f32 0.0, %v1141
    %v1143 = vpop.f32.mrf.mxu0
    %1144 = vmatprep.mubr.f32.mxu0 0.0
    %1145 = vmatmul.mubr.f32.gmra.mxu0 %v1065
    %v1146 = vpop.f32.mrf.mxu0
    %v1147 = vadd.f32 0.0, %v1146
    %v1148 = vpop.f32.mrf.mxu0
    %1149 = vmatprep.mubr.f32.mxu0 0.0
    %1150 = vmatmul.mubr.f32.gmra.mxu0 %v1068
    %v1151 = vpop.f32.mrf.mxu0
    %v1152 = vadd.f32 0.0, %v1151
    %v1153 = vpop.f32.mrf.mxu0
    %1154 = vdwg.mxu0
    %v1156 = vsel %vm266, %v563, 0
    %v1159 = vsel %vm266, %v568, 0
    %v1162 = vsel %vm266, %v650, 0
    %v1165 = vsel %vm266, %v655, 0
    %1167 = vmatprep.subr.mxu0 0.0
    %1168 = vmatpush1.msra.mxu0 0.0
    %1169 = vmatprep.subr.mxu0 0.0
    %1170 = vmatpush1.msra.mxu0 0.0
    %1171 = vmatprep.subr.mxu0 0.0
    %1172 = vmatpush1.msra.mxu0 0.0
    %1173 = vmatprep.subr.mxu0 0.0
    %1174 = vmatpush1.msra.mxu0 0.0
    %1175 = vmatprep.subr.mxu0 0.0
    %1176 = vmatpush1.msra.mxu0 0.0
    %1177 = vmatprep.subr.mxu0 0.0
    %1178 = vmatpush1.msra.mxu0 0.0
    %1179 = vmatprep.subr.mxu0 0.0
    %1180 = vmatpush1.msra.mxu0 0.0
    %1181 = vmatprep.subr.mxu0 0.0
    %1182 = vmatpush1.msra.mxu0 0.0
    %1183 = vmatprep.subr.mxu0 0.0
    %1184 = vmatpush1.msra.mxu0 0.0
    %1185 = vmatprep.subr.mxu0 0.0
    %1186 = vmatpush1.msra.mxu0 0.0
    %1187 = vmatprep.subr.mxu0 0.0
    %1188 = vmatpush1.msra.mxu0 0.0
    %1189 = vmatprep.subr.mxu0 0.0
    %1190 = vmatpush1.msra.mxu0 0.0
    %1191 = vmatprep.subr.mxu0 0.0
    %1192 = vmatpush1.msra.mxu0 0.0
    %1193 = vmatprep.subr.mxu0 0.0
    %1194 = vmatpush1.msra.mxu0 0.0
    %1195 = vmatprep.subr.mxu0 0.0
    %1196 = vmatpush1.msra.mxu0 0.0
    %1197 = vmatprep.subr.mxu0 0.0
    %1198 = vmatpush1.msra.mxu0 %v150
    %1199 = vmatprep.subr.mxu0 0.0
    %1200 = vmatpush2.msra.mxu0 0.0
    %1201 = vmatprep.subr.mxu0 0.0
    %1202 = vmatpush2.msra.mxu0 0.0
    %1203 = vmatprep.subr.mxu0 0.0
    %1204 = vmatpush2.msra.mxu0 0.0
    %1205 = vmatprep.subr.mxu0 0.0
    %1206 = vmatpush2.msra.mxu0 0.0
    %1207 = vmatprep.subr.mxu0 0.0
    %1208 = vmatpush2.msra.mxu0 0.0
    %1209 = vmatprep.subr.mxu0 0.0
    %1210 = vmatpush2.msra.mxu0 0.0
    %1211 = vmatprep.subr.mxu0 0.0
    %1212 = vmatpush2.msra.mxu0 0.0
    %1213 = vmatprep.subr.mxu0 0.0
    %1214 = vmatpush2.msra.mxu0 0.0
    %1215 = vmatprep.subr.mxu0 0.0
    %1216 = vmatpush2.msra.mxu0 0.0
    %1217 = vmatprep.subr.mxu0 0.0
    %1218 = vmatpush2.msra.mxu0 0.0
    %1219 = vmatprep.subr.mxu0 0.0
    %1220 = vmatpush2.msra.mxu0 0.0
    %1221 = vmatprep.subr.mxu0 0.0
    %1222 = vmatpush2.msra.mxu0 0.0
    %1223 = vmatprep.subr.mxu0 0.0
    %1224 = vmatpush2.msra.mxu0 0.0
    %1225 = vmatprep.subr.mxu0 0.0
    %1226 = vmatpush2.msra.mxu0 0.0
    %1227 = vmatprep.subr.mxu0 0.0
    %1228 = vmatpush2.msra.mxu0 0.0
    %1229 = vmatprep.subr.mxu0 0.0
    %1230 = vmatpush2.msra.mxu0 0.0
    %1231 = vmatprep.mubr.f32.mxu0 0.0
    %1232 = vmatmul.mubr.f32.gmra.mxu0 %v1156
    %v1233 = vpop.f32.mrf.mxu0
    %v1234 = vadd.f32 %v1137, %v1233
    %v1235 = vpop.f32.mrf.mxu0
    %1236 = vmatprep.mubr.f32.mxu0 0.0
    %1237 = vmatmul.mubr.f32.gmra.mxu0 %v1159
    %v1238 = vpop.f32.mrf.mxu0
    %v1239 = vadd.f32 %v1142, %v1238
    %v1240 = vpop.f32.mrf.mxu0
    %1241 = vmatprep.mubr.f32.mxu0 0.0
    %1242 = vmatmul.mubr.f32.gmra.mxu0 %v1162
    %v1243 = vpop.f32.mrf.mxu0
    %v1244 = vadd.f32 %v1147, %v1243
    %v1245 = vpop.f32.mrf.mxu0
    %1246 = vmatprep.mubr.f32.mxu0 0.0
    %1247 = vmatmul.mubr.f32.gmra.mxu0 %v1165
    %v1248 = vpop.f32.mrf.mxu0
    %v1249 = vadd.f32 %v1152, %v1248
    %v1250 = vpop.f32.mrf.mxu0
    %1251 = vdwg.mxu0
    %1252 = vrot.lane.b32.xlu0 %v242, 112
    %v1253 = vpop.permute.xlu0 %1252
    %1254 = vrot.lane.b32.xlu0 %v247, 112
    %v1255 = vpop.permute.xlu0 %1254
    %1256 = vrot.lane.b32.xlu0 %v242, 80
    %v1257 = vpop.permute.xlu0 %1256
    %1258 = vrot.lane.b32.xlu0 %v247, 80
    %v1259 = vpop.permute.xlu0 %1258
    %v1260 = vsel %vm266, %v1253, 0
    %v1262 = vsel %vm266, %v1255, 0
    %v1264 = vsel %vm266, %v1257, 0
    %v1266 = vsel %vm266, %v1259, 0
    %1268 = vmatprep.subr.mxu0 0.0
    %1269 = vmatpush1.xpose.msra.mxu0 0.0
    %1270 = vmatprep.subr.mxu0 0.0
    %1271 = vmatpush1.xpose.msra.mxu0 0.0
    %1272 = vmatprep.subr.mxu0 0.0
    %1273 = vmatpush1.xpose.msra.mxu0 0.0
    %1274 = vmatprep.subr.mxu0 0.0
    %1275 = vmatpush1.xpose.msra.mxu0 0.0
    %1276 = vmatprep.subr.mxu0 0.0
    %1277 = vmatpush1.xpose.msra.mxu0 0.0
    %1278 = vmatprep.subr.mxu0 0.0
    %1279 = vmatpush1.xpose.msra.mxu0 0.0
    %1280 = vmatprep.subr.mxu0 0.0
    %1281 = vmatpush1.xpose.msra.mxu0 0.0
    %1282 = vmatprep.subr.mxu0 0.0
    %1283 = vmatpush1.xpose.msra.mxu0 0.0
    %1284 = vmatprep.subr.mxu0 0.0
    %1285 = vmatpush1.xpose.msra.mxu0 0.0
    %1286 = vmatprep.subr.mxu0 0.0
    %1287 = vmatpush1.xpose.msra.mxu0 0.0
    %1288 = vmatprep.subr.mxu0 0.0
    %1289 = vmatpush1.xpose.msra.mxu0 0.0
    %1290 = vmatprep.subr.mxu0 0.0
    %1291 = vmatpush1.xpose.msra.mxu0 0.0
    %1292 = vmatprep.subr.mxu0 0.0
    %1293 = vmatpush1.xpose.msra.mxu0 0.0
    %1294 = vmatprep.subr.mxu0 0.0
    %1295 = vmatpush1.xpose.msra.mxu0 0.0
    %1296 = vmatprep.subr.mxu0 0.0
    %1297 = vmatpush1.xpose.msra.mxu0 %v1266
    %1298 = vmatprep.subr.mxu0 0.0
    %1299 = vmatpush1.xpose.msra.mxu0 %v1264
    %1300 = vmatprep.subr.mxu0 0.0
    %1301 = vmatpush2.xpose.msra.mxu0 0.0
    %1302 = vmatprep.subr.mxu0 0.0
    %1303 = vmatpush2.xpose.msra.mxu0 0.0
    %1304 = vmatprep.subr.mxu0 0.0
    %1305 = vmatpush2.xpose.msra.mxu0 0.0
    %1306 = vmatprep.subr.mxu0 0.0
    %1307 = vmatpush2.xpose.msra.mxu0 0.0
    %1308 = vmatprep.subr.mxu0 0.0
    %1309 = vmatpush2.xpose.msra.mxu0 0.0
    %1310 = vmatprep.subr.mxu0 0.0
    %1311 = vmatpush2.xpose.msra.mxu0 0.0
    %1312 = vmatprep.subr.mxu0 0.0
    %1313 = vmatpush2.xpose.msra.mxu0 0.0
    %1314 = vmatprep.subr.mxu0 0.0
    %1315 = vmatpush2.xpose.msra.mxu0 0.0
    %1316 = vmatprep.subr.mxu0 0.0
    %1317 = vmatpush2.xpose.msra.mxu0 0.0
    %1318 = vmatprep.subr.mxu0 0.0
    %1319 = vmatpush2.xpose.msra.mxu0 0.0
    %1320 = vmatprep.subr.mxu0 0.0
    %1321 = vmatpush2.xpose.msra.mxu0 0.0
    %1322 = vmatprep.subr.mxu0 0.0
    %1323 = vmatpush2.xpose.msra.mxu0 0.0
    %1324 = vmatprep.subr.mxu0 0.0
    %1325 = vmatpush2.xpose.msra.mxu0 0.0
    %1326 = vmatprep.subr.mxu0 0.0
    %1327 = vmatpush2.xpose.msra.mxu0 0.0
    %1328 = vmatprep.subr.mxu0 0.0
    %1329 = vmatpush2.xpose.msra.mxu0 0.0
    %1330 = vmatprep.subr.mxu0 0.0
    %1331 = vmatpush2.xpose.msra.mxu0 0.0
    %1332 = vmatprep.mubr.f32.mxu0 0.0
    %1333 = vmatmul.mubr.f32.gmra.mxu0 %v1260
    %v1334 = vpop.f32.mrf.mxu0
    %v1335 = vadd.f32 0.0, %v1334
    %v1336 = vpop.f32.mrf.mxu0
    %1337 = vmatprep.mubr.f32.mxu0 0.0
    %1338 = vmatmul.mubr.f32.gmra.mxu0 %v1262
    %v1339 = vpop.f32.mrf.mxu0
    %v1340 = vadd.f32 0.0, %v1339
    %v1341 = vpop.f32.mrf.mxu0
    %1342 = vdwg.mxu0
    %1343 = vrot.lane.b32.xlu0 %v252, 112
    %v1344 = vpop.permute.xlu0 %1343
    %1345 = vrot.lane.b32.xlu0 %v257, 112
    %v1346 = vpop.permute.xlu0 %1345
    %1347 = vrot.lane.b32.xlu0 %v252, 80
    %v1348 = vpop.permute.xlu0 %1347
    %1349 = vrot.lane.b32.xlu0 %v257, 80
    %v1350 = vpop.permute.xlu0 %1349
    %v1351 = vsel %vm266, %v1344, 0
    %v1353 = vsel %vm266, %v1346, 0
    %v1355 = vsel %vm266, %v1348, 0
    %v1357 = vsel %vm266, %v1350, 0
    %1359 = vmatprep.subr.mxu0 0.0
    %1360 = vmatpush1.xpose.msra.mxu0 0.0
    %1361 = vmatprep.subr.mxu0 0.0
    %1362 = vmatpush1.xpose.msra.mxu0 0.0
    %1363 = vmatprep.subr.mxu0 0.0
    %1364 = vmatpush1.xpose.msra.mxu0 0.0
    %1365 = vmatprep.subr.mxu0 0.0
    %1366 = vmatpush1.xpose.msra.mxu0 0.0
    %1367 = vmatprep.subr.mxu0 0.0
    %1368 = vmatpush1.xpose.msra.mxu0 0.0
    %1369 = vmatprep.subr.mxu0 0.0
    %1370 = vmatpush1.xpose.msra.mxu0 0.0
    %1371 = vmatprep.subr.mxu0 0.0
    %1372 = vmatpush1.xpose.msra.mxu0 0.0
    %1373 = vmatprep.subr.mxu0 0.0
    %1374 = vmatpush1.xpose.msra.mxu0 0.0
    %1375 = vmatprep.subr.mxu0 0.0
    %1376 = vmatpush1.xpose.msra.mxu0 0.0
    %1377 = vmatprep.subr.mxu0 0.0
    %1378 = vmatpush1.xpose.msra.mxu0 0.0
    %1379 = vmatprep.subr.mxu0 0.0
    %1380 = vmatpush1.xpose.msra.mxu0 0.0
    %1381 = vmatprep.subr.mxu0 0.0
    %1382 = vmatpush1.xpose.msra.mxu0 0.0
    %1383 = vmatprep.subr.mxu0 0.0
    %1384 = vmatpush1.xpose.msra.mxu0 0.0
    %1385 = vmatprep.subr.mxu0 0.0
    %1386 = vmatpush1.xpose.msra.mxu0 0.0
    %1387 = vmatprep.subr.mxu0 0.0
    %1388 = vmatpush1.xpose.msra.mxu0 %v1357
    %1389 = vmatprep.subr.mxu0 0.0
    %1390 = vmatpush1.xpose.msra.mxu0 %v1355
    %1391 = vmatprep.subr.mxu0 0.0
    %1392 = vmatpush2.xpose.msra.mxu0 0.0
    %1393 = vmatprep.subr.mxu0 0.0
    %1394 = vmatpush2.xpose.msra.mxu0 0.0
    %1395 = vmatprep.subr.mxu0 0.0
    %1396 = vmatpush2.xpose.msra.mxu0 0.0
    %1397 = vmatprep.subr.mxu0 0.0
    %1398 = vmatpush2.xpose.msra.mxu0 0.0
    %1399 = vmatprep.subr.mxu0 0.0
    %1400 = vmatpush2.xpose.msra.mxu0 0.0
    %1401 = vmatprep.subr.mxu0 0.0
    %1402 = vmatpush2.xpose.msra.mxu0 0.0
    %1403 = vmatprep.subr.mxu0 0.0
    %1404 = vmatpush2.xpose.msra.mxu0 0.0
    %1405 = vmatprep.subr.mxu0 0.0
    %1406 = vmatpush2.xpose.msra.mxu0 0.0
    %1407 = vmatprep.subr.mxu0 0.0
    %1408 = vmatpush2.xpose.msra.mxu0 0.0
    %1409 = vmatprep.subr.mxu0 0.0
    %1410 = vmatpush2.xpose.msra.mxu0 0.0
    %1411 = vmatprep.subr.mxu0 0.0
    %1412 = vmatpush2.xpose.msra.mxu0 0.0
    %1413 = vmatprep.subr.mxu0 0.0
    %1414 = vmatpush2.xpose.msra.mxu0 0.0
    %1415 = vmatprep.subr.mxu0 0.0
    %1416 = vmatpush2.xpose.msra.mxu0 0.0
    %1417 = vmatprep.subr.mxu0 0.0
    %1418 = vmatpush2.xpose.msra.mxu0 0.0
    %1419 = vmatprep.subr.mxu0 0.0
    %1420 = vmatpush2.xpose.msra.mxu0 0.0
    %1421 = vmatprep.subr.mxu0 0.0
    %1422 = vmatpush2.xpose.msra.mxu0 0.0
    %1423 = vmatprep.mubr.f32.mxu0 0.0
    %1424 = vmatmul.mubr.f32.gmra.mxu0 %v1351
    %v1425 = vpop.f32.mrf.mxu0
    %v1426 = vadd.f32 0.0, %v1425
    %v1427 = vpop.f32.mrf.mxu0
    %1428 = vmatprep.mubr.f32.mxu0 0.0
    %1429 = vmatmul.mubr.f32.gmra.mxu0 %v1353
    %v1430 = vpop.f32.mrf.mxu0
    %v1431 = vadd.f32 0.0, %v1430
    %v1432 = vpop.f32.mrf.mxu0
    %1433 = vdwg.mxu0
    %v1434 = vsel %vm439, %v1335, -inf
    %1435 = vmax.xlane.f32.xlu0 %v1434
    %v1436 = vpop.xlane.xlu0 %1435
    %v1437 = vsel %vm439, %v1340, -inf
    %1438 = vmax.xlane.f32.xlu0 %v1437
    %v1439 = vpop.xlane.xlu0 %1438
    %v1440 = vsel %vm439, %v1426, -inf
    %1441 = vmax.xlane.f32.xlu0 %v1440
    %v1442 = vpop.xlane.xlu0 %1441
    %v1443 = vsel %vm439, %v1431, -inf
    %1444 = vmax.xlane.f32.xlu0 %v1443
    %v1445 = vpop.xlane.xlu0 %1444
    %v1446 = vsub.f32 %v1335, %v1436
    %v1447 = vsub.f32 %v1340, %v1439
    %v1448 = vsub.f32 %v1426, %v1442
    %v1449 = vsub.f32 %v1431, %v1445
    %v1450 = vmul.f32 %v1446, 1.442695
    %v1451 = vpow.pop %v1450
    %v1452 = vmul.f32 %v1447, 1.442695
    %v1453 = vpow.pop %v1452
    %v1454 = vmul.f32 %v1448, 1.442695
    %v1455 = vpow.pop %v1454
    %v1456 = vmul.f32 %v1449, 1.442695
    %v1457 = vpow.pop %v1456
    %v1458 = vsel %vm439, %v1451, 0.0
    %1459 = vadd.xlane.f32.xlu0 %v1458
    %v1460 = vpop.xlane.xlu0 %1459
    %v1461 = vsel %vm439, %v1453, 0.0
    %1462 = vadd.xlane.f32.xlu0 %v1461
    %v1463 = vpop.xlane.xlu0 %1462
    %v1464 = vsel %vm439, %v1455, 0.0
    %1465 = vadd.xlane.f32.xlu0 %v1464
    %v1466 = vpop.xlane.xlu0 %1465
    %v1467 = vsel %vm439, %v1457, 0.0
    %1468 = vadd.xlane.f32.xlu0 %v1467
    %v1469 = vpop.xlane.xlu0 %1468
    %v1470 = vrcp.pop %v1460
    %v1471 = vrcp.pop %v1463
    %v1472 = vrcp.pop %v1466
    %v1473 = vrcp.pop %v1469
    %v1474 = vmul.f32 %v1451, %v1470
    %v1475 = vmul.f32 %v1453, %v1471
    %v1476 = vmul.f32 %v1455, %v1472
    %v1477 = vmul.f32 %v1457, %v1473
    %1478 = vrot.lane.b32.xlu0 %v242, 48
    %v1479 = vpop.permute.xlu0 %1478
    %1480 = vrot.lane.b32.xlu0 %v247, 48
    %v1481 = vpop.permute.xlu0 %1480
    %v1485 = vsel %vm439, %v1474, 0
    %v1488 = vsel %vm439, %v1475, 0
    %1490 = vmatprep.subr.mxu0 0.0
    %1491 = vmatpush1.msra.mxu0 0.0
    %1492 = vmatprep.subr.mxu0 0.0
    %1493 = vmatpush1.msra.mxu0 0.0
    %1494 = vmatprep.subr.mxu0 0.0
    %1495 = vmatpush1.msra.mxu0 0.0
    %1496 = vmatprep.subr.mxu0 0.0
    %1497 = vmatpush1.msra.mxu0 0.0
    %1498 = vmatprep.subr.mxu0 0.0
    %1499 = vmatpush1.msra.mxu0 0.0
    %1500 = vmatprep.subr.mxu0 0.0
    %1501 = vmatpush1.msra.mxu0 0.0
    %1502 = vmatprep.subr.mxu0 0.0
    %1503 = vmatpush1.msra.mxu0 0.0
    %1504 = vmatprep.subr.mxu0 0.0
    %1505 = vmatpush1.msra.mxu0 0.0
    %1506 = vmatprep.subr.mxu0 0.0
    %1507 = vmatpush1.msra.mxu0 0.0
    %1508 = vmatprep.subr.mxu0 0.0
    %1509 = vmatpush1.msra.mxu0 0.0
    %1510 = vmatprep.subr.mxu0 0.0
    %1511 = vmatpush1.msra.mxu0 0.0
    %1512 = vmatprep.subr.mxu0 0.0
    %1513 = vmatpush1.msra.mxu0 0.0
    %1514 = vmatprep.subr.mxu0 0.0
    %1515 = vmatpush1.msra.mxu0 0.0
    %1516 = vmatprep.subr.mxu0 0.0
    %1517 = vmatpush1.msra.mxu0 0.0
    %1518 = vmatprep.subr.mxu0 0.0
    %1519 = vmatpush1.msra.mxu0 %v1481
    %1520 = vmatprep.subr.mxu0 0.0
    %1521 = vmatpush1.msra.mxu0 %v1479
    %1522 = vmatprep.subr.mxu0 0.0
    %1523 = vmatpush2.msra.mxu0 0.0
    %1524 = vmatprep.subr.mxu0 0.0
    %1525 = vmatpush2.msra.mxu0 0.0
    %1526 = vmatprep.subr.mxu0 0.0
    %1527 = vmatpush2.msra.mxu0 0.0
    %1528 = vmatprep.subr.mxu0 0.0
    %1529 = vmatpush2.msra.mxu0 0.0
    %1530 = vmatprep.subr.mxu0 0.0
    %1531 = vmatpush2.msra.mxu0 0.0
    %1532 = vmatprep.subr.mxu0 0.0
    %1533 = vmatpush2.msra.mxu0 0.0
    %1534 = vmatprep.subr.mxu0 0.0
    %1535 = vmatpush2.msra.mxu0 0.0
    %1536 = vmatprep.subr.mxu0 0.0
    %1537 = vmatpush2.msra.mxu0 0.0
    %1538 = vmatprep.subr.mxu0 0.0
    %1539 = vmatpush2.msra.mxu0 0.0
    %1540 = vmatprep.subr.mxu0 0.0
    %1541 = vmatpush2.msra.mxu0 0.0
    %1542 = vmatprep.subr.mxu0 0.0
    %1543 = vmatpush2.msra.mxu0 0.0
    %1544 = vmatprep.subr.mxu0 0.0
    %1545 = vmatpush2.msra.mxu0 0.0
    %1546 = vmatprep.subr.mxu0 0.0
    %1547 = vmatpush2.msra.mxu0 0.0
    %1548 = vmatprep.subr.mxu0 0.0
    %1549 = vmatpush2.msra.mxu0 0.0
    %1550 = vmatprep.subr.mxu0 0.0
    %1551 = vmatpush2.msra.mxu0 0.0
    %1552 = vmatprep.subr.mxu0 0.0
    %1553 = vmatpush2.msra.mxu0 0.0
    %1554 = vmatprep.mubr.f32.mxu0 0.0
    %1555 = vmatmul.mubr.f32.gmra.mxu0 %v1485
    %v1556 = vpop.f32.mrf.mxu0
    %v1557 = vadd.f32 0.0, %v1556
    %v1558 = vpop.f32.mrf.mxu0
    %1559 = vmatprep.mubr.f32.mxu0 0.0
    %1560 = vmatmul.mubr.f32.gmra.mxu0 %v1488
    %v1561 = vpop.f32.mrf.mxu0
    %v1562 = vadd.f32 0.0, %v1561
    %v1563 = vpop.f32.mrf.mxu0
    %1564 = vdwg.mxu0
    %1565 = vrot.lane.b32.xlu0 %v252, 48
    %v1566 = vpop.permute.xlu0 %1565
    %1567 = vrot.lane.b32.xlu0 %v257, 48
    %v1568 = vpop.permute.xlu0 %1567
    %v1572 = vsel %vm439, %v1476, 0
    %v1575 = vsel %vm439, %v1477, 0
    %1577 = vmatprep.subr.mxu0 0.0
    %1578 = vmatpush1.msra.mxu0 0.0
    %1579 = vmatprep.subr.mxu0 0.0
    %1580 = vmatpush1.msra.mxu0 0.0
    %1581 = vmatprep.subr.mxu0 0.0
    %1582 = vmatpush1.msra.mxu0 0.0
    %1583 = vmatprep.subr.mxu0 0.0
    %1584 = vmatpush1.msra.mxu0 0.0
    %1585 = vmatprep.subr.mxu0 0.0
    %1586 = vmatpush1.msra.mxu0 0.0
    %1587 = vmatprep.subr.mxu0 0.0
    %1588 = vmatpush1.msra.mxu0 0.0
    %1589 = vmatprep.subr.mxu0 0.0
    %1590 = vmatpush1.msra.mxu0 0.0
    %1591 = vmatprep.subr.mxu0 0.0
    %1592 = vmatpush1.msra.mxu0 0.0
    %1593 = vmatprep.subr.mxu0 0.0
    %1594 = vmatpush1.msra.mxu0 0.0
    %1595 = vmatprep.subr.mxu0 0.0
    %1596 = vmatpush1.msra.mxu0 0.0
    %1597 = vmatprep.subr.mxu0 0.0
    %1598 = vmatpush1.msra.mxu0 0.0
    %1599 = vmatprep.subr.mxu0 0.0
    %1600 = vmatpush1.msra.mxu0 0.0
    %1601 = vmatprep.subr.mxu0 0.0
    %1602 = vmatpush1.msra.mxu0 0.0
    %1603 = vmatprep.subr.mxu0 0.0
    %1604 = vmatpush1.msra.mxu0 0.0
    %1605 = vmatprep.subr.mxu0 0.0
    %1606 = vmatpush1.msra.mxu0 %v1568
    %1607 = vmatprep.subr.mxu0 0.0
    %1608 = vmatpush1.msra.mxu0 %v1566
    %1609 = vmatprep.subr.mxu0 0.0
    %1610 = vmatpush2.msra.mxu0 0.0
    %1611 = vmatprep.subr.mxu0 0.0
    %1612 = vmatpush2.msra.mxu0 0.0
    %1613 = vmatprep.subr.mxu0 0.0
    %1614 = vmatpush2.msra.mxu0 0.0
    %1615 = vmatprep.subr.mxu0 0.0
    %1616 = vmatpush2.msra.mxu0 0.0
    %1617 = vmatprep.subr.mxu0 0.0
    %1618 = vmatpush2.msra.mxu0 0.0
    %1619 = vmatprep.subr.mxu0 0.0
    %1620 = vmatpush2.msra.mxu0 0.0
    %1621 = vmatprep.subr.mxu0 0.0
    %1622 = vmatpush2.msra.mxu0 0.0
    %1623 = vmatprep.subr.mxu0 0.0
    %1624 = vmatpush2.msra.mxu0 0.0
    %1625 = vmatprep.subr.mxu0 0.0
    %1626 = vmatpush2.msra.mxu0 0.0
    %1627 = vmatprep.subr.mxu0 0.0
    %1628 = vmatpush2.msra.mxu0 0.0
    %1629 = vmatprep.subr.mxu0 0.0
    %1630 = vmatpush2.msra.mxu0 0.0
    %1631 = vmatprep.subr.mxu0 0.0
    %1632 = vmatpush2.msra.mxu0 0.0
    %1633 = vmatprep.subr.mxu0 0.0
    %1634 = vmatpush2.msra.mxu0 0.0
    %1635 = vmatprep.subr.mxu0 0.0
    %1636 = vmatpush2.msra.mxu0 0.0
    %1637 = vmatprep.subr.mxu0 0.0
    %1638 = vmatpush2.msra.mxu0 0.0
    %1639 = vmatprep.subr.mxu0 0.0
    %1640 = vmatpush2.msra.mxu0 0.0
    %1641 = vmatprep.mubr.f32.mxu0 0.0
    %1642 = vmatmul.mubr.f32.gmra.mxu0 %v1572
    %v1643 = vpop.f32.mrf.mxu0
    %v1644 = vadd.f32 0.0, %v1643
    %v1645 = vpop.f32.mrf.mxu0
    %1646 = vmatprep.mubr.f32.mxu0 0.0
    %1647 = vmatmul.mubr.f32.gmra.mxu0 %v1575
    %v1648 = vpop.f32.mrf.mxu0
    %v1649 = vadd.f32 0.0, %v1648
    %v1650 = vpop.f32.mrf.mxu0
    %1651 = vdwg.mxu0
    %v1653 = vsel %vm266, %v1557, 0
    %v1656 = vsel %vm266, %v1562, 0
    %v1659 = vsel %vm266, %v1644, 0
    %v1662 = vsel %vm266, %v1649, 0
    %1664 = vmatprep.subr.mxu0 0.0
    %1665 = vmatpush1.msra.mxu0 0.0
    %1666 = vmatprep.subr.mxu0 0.0
    %1667 = vmatpush1.msra.mxu0 0.0
    %1668 = vmatprep.subr.mxu0 0.0
    %1669 = vmatpush1.msra.mxu0 0.0
    %1670 = vmatprep.subr.mxu0 0.0
    %1671 = vmatpush1.msra.mxu0 0.0
    %1672 = vmatprep.subr.mxu0 0.0
    %1673 = vmatpush1.msra.mxu0 0.0
    %1674 = vmatprep.subr.mxu0 0.0
    %1675 = vmatpush1.msra.mxu0 0.0
    %1676 = vmatprep.subr.mxu0 0.0
    %1677 = vmatpush1.msra.mxu0 0.0
    %1678 = vmatprep.subr.mxu0 0.0
    %1679 = vmatpush1.msra.mxu0 0.0
    %1680 = vmatprep.subr.mxu0 0.0
    %1681 = vmatpush1.msra.mxu0 0.0
    %1682 = vmatprep.subr.mxu0 0.0
    %1683 = vmatpush1.msra.mxu0 0.0
    %1684 = vmatprep.subr.mxu0 0.0
    %1685 = vmatpush1.msra.mxu0 0.0
    %1686 = vmatprep.subr.mxu0 0.0
    %1687 = vmatpush1.msra.mxu0 0.0
    %1688 = vmatprep.subr.mxu0 0.0
    %1689 = vmatpush1.msra.mxu0 0.0
    %1690 = vmatprep.subr.mxu0 0.0
    %1691 = vmatpush1.msra.mxu0 0.0
    %1692 = vmatprep.subr.mxu0 0.0
    %1693 = vmatpush1.msra.mxu0 0.0
    %1694 = vmatprep.subr.mxu0 0.0
    %1695 = vmatpush1.msra.mxu0 %v152
    %1696 = vmatprep.subr.mxu0 0.0
    %1697 = vmatpush2.msra.mxu0 0.0
    %1698 = vmatprep.subr.mxu0 0.0
    %1699 = vmatpush2.msra.mxu0 0.0
    %1700 = vmatprep.subr.mxu0 0.0
    %1701 = vmatpush2.msra.mxu0 0.0
    %1702 = vmatprep.subr.mxu0 0.0
    %1703 = vmatpush2.msra.mxu0 0.0
    %1704 = vmatprep.subr.mxu0 0.0
    %1705 = vmatpush2.msra.mxu0 0.0
    %1706 = vmatprep.subr.mxu0 0.0
    %1707 = vmatpush2.msra.mxu0 0.0
    %1708 = vmatprep.subr.mxu0 0.0
    %1709 = vmatpush2.msra.mxu0 0.0
    %1710 = vmatprep.subr.mxu0 0.0
    %1711 = vmatpush2.msra.mxu0 0.0
    %1712 = vmatprep.subr.mxu0 0.0
    %1713 = vmatpush2.msra.mxu0 0.0
    %1714 = vmatprep.subr.mxu0 0.0
    %1715 = vmatpush2.msra.mxu0 0.0
    %1716 = vmatprep.subr.mxu0 0.0
    %1717 = vmatpush2.msra.mxu0 0.0
    %1718 = vmatprep.subr.mxu0 0.0
    %1719 = vmatpush2.msra.mxu0 0.0
    %1720 = vmatprep.subr.mxu0 0.0
    %1721 = vmatpush2.msra.mxu0 0.0
    %1722 = vmatprep.subr.mxu0 0.0
    %1723 = vmatpush2.msra.mxu0 0.0
    %1724 = vmatprep.subr.mxu0 0.0
    %1725 = vmatpush2.msra.mxu0 0.0
    %1726 = vmatprep.subr.mxu0 0.0
    %1727 = vmatpush2.msra.mxu0 0.0
    %1728 = vmatprep.mubr.f32.mxu0 0.0
    %1729 = vmatmul.mubr.f32.gmra.mxu0 %v1653
    %v1730 = vpop.f32.mrf.mxu0
    %v1731 = vadd.f32 0.0, %v1730
    %v1732 = vpop.f32.mrf.mxu0
    %1733 = vmatprep.mubr.f32.mxu0 0.0
    %1734 = vmatmul.mubr.f32.gmra.mxu0 %v1656
    %v1735 = vpop.f32.mrf.mxu0
    %v1736 = vadd.f32 0.0, %v1735
    %v1737 = vpop.f32.mrf.mxu0
    %1738 = vmatprep.mubr.f32.mxu0 0.0
    %1739 = vmatmul.mubr.f32.gmra.mxu0 %v1659
    %v1740 = vpop.f32.mrf.mxu0
    %v1741 = vadd.f32 0.0, %v1740
    %v1742 = vpop.f32.mrf.mxu0
    %1743 = vmatprep.mubr.f32.mxu0 0.0
    %1744 = vmatmul.mubr.f32.gmra.mxu0 %v1662
    %v1745 = vpop.f32.mrf.mxu0
    %v1746 = vadd.f32 0.0, %v1745
    %v1747 = vpop.f32.mrf.mxu0
    %1748 = vdwg.mxu0
    %v1749 = vadd.f32 %v1234, %v1731
    %v1750 = vadd.f32 %v1239, %v1736
    %v1751 = vadd.f32 %v1244, %v1741
    %v1752 = vadd.f32 %v1249, %v1746
    %1753 = vrot.lane.b32.xlu0 %v242, 104
    %v1754 = vpop.permute.xlu0 %1753
    %1755 = vrot.lane.b32.xlu0 %v247, 104
    %v1756 = vpop.permute.xlu0 %1755
    %1757 = vrot.lane.b32.xlu0 %v242, 72
    %v1758 = vpop.permute.xlu0 %1757
    %1759 = vrot.lane.b32.xlu0 %v247, 72
    %v1760 = vpop.permute.xlu0 %1759
    %v1761 = vsel %vm266, %v1754, 0
    %v1763 = vsel %vm266, %v1756, 0
    %v1765 = vsel %vm266, %v1758, 0
    %v1767 = vsel %vm266, %v1760, 0
    %1769 = vmatprep.subr.mxu0 0.0
    %1770 = vmatpush1.xpose.msra.mxu0 0.0
    %1771 = vmatprep.subr.mxu0 0.0
    %1772 = vmatpush1.xpose.msra.mxu0 0.0
    %1773 = vmatprep.subr.mxu0 0.0
    %1774 = vmatpush1.xpose.msra.mxu0 0.0
    %1775 = vmatprep.subr.mxu0 0.0
    %1776 = vmatpush1.xpose.msra.mxu0 0.0
    %1777 = vmatprep.subr.mxu0 0.0
    %1778 = vmatpush1.xpose.msra.mxu0 0.0
    %1779 = vmatprep.subr.mxu0 0.0
    %1780 = vmatpush1.xpose.msra.mxu0 0.0
    %1781 = vmatprep.subr.mxu0 0.0
    %1782 = vmatpush1.xpose.msra.mxu0 0.0
    %1783 = vmatprep.subr.mxu0 0.0
    %1784 = vmatpush1.xpose.msra.mxu0 0.0
    %1785 = vmatprep.subr.mxu0 0.0
    %1786 = vmatpush1.xpose.msra.mxu0 0.0
    %1787 = vmatprep.subr.mxu0 0.0
    %1788 = vmatpush1.xpose.msra.mxu0 0.0
    %1789 = vmatprep.subr.mxu0 0.0
    %1790 = vmatpush1.xpose.msra.mxu0 0.0
    %1791 = vmatprep.subr.mxu0 0.0
    %1792 = vmatpush1.xpose.msra.mxu0 0.0
    %1793 = vmatprep.subr.mxu0 0.0
    %1794 = vmatpush1.xpose.msra.mxu0 0.0
    %1795 = vmatprep.subr.mxu0 0.0
    %1796 = vmatpush1.xpose.msra.mxu0 0.0
    %1797 = vmatprep.subr.mxu0 0.0
    %1798 = vmatpush1.xpose.msra.mxu0 %v1767
    %1799 = vmatprep.subr.mxu0 0.0
    %1800 = vmatpush1.xpose.msra.mxu0 %v1765
    %1801 = vmatprep.subr.mxu0 0.0
    %1802 = vmatpush2.xpose.msra.mxu0 0.0
    %1803 = vmatprep.subr.mxu0 0.0
    %1804 = vmatpush2.xpose.msra.mxu0 0.0
    %1805 = vmatprep.subr.mxu0 0.0
    %1806 = vmatpush2.xpose.msra.mxu0 0.0
    %1807 = vmatprep.subr.mxu0 0.0
    %1808 = vmatpush2.xpose.msra.mxu0 0.0
    %1809 = vmatprep.subr.mxu0 0.0
    %1810 = vmatpush2.xpose.msra.mxu0 0.0
    %1811 = vmatprep.subr.mxu0 0.0
    %1812 = vmatpush2.xpose.msra.mxu0 0.0
    %1813 = vmatprep.subr.mxu0 0.0
    %1814 = vmatpush2.xpose.msra.mxu0 0.0
    %1815 = vmatprep.subr.mxu0 0.0
    %1816 = vmatpush2.xpose.msra.mxu0 0.0
    %1817 = vmatprep.subr.mxu0 0.0
    %1818 = vmatpush2.xpose.msra.mxu0 0.0
    %1819 = vmatprep.subr.mxu0 0.0
    %1820 = vmatpush2.xpose.msra.mxu0 0.0
    %1821 = vmatprep.subr.mxu0 0.0
    %1822 = vmatpush2.xpose.msra.mxu0 0.0
    %1823 = vmatprep.subr.mxu0 0.0
    %1824 = vmatpush2.xpose.msra.mxu0 0.0
    %1825 = vmatprep.subr.mxu0 0.0
    %1826 = vmatpush2.xpose.msra.mxu0 0.0
    %1827 = vmatprep.subr.mxu0 0.0
    %1828 = vmatpush2.xpose.msra.mxu0 0.0
    %1829 = vmatprep.subr.mxu0 0.0
    %1830 = vmatpush2.xpose.msra.mxu0 0.0
    %1831 = vmatprep.subr.mxu0 0.0
    %1832 = vmatpush2.xpose.msra.mxu0 0.0
    %1833 = vmatprep.mubr.f32.mxu0 0.0
    %1834 = vmatmul.mubr.f32.gmra.mxu0 %v1761
    %v1835 = vpop.f32.mrf.mxu0
    %v1836 = vadd.f32 0.0, %v1835
    %v1837 = vpop.f32.mrf.mxu0
    %1838 = vmatprep.mubr.f32.mxu0 0.0
    %1839 = vmatmul.mubr.f32.gmra.mxu0 %v1763
    %v1840 = vpop.f32.mrf.mxu0
    %v1841 = vadd.f32 0.0, %v1840
    %v1842 = vpop.f32.mrf.mxu0
    %1843 = vdwg.mxu0
    %1844 = vrot.lane.b32.xlu0 %v252, 104
    %v1845 = vpop.permute.xlu0 %1844
    %1846 = vrot.lane.b32.xlu0 %v257, 104
    %v1847 = vpop.permute.xlu0 %1846
    %1848 = vrot.lane.b32.xlu0 %v252, 72
    %v1849 = vpop.permute.xlu0 %1848
    %1850 = vrot.lane.b32.xlu0 %v257, 72
    %v1851 = vpop.permute.xlu0 %1850
    %v1852 = vsel %vm266, %v1845, 0
    %v1854 = vsel %vm266, %v1847, 0
    %v1856 = vsel %vm266, %v1849, 0
    %v1858 = vsel %vm266, %v1851, 0
    %1860 = vmatprep.subr.mxu0 0.0
    %1861 = vmatpush1.xpose.msra.mxu0 0.0
    %1862 = vmatprep.subr.mxu0 0.0
    %1863 = vmatpush1.xpose.msra.mxu0 0.0
    %1864 = vmatprep.subr.mxu0 0.0
    %1865 = vmatpush1.xpose.msra.mxu0 0.0
    %1866 = vmatprep.subr.mxu0 0.0
    %1867 = vmatpush1.xpose.msra.mxu0 0.0
    %1868 = vmatprep.subr.mxu0 0.0
    %1869 = vmatpush1.xpose.msra.mxu0 0.0
    %1870 = vmatprep.subr.mxu0 0.0
    %1871 = vmatpush1.xpose.msra.mxu0 0.0
    %1872 = vmatprep.subr.mxu0 0.0
    %1873 = vmatpush1.xpose.msra.mxu0 0.0
    %1874 = vmatprep.subr.mxu0 0.0
    %1875 = vmatpush1.xpose.msra.mxu0 0.0
    %1876 = vmatprep.subr.mxu0 0.0
    %1877 = vmatpush1.xpose.msra.mxu0 0.0
    %1878 = vmatprep.subr.mxu0 0.0
    %1879 = vmatpush1.xpose.msra.mxu0 0.0
    %1880 = vmatprep.subr.mxu0 0.0
    %1881 = vmatpush1.xpose.msra.mxu0 0.0
    %1882 = vmatprep.subr.mxu0 0.0
    %1883 = vmatpush1.xpose.msra.mxu0 0.0
    %1884 = vmatprep.subr.mxu0 0.0
    %1885 = vmatpush1.xpose.msra.mxu0 0.0
    %1886 = vmatprep.subr.mxu0 0.0
    %1887 = vmatpush1.xpose.msra.mxu0 0.0
    %1888 = vmatprep.subr.mxu0 0.0
    %1889 = vmatpush1.xpose.msra.mxu0 %v1858
    %1890 = vmatprep.subr.mxu0 0.0
    %1891 = vmatpush1.xpose.msra.mxu0 %v1856
    %1892 = vmatprep.subr.mxu0 0.0
    %1893 = vmatpush2.xpose.msra.mxu0 0.0
    %1894 = vmatprep.subr.mxu0 0.0
    %1895 = vmatpush2.xpose.msra.mxu0 0.0
    %1896 = vmatprep.subr.mxu0 0.0
    %1897 = vmatpush2.xpose.msra.mxu0 0.0
    %1898 = vmatprep.subr.mxu0 0.0
    %1899 = vmatpush2.xpose.msra.mxu0 0.0
    %1900 = vmatprep.subr.mxu0 0.0
    %1901 = vmatpush2.xpose.msra.mxu0 0.0
    %1902 = vmatprep.subr.mxu0 0.0
    %1903 = vmatpush2.xpose.msra.mxu0 0.0
    %1904 = vmatprep.subr.mxu0 0.0
    %1905 = vmatpush2.xpose.msra.mxu0 0.0
    %1906 = vmatprep.subr.mxu0 0.0
    %1907 = vmatpush2.xpose.msra.mxu0 0.0
    %1908 = vmatprep.subr.mxu0 0.0
    %1909 = vmatpush2.xpose.msra.mxu0 0.0
    %1910 = vmatprep.subr.mxu0 0.0
    %1911 = vmatpush2.xpose.msra.mxu0 0.0
    %1912 = vmatprep.subr.mxu0 0.0
    %1913 = vmatpush2.xpose.msra.mxu0 0.0
    %1914 = vmatprep.subr.mxu0 0.0
    %1915 = vmatpush2.xpose.msra.mxu0 0.0
    %1916 = vmatprep.subr.mxu0 0.0
    %1917 = vmatpush2.xpose.msra.mxu0 0.0
    %1918 = vmatprep.subr.mxu0 0.0
    %1919 = vmatpush2.xpose.msra.mxu0 0.0
    %1920 = vmatprep.subr.mxu0 0.0
    %1921 = vmatpush2.xpose.msra.mxu0 0.0
    %1922 = vmatprep.subr.mxu0 0.0
    %1923 = vmatpush2.xpose.msra.mxu0 0.0
    %1924 = vmatprep.mubr.f32.mxu0 0.0
    %1925 = vmatmul.mubr.f32.gmra.mxu0 %v1852
    %v1926 = vpop.f32.mrf.mxu0
    %v1927 = vadd.f32 0.0, %v1926
    %v1928 = vpop.f32.mrf.mxu0
    %1929 = vmatprep.mubr.f32.mxu0 0.0
    %1930 = vmatmul.mubr.f32.gmra.mxu0 %v1854
    %v1931 = vpop.f32.mrf.mxu0
    %v1932 = vadd.f32 0.0, %v1931
    %v1933 = vpop.f32.mrf.mxu0
    %1934 = vdwg.mxu0
    %v1935 = vsel %vm439, %v1836, -inf
    %1936 = vmax.xlane.f32.xlu0 %v1935
    %v1937 = vpop.xlane.xlu0 %1936
    %v1938 = vsel %vm439, %v1841, -inf
    %1939 = vmax.xlane.f32.xlu0 %v1938
    %v1940 = vpop.xlane.xlu0 %1939
    %v1941 = vsel %vm439, %v1927, -inf
    %1942 = vmax.xlane.f32.xlu0 %v1941
    %v1943 = vpop.xlane.xlu0 %1942
    %v1944 = vsel %vm439, %v1932, -inf
    %1945 = vmax.xlane.f32.xlu0 %v1944
    %v1946 = vpop.xlane.xlu0 %1945
    %v1947 = vsub.f32 %v1836, %v1937
    %v1948 = vsub.f32 %v1841, %v1940
    %v1949 = vsub.f32 %v1927, %v1943
    %v1950 = vsub.f32 %v1932, %v1946
    %v1951 = vmul.f32 %v1947, 1.442695
    %v1952 = vpow.pop %v1951
    %v1953 = vmul.f32 %v1948, 1.442695
    %v1954 = vpow.pop %v1953
    %v1955 = vmul.f32 %v1949, 1.442695
    %v1956 = vpow.pop %v1955
    %v1957 = vmul.f32 %v1950, 1.442695
    %v1958 = vpow.pop %v1957
    %v1959 = vsel %vm439, %v1952, 0.0
    %1960 = vadd.xlane.f32.xlu0 %v1959
    %v1961 = vpop.xlane.xlu0 %1960
    %v1962 = vsel %vm439, %v1954, 0.0
    %1963 = vadd.xlane.f32.xlu0 %v1962
    %v1964 = vpop.xlane.xlu0 %1963
    %v1965 = vsel %vm439, %v1956, 0.0
    %1966 = vadd.xlane.f32.xlu0 %v1965
    %v1967 = vpop.xlane.xlu0 %1966
    %v1968 = vsel %vm439, %v1958, 0.0
    %1969 = vadd.xlane.f32.xlu0 %v1968
    %v1970 = vpop.xlane.xlu0 %1969
    %v1971 = vrcp.pop %v1961
    %v1972 = vrcp.pop %v1964
    %v1973 = vrcp.pop %v1967
    %v1974 = vrcp.pop %v1970
    %v1975 = vmul.f32 %v1952, %v1971
    %v1976 = vmul.f32 %v1954, %v1972
    %v1977 = vmul.f32 %v1956, %v1973
    %v1978 = vmul.f32 %v1958, %v1974
    %1979 = vrot.lane.b32.xlu0 %v242, 40
    %v1980 = vpop.permute.xlu0 %1979
    %1981 = vrot.lane.b32.xlu0 %v247, 40
    %v1982 = vpop.permute.xlu0 %1981
    %v1986 = vsel %vm439, %v1975, 0
    %v1989 = vsel %vm439, %v1976, 0
    %1991 = vmatprep.subr.mxu0 0.0
    %1992 = vmatpush1.msra.mxu0 0.0
    %1993 = vmatprep.subr.mxu0 0.0
    %1994 = vmatpush1.msra.mxu0 0.0
    %1995 = vmatprep.subr.mxu0 0.0
    %1996 = vmatpush1.msra.mxu0 0.0
    %1997 = vmatprep.subr.mxu0 0.0
    %1998 = vmatpush1.msra.mxu0 0.0
    %1999 = vmatprep.subr.mxu0 0.0
    %2000 = vmatpush1.msra.mxu0 0.0
    %2001 = vmatprep.subr.mxu0 0.0
    %2002 = vmatpush1.msra.mxu0 0.0
    %2003 = vmatprep.subr.mxu0 0.0
    %2004 = vmatpush1.msra.mxu0 0.0
    %2005 = vmatprep.subr.mxu0 0.0
    %2006 = vmatpush1.msra.mxu0 0.0
    %2007 = vmatprep.subr.mxu0 0.0
    %2008 = vmatpush1.msra.mxu0 0.0
    %2009 = vmatprep.subr.mxu0 0.0
    %2010 = vmatpush1.msra.mxu0 0.0
    %2011 = vmatprep.subr.mxu0 0.0
    %2012 = vmatpush1.msra.mxu0 0.0
    %2013 = vmatprep.subr.mxu0 0.0
    %2014 = vmatpush1.msra.mxu0 0.0
    %2015 = vmatprep.subr.mxu0 0.0
    %2016 = vmatpush1.msra.mxu0 0.0
    %2017 = vmatprep.subr.mxu0 0.0
    %2018 = vmatpush1.msra.mxu0 0.0
    %2019 = vmatprep.subr.mxu0 0.0
    %2020 = vmatpush1.msra.mxu0 %v1982
    %2021 = vmatprep.subr.mxu0 0.0
    %2022 = vmatpush1.msra.mxu0 %v1980
    %2023 = vmatprep.subr.mxu0 0.0
    %2024 = vmatpush2.msra.mxu0 0.0
    %2025 = vmatprep.subr.mxu0 0.0
    %2026 = vmatpush2.msra.mxu0 0.0
    %2027 = vmatprep.subr.mxu0 0.0
    %2028 = vmatpush2.msra.mxu0 0.0
    %2029 = vmatprep.subr.mxu0 0.0
    %2030 = vmatpush2.msra.mxu0 0.0
    %2031 = vmatprep.subr.mxu0 0.0
    %2032 = vmatpush2.msra.mxu0 0.0
    %2033 = vmatprep.subr.mxu0 0.0
    %2034 = vmatpush2.msra.mxu0 0.0
    %2035 = vmatprep.subr.mxu0 0.0
    %2036 = vmatpush2.msra.mxu0 0.0
    %2037 = vmatprep.subr.mxu0 0.0
    %2038 = vmatpush2.msra.mxu0 0.0
    %2039 = vmatprep.subr.mxu0 0.0
    %2040 = vmatpush2.msra.mxu0 0.0
    %2041 = vmatprep.subr.mxu0 0.0
    %2042 = vmatpush2.msra.mxu0 0.0
    %2043 = vmatprep.subr.mxu0 0.0
    %2044 = vmatpush2.msra.mxu0 0.0
    %2045 = vmatprep.subr.mxu0 0.0
    %2046 = vmatpush2.msra.mxu0 0.0
    %2047 = vmatprep.subr.mxu0 0.0
    %2048 = vmatpush2.msra.mxu0 0.0
    %2049 = vmatprep.subr.mxu0 0.0
    %2050 = vmatpush2.msra.mxu0 0.0
    %2051 = vmatprep.subr.mxu0 0.0
    %2052 = vmatpush2.msra.mxu0 0.0
    %2053 = vmatprep.subr.mxu0 0.0
    %2054 = vmatpush2.msra.mxu0 0.0
    %2055 = vmatprep.mubr.f32.mxu0 0.0
    %2056 = vmatmul.mubr.f32.gmra.mxu0 %v1986
    %v2057 = vpop.f32.mrf.mxu0
    %v2058 = vadd.f32 0.0, %v2057
    %v2059 = vpop.f32.mrf.mxu0
    %2060 = vmatprep.mubr.f32.mxu0 0.0
    %2061 = vmatmul.mubr.f32.gmra.mxu0 %v1989
    %v2062 = vpop.f32.mrf.mxu0
    %v2063 = vadd.f32 0.0, %v2062
    %v2064 = vpop.f32.mrf.mxu0
    %2065 = vdwg.mxu0
    %2066 = vrot.lane.b32.xlu0 %v252, 40
    %v2067 = vpop.permute.xlu0 %2066
    %2068 = vrot.lane.b32.xlu0 %v257, 40
    %v2069 = vpop.permute.xlu0 %2068
    %v2073 = vsel %vm439, %v1977, 0
    %v2076 = vsel %vm439, %v1978, 0
    %2078 = vmatprep.subr.mxu0 0.0
    %2079 = vmatpush1.msra.mxu0 0.0
    %2080 = vmatprep.subr.mxu0 0.0
    %2081 = vmatpush1.msra.mxu0 0.0
    %2082 = vmatprep.subr.mxu0 0.0
    %2083 = vmatpush1.msra.mxu0 0.0
    %2084 = vmatprep.subr.mxu0 0.0
    %2085 = vmatpush1.msra.mxu0 0.0
    %2086 = vmatprep.subr.mxu0 0.0
    %2087 = vmatpush1.msra.mxu0 0.0
    %2088 = vmatprep.subr.mxu0 0.0
    %2089 = vmatpush1.msra.mxu0 0.0
    %2090 = vmatprep.subr.mxu0 0.0
    %2091 = vmatpush1.msra.mxu0 0.0
    %2092 = vmatprep.subr.mxu0 0.0
    %2093 = vmatpush1.msra.mxu0 0.0
    %2094 = vmatprep.subr.mxu0 0.0
    %2095 = vmatpush1.msra.mxu0 0.0
    %2096 = vmatprep.subr.mxu0 0.0
    %2097 = vmatpush1.msra.mxu0 0.0
    %2098 = vmatprep.subr.mxu0 0.0
    %2099 = vmatpush1.msra.mxu0 0.0
    %2100 = vmatprep.subr.mxu0 0.0
    %2101 = vmatpush1.msra.mxu0 0.0
    %2102 = vmatprep.subr.mxu0 0.0
    %2103 = vmatpush1.msra.mxu0 0.0
    %2104 = vmatprep.subr.mxu0 0.0
    %2105 = vmatpush1.msra.mxu0 0.0
    %2106 = vmatprep.subr.mxu0 0.0
    %2107 = vmatpush1.msra.mxu0 %v2069
    %2108 = vmatprep.subr.mxu0 0.0
    %2109 = vmatpush1.msra.mxu0 %v2067
    %2110 = vmatprep.subr.mxu0 0.0
    %2111 = vmatpush2.msra.mxu0 0.0
    %2112 = vmatprep.subr.mxu0 0.0
    %2113 = vmatpush2.msra.mxu0 0.0
    %2114 = vmatprep.subr.mxu0 0.0
    %2115 = vmatpush2.msra.mxu0 0.0
    %2116 = vmatprep.subr.mxu0 0.0
    %2117 = vmatpush2.msra.mxu0 0.0
    %2118 = vmatprep.subr.mxu0 0.0
    %2119 = vmatpush2.msra.mxu0 0.0
    %2120 = vmatprep.subr.mxu0 0.0
    %2121 = vmatpush2.msra.mxu0 0.0
    %2122 = vmatprep.subr.mxu0 0.0
    %2123 = vmatpush2.msra.mxu0 0.0
    %2124 = vmatprep.subr.mxu0 0.0
    %2125 = vmatpush2.msra.mxu0 0.0
    %2126 = vmatprep.subr.mxu0 0.0
    %2127 = vmatpush2.msra.mxu0 0.0
    %2128 = vmatprep.subr.mxu0 0.0
    %2129 = vmatpush2.msra.mxu0 0.0
    %2130 = vmatprep.subr.mxu0 0.0
    %2131 = vmatpush2.msra.mxu0 0.0
    %2132 = vmatprep.subr.mxu0 0.0
    %2133 = vmatpush2.msra.mxu0 0.0
    %2134 = vmatprep.subr.mxu0 0.0
    %2135 = vmatpush2.msra.mxu0 0.0
    %2136 = vmatprep.subr.mxu0 0.0
    %2137 = vmatpush2.msra.mxu0 0.0
    %2138 = vmatprep.subr.mxu0 0.0
    %2139 = vmatpush2.msra.mxu0 0.0
    %2140 = vmatprep.subr.mxu0 0.0
    %2141 = vmatpush2.msra.mxu0 0.0
    %2142 = vmatprep.mubr.f32.mxu0 0.0
    %2143 = vmatmul.mubr.f32.gmra.mxu0 %v2073
    %v2144 = vpop.f32.mrf.mxu0
    %v2145 = vadd.f32 0.0, %v2144
    %v2146 = vpop.f32.mrf.mxu0
    %2147 = vmatprep.mubr.f32.mxu0 0.0
    %2148 = vmatmul.mubr.f32.gmra.mxu0 %v2076
    %v2149 = vpop.f32.mrf.mxu0
    %v2150 = vadd.f32 0.0, %v2149
    %v2151 = vpop.f32.mrf.mxu0
    %2152 = vdwg.mxu0
    %v2154 = vsel %vm266, %v2058, 0
    %v2157 = vsel %vm266, %v2063, 0
    %v2160 = vsel %vm266, %v2145, 0
    %v2163 = vsel %vm266, %v2150, 0
    %2165 = vmatprep.subr.mxu0 0.0
    %2166 = vmatpush1.msra.mxu0 0.0
    %2167 = vmatprep.subr.mxu0 0.0
    %2168 = vmatpush1.msra.mxu0 0.0
    %2169 = vmatprep.subr.mxu0 0.0
    %2170 = vmatpush1.msra.mxu0 0.0
    %2171 = vmatprep.subr.mxu0 0.0
    %2172 = vmatpush1.msra.mxu0 0.0
    %2173 = vmatprep.subr.mxu0 0.0
    %2174 = vmatpush1.msra.mxu0 0.0
    %2175 = vmatprep.subr.mxu0 0.0
    %2176 = vmatpush1.msra.mxu0 0.0
    %2177 = vmatprep.subr.mxu0 0.0
    %2178 = vmatpush1.msra.mxu0 0.0
    %2179 = vmatprep.subr.mxu0 0.0
    %2180 = vmatpush1.msra.mxu0 0.0
    %2181 = vmatprep.subr.mxu0 0.0
    %2182 = vmatpush1.msra.mxu0 0.0
    %2183 = vmatprep.subr.mxu0 0.0
    %2184 = vmatpush1.msra.mxu0 0.0
    %2185 = vmatprep.subr.mxu0 0.0
    %2186 = vmatpush1.msra.mxu0 0.0
    %2187 = vmatprep.subr.mxu0 0.0
    %2188 = vmatpush1.msra.mxu0 0.0
    %2189 = vmatprep.subr.mxu0 0.0
    %2190 = vmatpush1.msra.mxu0 0.0
    %2191 = vmatprep.subr.mxu0 0.0
    %2192 = vmatpush1.msra.mxu0 0.0
    %2193 = vmatprep.subr.mxu0 0.0
    %2194 = vmatpush1.msra.mxu0 0.0
    %2195 = vmatprep.subr.mxu0 0.0
    %2196 = vmatpush1.msra.mxu0 %v153
    %2197 = vmatprep.subr.mxu0 0.0
    %2198 = vmatpush2.msra.mxu0 0.0
    %2199 = vmatprep.subr.mxu0 0.0
    %2200 = vmatpush2.msra.mxu0 0.0
    %2201 = vmatprep.subr.mxu0 0.0
    %2202 = vmatpush2.msra.mxu0 0.0
    %2203 = vmatprep.subr.mxu0 0.0
    %2204 = vmatpush2.msra.mxu0 0.0
    %2205 = vmatprep.subr.mxu0 0.0
    %2206 = vmatpush2.msra.mxu0 0.0
    %2207 = vmatprep.subr.mxu0 0.0
    %2208 = vmatpush2.msra.mxu0 0.0
    %2209 = vmatprep.subr.mxu0 0.0
    %2210 = vmatpush2.msra.mxu0 0.0
    %2211 = vmatprep.subr.mxu0 0.0
    %2212 = vmatpush2.msra.mxu0 0.0
    %2213 = vmatprep.subr.mxu0 0.0
    %2214 = vmatpush2.msra.mxu0 0.0
    %2215 = vmatprep.subr.mxu0 0.0
    %2216 = vmatpush2.msra.mxu0 0.0
    %2217 = vmatprep.subr.mxu0 0.0
    %2218 = vmatpush2.msra.mxu0 0.0
    %2219 = vmatprep.subr.mxu0 0.0
    %2220 = vmatpush2.msra.mxu0 0.0
    %2221 = vmatprep.subr.mxu0 0.0
    %2222 = vmatpush2.msra.mxu0 0.0
    %2223 = vmatprep.subr.mxu0 0.0
    %2224 = vmatpush2.msra.mxu0 0.0
    %2225 = vmatprep.subr.mxu0 0.0
    %2226 = vmatpush2.msra.mxu0 0.0
    %2227 = vmatprep.subr.mxu0 0.0
    %2228 = vmatpush2.msra.mxu0 0.0
    %2229 = vmatprep.mubr.f32.mxu0 0.0
    %2230 = vmatmul.mubr.f32.gmra.mxu0 %v2154
    %v2231 = vpop.f32.mrf.mxu0
    %v2232 = vadd.f32 0.0, %v2231
    %v2233 = vpop.f32.mrf.mxu0
    %2234 = vmatprep.mubr.f32.mxu0 0.0
    %2235 = vmatmul.mubr.f32.gmra.mxu0 %v2157
    %v2236 = vpop.f32.mrf.mxu0
    %v2237 = vadd.f32 0.0, %v2236
    %v2238 = vpop.f32.mrf.mxu0
    %2239 = vmatprep.mubr.f32.mxu0 0.0
    %2240 = vmatmul.mubr.f32.gmra.mxu0 %v2160
    %v2241 = vpop.f32.mrf.mxu0
    %v2242 = vadd.f32 0.0, %v2241
    %v2243 = vpop.f32.mrf.mxu0
    %2244 = vmatprep.mubr.f32.mxu0 0.0
    %2245 = vmatmul.mubr.f32.gmra.mxu0 %v2163
    %v2246 = vpop.f32.mrf.mxu0
    %v2247 = vadd.f32 0.0, %v2246
    %v2248 = vpop.f32.mrf.mxu0
    %2249 = vdwg.mxu0
    %v2250 = vadd.f32 %v1749, %v2232
    %v2251 = vadd.f32 %v1750, %v2237
    %v2252 = vadd.f32 %v1751, %v2242
    %v2253 = vadd.f32 %v1752, %v2247
    %v2254 = vadd.f32 %v131, %v2250
    %v2255 = vadd.f32 %v136, %v2251
    %v2256 = vadd.f32 %v141, %v2252
    %v2257 = vadd.f32 %v146, %v2253
    %v2258 = vlaneseq
    %v2259 = vshrl.u32 %v2258, 7
    %v2260 = vsub.s32 1, %v2259
    %v2261 = vrot.slane %v149, %v2260
    %v2262 = vadd.f32 %v2254, %v2261
    %v2263 = vadd.f32 %v2255, %v2261
    %v2264 = vadd.f32 %v2256, %v2261
    %v2265 = vadd.f32 %v2257, %v2261
    %v2266 = vsel %vm162, %v2262, 0.0
    %2267 = vadd.xlane.f32.xlu0 %v2266
    %v2268 = vpop.xlane.xlu0 %2267
    %v2269 = vsel %vm162, %v2263, 0.0
    %2270 = vadd.xlane.f32.xlu0 %v2269
    %v2271 = vpop.xlane.xlu0 %2270
    %v2272 = vsel %vm162, %v2264, 0.0
    %2273 = vadd.xlane.f32.xlu0 %v2272
    %v2274 = vpop.xlane.xlu0 %2273
    %v2275 = vsel %vm162, %v2265, 0.0
    %2276 = vadd.xlane.f32.xlu0 %v2275
    %v2277 = vpop.xlane.xlu0 %2276
    %v2278 = vrcp.pop 32.0
    %v2279 = vmul.f32 %v2268, %v2278
    %v2280 = vmul.f32 %v2271, %v2278
    %v2281 = vmul.f32 %v2274, %v2278
    %v2282 = vmul.f32 %v2277, %v2278
    %v2283 = vsub.f32 %v2262, %v2279
    %v2284 = vsub.f32 %v2263, %v2280
    %v2285 = vsub.f32 %v2264, %v2281
    %v2286 = vsub.f32 %v2265, %v2282
    %v2287 = vmul.f32 %v2283, %v2283
    %v2288 = vmul.f32 %v2284, %v2284
    %v2289 = vmul.f32 %v2285, %v2285
    %v2290 = vmul.f32 %v2286, %v2286
    %v2291 = vsel %vm162, %v2287, 0.0
    %2292 = vadd.xlane.f32.xlu0 %v2291
    %v2293 = vpop.xlane.xlu0 %2292
    %v2294 = vsel %vm162, %v2288, 0.0
    %2295 = vadd.xlane.f32.xlu0 %v2294
    %v2296 = vpop.xlane.xlu0 %2295
    %v2297 = vsel %vm162, %v2289, 0.0
    %2298 = vadd.xlane.f32.xlu0 %v2297
    %v2299 = vpop.xlane.xlu0 %2298
    %v2300 = vsel %vm162, %v2290, 0.0
    %2301 = vadd.xlane.f32.xlu0 %v2300
    %v2302 = vpop.xlane.xlu0 %2301
    %v2303 = vmul.f32 %v2293, %v2278
    %v2304 = vmul.f32 %v2296, %v2278
    %v2305 = vmul.f32 %v2299, %v2278
    %v2306 = vmul.f32 %v2302, %v2278
    %v2307 = vadd.f32 %v2303, 1e-05
    %v2308 = vadd.f32 %v2304, 1e-05
    %v2309 = vadd.f32 %v2305, 1e-05
    %v2310 = vadd.f32 %v2306, 1e-05
    %v2311 = vrsqrt.pop %v2307
    %v2312 = vrsqrt.pop %v2308
    %v2313 = vrsqrt.pop %v2309
    %v2314 = vrsqrt.pop %v2310
    %v2315 = vmul.f32 %v2283, %v2311
    %v2316 = vmul.f32 %v2284, %v2312
    %v2317 = vmul.f32 %v2285, %v2313
    %v2318 = vmul.f32 %v2286, %v2314
    %v2319 = vlaneseq
    %v2320 = vshrl.u32 %v2319, 7
    %v2321 = vsub.s32 2, %v2320
    %v2322 = vrot.slane %v149, %v2321
    %v2323 = vmul.f32 %v2315, %v2322
    %v2324 = vmul.f32 %v2316, %v2322
    %v2325 = vmul.f32 %v2317, %v2322
    %v2326 = vmul.f32 %v2318, %v2322
    %v2327 = vlaneseq
    %v2328 = vshrl.u32 %v2327, 7
    %v2329 = vsub.s32 3, %v2328
    %v2330 = vrot.slane %v149, %v2329
    %v2331 = vadd.f32 %v2323, %v2330
    %v2332 = vadd.f32 %v2324, %v2330
    %v2333 = vadd.f32 %v2325, %v2330
    %v2334 = vadd.f32 %v2326, %v2330
    %v2335 = vld [vmem:[%s5] sm:$0xff]
    %v2336 = vld [vmem:[%s5 + $0x8] sm:$0xff]
    %v2337 = vld [vmem:[%s5 + $0x10] sm:$0xff]
    %v2338 = vld [vmem:[%s5 + $0x18] sm:$0xff]
    %v2339 = vld [vmem:[%s6] sm:$0xff]
    %v2340 = vld [vmem:[%s6 + $0x8] sm:$0xff]
    %v2341 = vld [vmem:[%s6 + $0x10] sm:$0xff]
    %v2342 = vld [vmem:[%s6 + $0x18] sm:$0xff]
    %v2343 = vld [vmem:[%s6 + $0x20] sm:$0xff]
    %v2344 = vld [vmem:[%s6 + $0x28] sm:$0xff]
    %v2345 = vld [vmem:[%s6 + $0x30] sm:$0xff]
    %v2346 = vld [vmem:[%s6 + $0x38] sm:$0xff]
    %v2347 = vlaneseq
    %v2348 = vshrl.u32 %v2347, 7
    %v2349 = vsub.s32 4, %v2348
    %v2350 = vrot.slane %v149, %v2349
    %v2352 = vsel %vm162, %v2331, 0
    %v2355 = vsel %vm162, %v2332, 0
    %v2358 = vsel %vm162, %v2333, 0
    %v2361 = vsel %vm162, %v2334, 0
    %2363 = vmatprep.subr.mxu0 0.0
    %2364 = vmatpush1.msra.mxu0 0.0
    %2365 = vmatprep.subr.mxu0 0.0
    %2366 = vmatpush1.msra.mxu0 0.0
    %2367 = vmatprep.subr.mxu0 0.0
    %2368 = vmatpush1.msra.mxu0 0.0
    %2369 = vmatprep.subr.mxu0 0.0
    %2370 = vmatpush1.msra.mxu0 0.0
    %2371 = vmatprep.subr.mxu0 0.0
    %2372 = vmatpush1.msra.mxu0 0.0
    %2373 = vmatprep.subr.mxu0 0.0
    %2374 = vmatpush1.msra.mxu0 0.0
    %2375 = vmatprep.subr.mxu0 0.0
    %2376 = vmatpush1.msra.mxu0 0.0
    %2377 = vmatprep.subr.mxu0 0.0
    %2378 = vmatpush1.msra.mxu0 0.0
    %2379 = vmatprep.subr.mxu0 0.0
    %2380 = vmatpush1.msra.mxu0 0.0
    %2381 = vmatprep.subr.mxu0 0.0
    %2382 = vmatpush1.msra.mxu0 0.0
    %2383 = vmatprep.subr.mxu0 0.0
    %2384 = vmatpush1.msra.mxu0 0.0
    %2385 = vmatprep.subr.mxu0 0.0
    %2386 = vmatpush1.msra.mxu0 0.0
    %2387 = vmatprep.subr.mxu0 0.0
    %2388 = vmatpush1.msra.mxu0 %v2338
    %2389 = vmatprep.subr.mxu0 0.0
    %2390 = vmatpush1.msra.mxu0 %v2337
    %2391 = vmatprep.subr.mxu0 0.0
    %2392 = vmatpush1.msra.mxu0 %v2336
    %2393 = vmatprep.subr.mxu0 0.0
    %2394 = vmatpush1.msra.mxu0 %v2335
    %2395 = vmatprep.subr.mxu0 0.0
    %2396 = vmatpush2.msra.mxu0 0.0
    %2397 = vmatprep.subr.mxu0 0.0
    %2398 = vmatpush2.msra.mxu0 0.0
    %2399 = vmatprep.subr.mxu0 0.0
    %2400 = vmatpush2.msra.mxu0 0.0
    %2401 = vmatprep.subr.mxu0 0.0
    %2402 = vmatpush2.msra.mxu0 0.0
    %2403 = vmatprep.subr.mxu0 0.0
    %2404 = vmatpush2.msra.mxu0 0.0
    %2405 = vmatprep.subr.mxu0 0.0
    %2406 = vmatpush2.msra.mxu0 0.0
    %2407 = vmatprep.subr.mxu0 0.0
    %2408 = vmatpush2.msra.mxu0 0.0
    %2409 = vmatprep.subr.mxu0 0.0
    %2410 = vmatpush2.msra.mxu0 0.0
    %2411 = vmatprep.subr.mxu0 0.0
    %2412 = vmatpush2.msra.mxu0 0.0
    %2413 = vmatprep.subr.mxu0 0.0
    %2414 = vmatpush2.msra.mxu0 0.0
    %2415 = vmatprep.subr.mxu0 0.0
    %2416 = vmatpush2.msra.mxu0 0.0
    %2417 = vmatprep.subr.mxu0 0.0
    %2418 = vmatpush2.msra.mxu0 0.0
    %2419 = vmatprep.subr.mxu0 0.0
    %2420 = vmatpush2.msra.mxu0 0.0
    %2421 = vmatprep.subr.mxu0 0.0
    %2422 = vmatpush2.msra.mxu0 0.0
    %2423 = vmatprep.subr.mxu0 0.0
    %2424 = vmatpush2.msra.mxu0 0.0
    %2425 = vmatprep.subr.mxu0 0.0
    %2426 = vmatpush2.msra.mxu0 0.0
    %2427 = vmatprep.mubr.f32.mxu0 0.0
    %2428 = vmatmul.mubr.f32.gmra.mxu0 %v2352
    %v2429 = vpop.f32.mrf.mxu0
    %v2430 = vadd.f32 %v2350, %v2429
    %v2431 = vpop.f32.mrf.mxu0
    %2432 = vmatprep.mubr.f32.mxu0 0.0
    %2433 = vmatmul.mubr.f32.gmra.mxu0 %v2355
    %v2434 = vpop.f32.mrf.mxu0
    %v2435 = vadd.f32 %v2350, %v2434
    %v2436 = vpop.f32.mrf.mxu0
    %2437 = vmatprep.mubr.f32.mxu0 0.0
    %2438 = vmatmul.mubr.f32.gmra.mxu0 %v2358
    %v2439 = vpop.f32.mrf.mxu0
    %v2440 = vadd.f32 %v2350, %v2439
    %v2441 = vpop.f32.mrf.mxu0
    %2442 = vmatprep.mubr.f32.mxu0 0.0
    %2443 = vmatmul.mubr.f32.gmra.mxu0 %v2361
    %v2444 = vpop.f32.mrf.mxu0
    %v2445 = vadd.f32 %v2350, %v2444
    %v2446 = vpop.f32.mrf.mxu0
    %2447 = vdwg.mxu0
    %v2448 = vmax.f32 %v2430, 0.0
    %v2449 = vmax.f32 %v2435, 0.0
    %v2450 = vmax.f32 %v2440, 0.0
    %v2451 = vmax.f32 %v2445, 0.0
    %v2452 = vlaneseq
    %v2453 = vshrl.u32 %v2452, 7
    %v2454 = vsub.s32 5, %v2453
    %v2455 = vrot.slane %v149, %v2454
    %vm2456 = vcmask 523264
    %v2458 = vsel %vm2456, %v2448, 0
    %v2461 = vsel %vm2456, %v2449, 0
    %v2464 = vsel %vm2456, %v2450, 0
    %v2467 = vsel %vm2456, %v2451, 0
    %2469 = vmatprep.subr.mxu0 0.0
    %2470 = vmatpush1.msra.mxu0 0.0
    %2471 = vmatprep.subr.mxu0 0.0
    %2472 = vmatpush1.msra.mxu0 0.0
    %2473 = vmatprep.subr.mxu0 0.0
    %2474 = vmatpush1.msra.mxu0 0.0
    %2475 = vmatprep.subr.mxu0 0.0
    %2476 = vmatpush1.msra.mxu0 0.0
    %2477 = vmatprep.subr.mxu0 0.0
    %2478 = vmatpush1.msra.mxu0 0.0
    %2479 = vmatprep.subr.mxu0 0.0
    %2480 = vmatpush1.msra.mxu0 0.0
    %2481 = vmatprep.subr.mxu0 0.0
    %2482 = vmatpush1.msra.mxu0 0.0
    %2483 = vmatprep.subr.mxu0 0.0
    %2484 = vmatpush1.msra.mxu0 0.0
    %2485 = vmatprep.subr.mxu0 0.0
    %2486 = vmatpush1.msra.mxu0 %v2346
    %2487 = vmatprep.subr.mxu0 0.0
    %2488 = vmatpush1.msra.mxu0 %v2345
    %2489 = vmatprep.subr.mxu0 0.0
    %2490 = vmatpush1.msra.mxu0 %v2344
    %2491 = vmatprep.subr.mxu0 0.0
    %2492 = vmatpush1.msra.mxu0 %v2343
    %2493 = vmatprep.subr.mxu0 0.0
    %2494 = vmatpush1.msra.mxu0 %v2342
    %2495 = vmatprep.subr.mxu0 0.0
    %2496 = vmatpush1.msra.mxu0 %v2341
    %2497 = vmatprep.subr.mxu0 0.0
    %2498 = vmatpush1.msra.mxu0 %v2340
    %2499 = vmatprep.subr.mxu0 0.0
    %2500 = vmatpush1.msra.mxu0 %v2339
    %2501 = vmatprep.subr.mxu0 0.0
    %2502 = vmatpush2.msra.mxu0 0.0
    %2503 = vmatprep.subr.mxu0 0.0
    %2504 = vmatpush2.msra.mxu0 0.0
    %2505 = vmatprep.subr.mxu0 0.0
    %2506 = vmatpush2.msra.mxu0 0.0
    %2507 = vmatprep.subr.mxu0 0.0
    %2508 = vmatpush2.msra.mxu0 0.0
    %2509 = vmatprep.subr.mxu0 0.0
    %2510 = vmatpush2.msra.mxu0 0.0
    %2511 = vmatprep.subr.mxu0 0.0
    %2512 = vmatpush2.msra.mxu0 0.0
    %2513 = vmatprep.subr.mxu0 0.0
    %2514 = vmatpush2.msra.mxu0 0.0
    %2515 = vmatprep.subr.mxu0 0.0
    %2516 = vmatpush2.msra.mxu0 0.0
    %2517 = vmatprep.subr.mxu0 0.0
    %2518 = vmatpush2.msra.mxu0 0.0
    %2519 = vmatprep.subr.mxu0 0.0
    %2520 = vmatpush2.msra.mxu0 0.0
    %2521 = vmatprep.subr.mxu0 0.0
    %2522 = vmatpush2.msra.mxu0 0.0
    %2523 = vmatprep.subr.mxu0 0.0
    %2524 = vmatpush2.msra.mxu0 0.0
    %2525 = vmatprep.subr.mxu0 0.0
    %2526 = vmatpush2.msra.mxu0 0.0
    %2527 = vmatprep.subr.mxu0 0.0
    %2528 = vmatpush2.msra.mxu0 0.0
    %2529 = vmatprep.subr.mxu0 0.0
    %2530 = vmatpush2.msra.mxu0 0.0
    %2531 = vmatprep.subr.mxu0 0.0
    %2532 = vmatpush2.msra.mxu0 0.0
    %2533 = vmatprep.mubr.f32.mxu0 0.0
    %2534 = vmatmul.mubr.f32.gmra.mxu0 %v2458
    %v2535 = vpop.f32.mrf.mxu0
    %v2536 = vadd.f32 %v2455, %v2535
    %v2537 = vpop.f32.mrf.mxu0
    %2538 = vmatprep.mubr.f32.mxu0 0.0
    %2539 = vmatmul.mubr.f32.gmra.mxu0 %v2461
    %v2540 = vpop.f32.mrf.mxu0
    %v2541 = vadd.f32 %v2455, %v2540
    %v2542 = vpop.f32.mrf.mxu0
    %2543 = vmatprep.mubr.f32.mxu0 0.0
    %2544 = vmatmul.mubr.f32.gmra.mxu0 %v2464
    %v2545 = vpop.f32.mrf.mxu0
    %v2546 = vadd.f32 %v2455, %v2545
    %v2547 = vpop.f32.mrf.mxu0
    %2548 = vmatprep.mubr.f32.mxu0 0.0
    %2549 = vmatmul.mubr.f32.gmra.mxu0 %v2467
    %v2550 = vpop.f32.mrf.mxu0
    %v2551 = vadd.f32 %v2455, %v2550
    %v2552 = vpop.f32.mrf.mxu0
    %2553 = vdwg.mxu0
    %v2554 = vadd.f32 %v2331, %v2536
    %v2555 = vadd.f32 %v2332, %v2541
    %v2556 = vadd.f32 %v2333, %v2546
    %v2557 = vadd.f32 %v2334, %v2551
    %v2558 = vsel %vm162, %v2554, 0.0
    %2559 = vadd.xlane.f32.xlu0 %v2558
    %v2560 = vpop.xlane.xlu0 %2559
    %v2561 = vsel %vm162, %v2555, 0.0
    %2562 = vadd.xlane.f32.xlu0 %v2561
    %v2563 = vpop.xlane.xlu0 %2562
    %v2564 = vsel %vm162, %v2556, 0.0
    %2565 = vadd.xlane.f32.xlu0 %v2564
    %v2566 = vpop.xlane.xlu0 %2565
    %v2567 = vsel %vm162, %v2557, 0.0
    %2568 = vadd.xlane.f32.xlu0 %v2567
    %v2569 = vpop.xlane.xlu0 %2568
    %v2570 = vmul.f32 %v2560, %v2278
    %v2571 = vmul.f32 %v2563, %v2278
    %v2572 = vmul.f32 %v2566, %v2278
    %v2573 = vmul.f32 %v2569, %v2278
    %v2574 = vsub.f32 %v2554, %v2570
    %v2575 = vsub.f32 %v2555, %v2571
    %v2576 = vsub.f32 %v2556, %v2572
    %v2577 = vsub.f32 %v2557, %v2573
    %v2578 = vmul.f32 %v2574, %v2574
    %v2579 = vmul.f32 %v2575, %v2575
    %v2580 = vmul.f32 %v2576, %v2576
    %v2581 = vmul.f32 %v2577, %v2577
    %v2582 = vsel %vm162, %v2578, 0.0
    %2583 = vadd.xlane.f32.xlu0 %v2582
    %v2584 = vpop.xlane.xlu0 %2583
    %v2585 = vsel %vm162, %v2579, 0.0
    %2586 = vadd.xlane.f32.xlu0 %v2585
    %v2587 = vpop.xlane.xlu0 %2586
    %v2588 = vsel %vm162, %v2580, 0.0
    %2589 = vadd.xlane.f32.xlu0 %v2588
    %v2590 = vpop.xlane.xlu0 %2589
    %v2591 = vsel %vm162, %v2581, 0.0
    %2592 = vadd.xlane.f32.xlu0 %v2591
    %v2593 = vpop.xlane.xlu0 %2592
    %v2594 = vmul.f32 %v2584, %v2278
    %v2595 = vmul.f32 %v2587, %v2278
    %v2596 = vmul.f32 %v2590, %v2278
    %v2597 = vmul.f32 %v2593, %v2278
    %v2598 = vadd.f32 %v2594, 1e-05
    %v2599 = vadd.f32 %v2595, 1e-05
    %v2600 = vadd.f32 %v2596, 1e-05
    %v2601 = vadd.f32 %v2597, 1e-05
    %v2602 = vrsqrt.pop %v2598
    %v2603 = vrsqrt.pop %v2599
    %v2604 = vrsqrt.pop %v2600
    %v2605 = vrsqrt.pop %v2601
    %v2606 = vmul.f32 %v2574, %v2602
    %v2607 = vmul.f32 %v2575, %v2603
    %v2608 = vmul.f32 %v2576, %v2604
    %v2609 = vmul.f32 %v2577, %v2605
    %v2610 = vlaneseq
    %v2611 = vshrl.u32 %v2610, 7
    %v2612 = vsub.s32 6, %v2611
    %v2613 = vrot.slane %v149, %v2612
    %v2614 = vmul.f32 %v2606, %v2613
    %v2615 = vmul.f32 %v2607, %v2613
    %v2616 = vmul.f32 %v2608, %v2613
    %v2617 = vmul.f32 %v2609, %v2613
    %v2618 = vlaneseq
    %v2619 = vshrl.u32 %v2618, 7
    %v2620 = vsub.s32 7, %v2619
    %v2621 = vrot.slane %v149, %v2620
    %v2622 = vadd.f32 %v2614, %v2621
    %v2623 = vadd.f32 %v2615, %v2621
    %v2624 = vadd.f32 %v2616, %v2621
    %v2625 = vadd.f32 %v2617, %v2621
    %s2626 = scalar_lea.vmem %s7, 8
    %v2627 = vld [vmem:[%s2626] sm:$0xff]
    %s2628 = scalar_lea.vmem %s3, 32
    %v2629 = vld [vmem:[%s2628] sm:$0xff]
    %v2630 = vld [vmem:[%s2628 + $0x8] sm:$0xff]
    %v2631 = vld [vmem:[%s2628 + $0x10] sm:$0xff]
    %v2632 = vld [vmem:[%s2628 + $0x18] sm:$0xff]
    %s2633 = scalar_lea.vmem %s4, 32
    %v2634 = vld [vmem:[%s2633] sm:$0xff]
    %v2635 = vld [vmem:[%s2633 + $0x8] sm:$0xff]
    %v2636 = vld [vmem:[%s2633 + $0x10] sm:$0xff]
    %v2637 = vld [vmem:[%s2633 + $0x18] sm:$0xff]
    %v2638 = vlaneseq
    %v2639 = vshrl.u32 %v2638, 7
    %v2640 = vsub.s32 0, %v2639
    %v2641 = vrot.slane %v2627, %v2640
    %2646 = vrot.lane.b32.xlu0 %v2629, 96
    %v2647 = vpop.permute.xlu0 %2646
    %2648 = vrot.lane.b32.xlu0 %v2630, 96
    %v2649 = vpop.permute.xlu0 %2648
    %2650 = vrot.lane.b32.xlu0 %v2631, 96
    %v2651 = vpop.permute.xlu0 %2650
    %2652 = vrot.lane.b32.xlu0 %v2632, 96
    %v2653 = vpop.permute.xlu0 %2652
    %2659 = vrot.lane.b32.xlu0 %v2641, 96
    %v2660 = vpop.permute.xlu0 %2659
    %v2663 = vsel %vm162, %v2622, 0
    %v2666 = vsel %vm162, %v2623, 0
    %v2669 = vsel %vm162, %v2624, 0
    %v2672 = vsel %vm162, %v2625, 0
    %2674 = vmatprep.subr.mxu0 0.0
    %2675 = vmatpush1.msra.mxu0 0.0
    %2676 = vmatprep.subr.mxu0 0.0
    %2677 = vmatpush1.msra.mxu0 0.0
    %2678 = vmatprep.subr.mxu0 0.0
    %2679 = vmatpush1.msra.mxu0 0.0
    %2680 = vmatprep.subr.mxu0 0.0
    %2681 = vmatpush1.msra.mxu0 0.0
    %2682 = vmatprep.subr.mxu0 0.0
    %2683 = vmatpush1.msra.mxu0 0.0
    %2684 = vmatprep.subr.mxu0 0.0
    %2685 = vmatpush1.msra.mxu0 0.0
    %2686 = vmatprep.subr.mxu0 0.0
    %2687 = vmatpush1.msra.mxu0 0.0
    %2688 = vmatprep.subr.mxu0 0.0
    %2689 = vmatpush1.msra.mxu0 0.0
    %2690 = vmatprep.subr.mxu0 0.0
    %2691 = vmatpush1.msra.mxu0 0.0
    %2692 = vmatprep.subr.mxu0 0.0
    %2693 = vmatpush1.msra.mxu0 0.0
    %2694 = vmatprep.subr.mxu0 0.0
    %2695 = vmatpush1.msra.mxu0 0.0
    %2696 = vmatprep.subr.mxu0 0.0
    %2697 = vmatpush1.msra.mxu0 0.0
    %2698 = vmatprep.subr.mxu0 0.0
    %2699 = vmatpush1.msra.mxu0 %v2653
    %2700 = vmatprep.subr.mxu0 0.0
    %2701 = vmatpush1.msra.mxu0 %v2651
    %2702 = vmatprep.subr.mxu0 0.0
    %2703 = vmatpush1.msra.mxu0 %v2649
    %2704 = vmatprep.subr.mxu0 0.0
    %2705 = vmatpush1.msra.mxu0 %v2647
    %2706 = vmatprep.subr.mxu0 0.0
    %2707 = vmatpush2.msra.mxu0 0.0
    %2708 = vmatprep.subr.mxu0 0.0
    %2709 = vmatpush2.msra.mxu0 0.0
    %2710 = vmatprep.subr.mxu0 0.0
    %2711 = vmatpush2.msra.mxu0 0.0
    %2712 = vmatprep.subr.mxu0 0.0
    %2713 = vmatpush2.msra.mxu0 0.0
    %2714 = vmatprep.subr.mxu0 0.0
    %2715 = vmatpush2.msra.mxu0 0.0
    %2716 = vmatprep.subr.mxu0 0.0
    %2717 = vmatpush2.msra.mxu0 0.0
    %2718 = vmatprep.subr.mxu0 0.0
    %2719 = vmatpush2.msra.mxu0 0.0
    %2720 = vmatprep.subr.mxu0 0.0
    %2721 = vmatpush2.msra.mxu0 0.0
    %2722 = vmatprep.subr.mxu0 0.0
    %2723 = vmatpush2.msra.mxu0 0.0
    %2724 = vmatprep.subr.mxu0 0.0
    %2725 = vmatpush2.msra.mxu0 0.0
    %2726 = vmatprep.subr.mxu0 0.0
    %2727 = vmatpush2.msra.mxu0 0.0
    %2728 = vmatprep.subr.mxu0 0.0
    %2729 = vmatpush2.msra.mxu0 0.0
    %2730 = vmatprep.subr.mxu0 0.0
    %2731 = vmatpush2.msra.mxu0 0.0
    %2732 = vmatprep.subr.mxu0 0.0
    %2733 = vmatpush2.msra.mxu0 0.0
    %2734 = vmatprep.subr.mxu0 0.0
    %2735 = vmatpush2.msra.mxu0 0.0
    %2736 = vmatprep.subr.mxu0 0.0
    %2737 = vmatpush2.msra.mxu0 0.0
    %2738 = vmatprep.mubr.f32.mxu0 0.0
    %2739 = vmatmul.mubr.f32.gmra.mxu0 %v2663
    %v2740 = vpop.f32.mrf.mxu0
    %v2741 = vadd.f32 %v2660, %v2740
    %v2742 = vpop.f32.mrf.mxu0
    %2743 = vmatprep.mubr.f32.mxu0 0.0
    %2744 = vmatmul.mubr.f32.gmra.mxu0 %v2666
    %v2745 = vpop.f32.mrf.mxu0
    %v2746 = vadd.f32 %v2660, %v2745
    %v2747 = vpop.f32.mrf.mxu0
    %2748 = vmatprep.mubr.f32.mxu0 0.0
    %2749 = vmatmul.mubr.f32.gmra.mxu0 %v2669
    %v2750 = vpop.f32.mrf.mxu0
    %v2751 = vadd.f32 %v2660, %v2750
    %v2752 = vpop.f32.mrf.mxu0
    %2753 = vmatprep.mubr.f32.mxu0 0.0
    %2754 = vmatmul.mubr.f32.gmra.mxu0 %v2672
    %v2755 = vpop.f32.mrf.mxu0
    %v2756 = vadd.f32 %v2660, %v2755
    %v2757 = vpop.f32.mrf.mxu0
    %2758 = vdwg.mxu0
    %v2759 = vrot.slane %v2623, 7
    %v2760 = vrot.slane %v2625, 6
    %vm2761 = vcmask 1041409
    %v2762 = vsel %vm2761, %v2760, %v2759
    %v2763 = vsel %vm162, %v2762, 0
    %2765 = vmatprep.subr.mxu0 0.0
    %2766 = vmatpush1.msra.mxu0 0.0
    %2767 = vmatprep.subr.mxu0 0.0
    %2768 = vmatpush1.msra.mxu0 0.0
    %2769 = vmatprep.subr.mxu0 0.0
    %2770 = vmatpush1.msra.mxu0 0.0
    %2771 = vmatprep.subr.mxu0 0.0
    %2772 = vmatpush1.msra.mxu0 0.0
    %2773 = vmatprep.subr.mxu0 0.0
    %2774 = vmatpush1.msra.mxu0 0.0
    %2775 = vmatprep.subr.mxu0 0.0
    %2776 = vmatpush1.msra.mxu0 0.0
    %2777 = vmatprep.subr.mxu0 0.0
    %2778 = vmatpush1.msra.mxu0 0.0
    %2779 = vmatprep.subr.mxu0 0.0
    %2780 = vmatpush1.msra.mxu0 0.0
    %2781 = vmatprep.subr.mxu0 0.0
    %2782 = vmatpush1.msra.mxu0 0.0
    %2783 = vmatprep.subr.mxu0 0.0
    %2784 = vmatpush1.msra.mxu0 0.0
    %2785 = vmatprep.subr.mxu0 0.0
    %2786 = vmatpush1.msra.mxu0 0.0
    %2787 = vmatprep.subr.mxu0 0.0
    %2788 = vmatpush1.msra.mxu0 0.0
    %2789 = vmatprep.subr.mxu0 0.0
    %2790 = vmatpush1.msra.mxu0 %v2632
    %2791 = vmatprep.subr.mxu0 0.0
    %2792 = vmatpush1.msra.mxu0 %v2631
    %2793 = vmatprep.subr.mxu0 0.0
    %2794 = vmatpush1.msra.mxu0 %v2630
    %2795 = vmatprep.subr.mxu0 0.0
    %2796 = vmatpush1.msra.mxu0 %v2629
    %2797 = vmatprep.subr.mxu0 0.0
    %2798 = vmatpush2.msra.mxu0 0.0
    %2799 = vmatprep.subr.mxu0 0.0
    %2800 = vmatpush2.msra.mxu0 0.0
    %2801 = vmatprep.subr.mxu0 0.0
    %2802 = vmatpush2.msra.mxu0 0.0
    %2803 = vmatprep.subr.mxu0 0.0
    %2804 = vmatpush2.msra.mxu0 0.0
    %2805 = vmatprep.subr.mxu0 0.0
    %2806 = vmatpush2.msra.mxu0 0.0
    %2807 = vmatprep.subr.mxu0 0.0
    %2808 = vmatpush2.msra.mxu0 0.0
    %2809 = vmatprep.subr.mxu0 0.0
    %2810 = vmatpush2.msra.mxu0 0.0
    %2811 = vmatprep.subr.mxu0 0.0
    %2812 = vmatpush2.msra.mxu0 0.0
    %2813 = vmatprep.subr.mxu0 0.0
    %2814 = vmatpush2.msra.mxu0 0.0
    %2815 = vmatprep.subr.mxu0 0.0
    %2816 = vmatpush2.msra.mxu0 0.0
    %2817 = vmatprep.subr.mxu0 0.0
    %2818 = vmatpush2.msra.mxu0 0.0
    %2819 = vmatprep.subr.mxu0 0.0
    %2820 = vmatpush2.msra.mxu0 0.0
    %2821 = vmatprep.subr.mxu0 0.0
    %2822 = vmatpush2.msra.mxu0 0.0
    %2823 = vmatprep.subr.mxu0 0.0
    %2824 = vmatpush2.msra.mxu0 0.0
    %2825 = vmatprep.subr.mxu0 0.0
    %2826 = vmatpush2.msra.mxu0 0.0
    %2827 = vmatprep.subr.mxu0 0.0
    %2828 = vmatpush2.msra.mxu0 0.0
    %2829 = vmatprep.mubr.f32.mxu0 0.0
    %2830 = vmatmul.mubr.f32.gmra.mxu0 %v2763
    %v2831 = vpop.f32.mrf.mxu0
    %v2832 = vadd.f32 %v2641, %v2831
    %v2833 = vpop.f32.mrf.mxu0
    %2834 = vdwg.mxu0
    %v2837 = vunpack.c.l.s4 1966171168
    %v2838 = vunpack.c.0.s8 %v2837
    %v2839 = vlaneseq
    %v2840 = vshrl.u32 %v2839, 7
    %v2841 = vsub.s32 %v2838, %v2840
    %v2842 = vrot.slane %v2832, %v2841
    %v2843 = vcombine.high %v2842, %v2842
    %v2845 = vunpack.c.l.s4 1966171168
    %v2846 = vunpack.c.0.s8 %v2845
    %v2847 = vlaneseq
    %v2848 = vshrl.u32 %v2847, 7
    %v2849 = vsub.s32 %v2846, %v2848
    %v2850 = vrot.slane %v2842, %v2849
    %v2852 = vunpack.c.l.s4 1966171168
    %v2853 = vunpack.c.0.s8 %v2852
    %v2854 = vlaneseq
    %v2855 = vshrl.u32 %v2854, 7
    %v2856 = vsub.s32 %v2853, %v2855
    %v2857 = vrot.slane %v2843, %v2856
    %v2858 = vsel %vm266, %v2850, 0
    %v2861 = vsel %vm266, %v2741, 0
    %v2864 = vsel %vm266, %v2746, 0
    %2866 = vmatprep.subr.mxu0 0.0
    %2867 = vmatpush1.xpose.msra.mxu0 0.0
    %2868 = vmatprep.subr.mxu0 0.0
    %2869 = vmatpush1.xpose.msra.mxu0 0.0
    %2870 = vmatprep.subr.mxu0 0.0
    %2871 = vmatpush1.xpose.msra.mxu0 0.0
    %2872 = vmatprep.subr.mxu0 0.0
    %2873 = vmatpush1.xpose.msra.mxu0 0.0
    %2874 = vmatprep.subr.mxu0 0.0
    %2875 = vmatpush1.xpose.msra.mxu0 0.0
    %2876 = vmatprep.subr.mxu0 0.0
    %2877 = vmatpush1.xpose.msra.mxu0 0.0
    %2878 = vmatprep.subr.mxu0 0.0
    %2879 = vmatpush1.xpose.msra.mxu0 0.0
    %2880 = vmatprep.subr.mxu0 0.0
    %2881 = vmatpush1.xpose.msra.mxu0 0.0
    %2882 = vmatprep.subr.mxu0 0.0
    %2883 = vmatpush1.xpose.msra.mxu0 0.0
    %2884 = vmatprep.subr.mxu0 0.0
    %2885 = vmatpush1.xpose.msra.mxu0 0.0
    %2886 = vmatprep.subr.mxu0 0.0
    %2887 = vmatpush1.xpose.msra.mxu0 0.0
    %2888 = vmatprep.subr.mxu0 0.0
    %2889 = vmatpush1.xpose.msra.mxu0 0.0
    %2890 = vmatprep.subr.mxu0 0.0
    %2891 = vmatpush1.xpose.msra.mxu0 0.0
    %2892 = vmatprep.subr.mxu0 0.0
    %2893 = vmatpush1.xpose.msra.mxu0 0.0
    %2894 = vmatprep.subr.mxu0 0.0
    %2895 = vmatpush1.xpose.msra.mxu0 %v2864
    %2896 = vmatprep.subr.mxu0 0.0
    %2897 = vmatpush1.xpose.msra.mxu0 %v2861
    %2898 = vmatprep.subr.mxu0 0.0
    %2899 = vmatpush2.xpose.msra.mxu0 0.0
    %2900 = vmatprep.subr.mxu0 0.0
    %2901 = vmatpush2.xpose.msra.mxu0 0.0
    %2902 = vmatprep.subr.mxu0 0.0
    %2903 = vmatpush2.xpose.msra.mxu0 0.0
    %2904 = vmatprep.subr.mxu0 0.0
    %2905 = vmatpush2.xpose.msra.mxu0 0.0
    %2906 = vmatprep.subr.mxu0 0.0
    %2907 = vmatpush2.xpose.msra.mxu0 0.0
    %2908 = vmatprep.subr.mxu0 0.0
    %2909 = vmatpush2.xpose.msra.mxu0 0.0
    %2910 = vmatprep.subr.mxu0 0.0
    %2911 = vmatpush2.xpose.msra.mxu0 0.0
    %2912 = vmatprep.subr.mxu0 0.0
    %2913 = vmatpush2.xpose.msra.mxu0 0.0
    %2914 = vmatprep.subr.mxu0 0.0
    %2915 = vmatpush2.xpose.msra.mxu0 0.0
    %2916 = vmatprep.subr.mxu0 0.0
    %2917 = vmatpush2.xpose.msra.mxu0 0.0
    %2918 = vmatprep.subr.mxu0 0.0
    %2919 = vmatpush2.xpose.msra.mxu0 0.0
    %2920 = vmatprep.subr.mxu0 0.0
    %2921 = vmatpush2.xpose.msra.mxu0 0.0
    %2922 = vmatprep.subr.mxu0 0.0
    %2923 = vmatpush2.xpose.msra.mxu0 0.0
    %2924 = vmatprep.subr.mxu0 0.0
    %2925 = vmatpush2.xpose.msra.mxu0 0.0
    %2926 = vmatprep.subr.mxu0 0.0
    %2927 = vmatpush2.xpose.msra.mxu0 0.0
    %2928 = vmatprep.subr.mxu0 0.0
    %2929 = vmatpush2.xpose.msra.mxu0 0.0
    %2930 = vmatprep.mubr.f32.mxu0 0.0
    %2931 = vmatmul.mubr.f32.gmra.mxu0 %v2858
    %v2932 = vpop.f32.mrf.mxu0
    %v2933 = vadd.f32 0.0, %v2932
    %v2934 = vpop.f32.mrf.mxu0
    %2935 = vdwg.mxu0
    %v2936 = vsel %vm266, %v2857, 0
    %v2939 = vsel %vm266, %v2751, 0
    %v2942 = vsel %vm266, %v2756, 0
    %2944 = vmatprep.subr.mxu0 0.0
    %2945 = vmatpush1.xpose.msra.mxu0 0.0
    %2946 = vmatprep.subr.mxu0 0.0
    %2947 = vmatpush1.xpose.msra.mxu0 0.0
    %2948 = vmatprep.subr.mxu0 0.0
    %2949 = vmatpush1.xpose.msra.mxu0 0.0
    %2950 = vmatprep.subr.mxu0 0.0
    %2951 = vmatpush1.xpose.msra.mxu0 0.0
    %2952 = vmatprep.subr.mxu0 0.0
    %2953 = vmatpush1.xpose.msra.mxu0 0.0
    %2954 = vmatprep.subr.mxu0 0.0
    %2955 = vmatpush1.xpose.msra.mxu0 0.0
    %2956 = vmatprep.subr.mxu0 0.0
    %2957 = vmatpush1.xpose.msra.mxu0 0.0
    %2958 = vmatprep.subr.mxu0 0.0
    %2959 = vmatpush1.xpose.msra.mxu0 0.0
    %2960 = vmatprep.subr.mxu0 0.0
    %2961 = vmatpush1.xpose.msra.mxu0 0.0
    %2962 = vmatprep.subr.mxu0 0.0
    %2963 = vmatpush1.xpose.msra.mxu0 0.0
    %2964 = vmatprep.subr.mxu0 0.0
    %2965 = vmatpush1.xpose.msra.mxu0 0.0
    %2966 = vmatprep.subr.mxu0 0.0
    %2967 = vmatpush1.xpose.msra.mxu0 0.0
    %2968 = vmatprep.subr.mxu0 0.0
    %2969 = vmatpush1.xpose.msra.mxu0 0.0
    %2970 = vmatprep.subr.mxu0 0.0
    %2971 = vmatpush1.xpose.msra.mxu0 0.0
    %2972 = vmatprep.subr.mxu0 0.0
    %2973 = vmatpush1.xpose.msra.mxu0 %v2942
    %2974 = vmatprep.subr.mxu0 0.0
    %2975 = vmatpush1.xpose.msra.mxu0 %v2939
    %2976 = vmatprep.subr.mxu0 0.0
    %2977 = vmatpush2.xpose.msra.mxu0 0.0
    %2978 = vmatprep.subr.mxu0 0.0
    %2979 = vmatpush2.xpose.msra.mxu0 0.0
    %2980 = vmatprep.subr.mxu0 0.0
    %2981 = vmatpush2.xpose.msra.mxu0 0.0
    %2982 = vmatprep.subr.mxu0 0.0
    %2983 = vmatpush2.xpose.msra.mxu0 0.0
    %2984 = vmatprep.subr.mxu0 0.0
    %2985 = vmatpush2.xpose.msra.mxu0 0.0
    %2986 = vmatprep.subr.mxu0 0.0
    %2987 = vmatpush2.xpose.msra.mxu0 0.0
    %2988 = vmatprep.subr.mxu0 0.0
    %2989 = vmatpush2.xpose.msra.mxu0 0.0
    %2990 = vmatprep.subr.mxu0 0.0
    %2991 = vmatpush2.xpose.msra.mxu0 0.0
    %2992 = vmatprep.subr.mxu0 0.0
    %2993 = vmatpush2.xpose.msra.mxu0 0.0
    %2994 = vmatprep.subr.mxu0 0.0
    %2995 = vmatpush2.xpose.msra.mxu0 0.0
    %2996 = vmatprep.subr.mxu0 0.0
    %2997 = vmatpush2.xpose.msra.mxu0 0.0
    %2998 = vmatprep.subr.mxu0 0.0
    %2999 = vmatpush2.xpose.msra.mxu0 0.0
    %3000 = vmatprep.subr.mxu0 0.0
    %3001 = vmatpush2.xpose.msra.mxu0 0.0
    %3002 = vmatprep.subr.mxu0 0.0
    %3003 = vmatpush2.xpose.msra.mxu0 0.0
    %3004 = vmatprep.subr.mxu0 0.0
    %3005 = vmatpush2.xpose.msra.mxu0 0.0
    %3006 = vmatprep.subr.mxu0 0.0
    %3007 = vmatpush2.xpose.msra.mxu0 0.0
    %3008 = vmatprep.mubr.f32.mxu0 0.0
    %3009 = vmatmul.mubr.f32.gmra.mxu0 %v2936
    %v3010 = vpop.f32.mrf.mxu0
    %v3011 = vadd.f32 0.0, %v3010
    %v3012 = vpop.f32.mrf.mxu0
    %3013 = vdwg.mxu0
    %vm3014 = vcmask 122880
    %v3015 = vsel %vm3014, %v2933, -inf
    %3016 = vmax.xlane.f32.xlu0 %v3015
    %v3017 = vpop.xlane.xlu0 %3016
    %v3018 = vsel %vm3014, %v3011, -inf
    %3019 = vmax.xlane.f32.xlu0 %v3018
    %v3020 = vpop.xlane.xlu0 %3019
    %v3021 = vsub.f32 %v2933, %v3017
    %v3022 = vsub.f32 %v3011, %v3020
    %v3023 = vmul.f32 %v3021, 1.442695
    %v3024 = vpow.pop %v3023
    %v3025 = vmul.f32 %v3022, 1.442695
    %v3026 = vpow.pop %v3025
    %v3027 = vsel %vm3014, %v3024, 0.0
    %3028 = vadd.xlane.f32.xlu0 %v3027
    %v3029 = vpop.xlane.xlu0 %3028
    %v3030 = vsel %vm3014, %v3026, 0.0
    %3031 = vadd.xlane.f32.xlu0 %v3030
    %v3032 = vpop.xlane.xlu0 %3031
    %v3033 = vrcp.pop %v3029
    %v3034 = vrcp.pop %v3032
    %v3035 = vmul.f32 %v3024, %v3033
    %v3036 = vmul.f32 %v3026, %v3034
    %3037 = vrot.lane.b32.xlu0 %v2741, 96
    %v3038 = vpop.permute.xlu0 %3037
    %3039 = vrot.lane.b32.xlu0 %v2746, 96
    %v3040 = vpop.permute.xlu0 %3039
    %v3044 = vsel %vm439, %v3035, 0
    %3046 = vmatprep.subr.mxu0 0.0
    %3047 = vmatpush1.msra.mxu0 0.0
    %3048 = vmatprep.subr.mxu0 0.0
    %3049 = vmatpush1.msra.mxu0 0.0
    %3050 = vmatprep.subr.mxu0 0.0
    %3051 = vmatpush1.msra.mxu0 0.0
    %3052 = vmatprep.subr.mxu0 0.0
    %3053 = vmatpush1.msra.mxu0 0.0
    %3054 = vmatprep.subr.mxu0 0.0
    %3055 = vmatpush1.msra.mxu0 0.0
    %3056 = vmatprep.subr.mxu0 0.0
    %3057 = vmatpush1.msra.mxu0 0.0
    %3058 = vmatprep.subr.mxu0 0.0
    %3059 = vmatpush1.msra.mxu0 0.0
    %3060 = vmatprep.subr.mxu0 0.0
    %3061 = vmatpush1.msra.mxu0 0.0
    %3062 = vmatprep.subr.mxu0 0.0
    %3063 = vmatpush1.msra.mxu0 0.0
    %3064 = vmatprep.subr.mxu0 0.0
    %3065 = vmatpush1.msra.mxu0 0.0
    %3066 = vmatprep.subr.mxu0 0.0
    %3067 = vmatpush1.msra.mxu0 0.0
    %3068 = vmatprep.subr.mxu0 0.0
    %3069 = vmatpush1.msra.mxu0 0.0
    %3070 = vmatprep.subr.mxu0 0.0
    %3071 = vmatpush1.msra.mxu0 0.0
    %3072 = vmatprep.subr.mxu0 0.0
    %3073 = vmatpush1.msra.mxu0 0.0
    %3074 = vmatprep.subr.mxu0 0.0
    %3075 = vmatpush1.msra.mxu0 %v3040
    %3076 = vmatprep.subr.mxu0 0.0
    %3077 = vmatpush1.msra.mxu0 %v3038
    %3078 = vmatprep.subr.mxu0 0.0
    %3079 = vmatpush2.msra.mxu0 0.0
    %3080 = vmatprep.subr.mxu0 0.0
    %3081 = vmatpush2.msra.mxu0 0.0
    %3082 = vmatprep.subr.mxu0 0.0
    %3083 = vmatpush2.msra.mxu0 0.0
    %3084 = vmatprep.subr.mxu0 0.0
    %3085 = vmatpush2.msra.mxu0 0.0
    %3086 = vmatprep.subr.mxu0 0.0
    %3087 = vmatpush2.msra.mxu0 0.0
    %3088 = vmatprep.subr.mxu0 0.0
    %3089 = vmatpush2.msra.mxu0 0.0
    %3090 = vmatprep.subr.mxu0 0.0
    %3091 = vmatpush2.msra.mxu0 0.0
    %3092 = vmatprep.subr.mxu0 0.0
    %3093 = vmatpush2.msra.mxu0 0.0
    %3094 = vmatprep.subr.mxu0 0.0
    %3095 = vmatpush2.msra.mxu0 0.0
    %3096 = vmatprep.subr.mxu0 0.0
    %3097 = vmatpush2.msra.mxu0 0.0
    %3098 = vmatprep.subr.mxu0 0.0
    %3099 = vmatpush2.msra.mxu0 0.0
    %3100 = vmatprep.subr.mxu0 0.0
    %3101 = vmatpush2.msra.mxu0 0.0
    %3102 = vmatprep.subr.mxu0 0.0
    %3103 = vmatpush2.msra.mxu0 0.0
    %3104 = vmatprep.subr.mxu0 0.0
    %3105 = vmatpush2.msra.mxu0 0.0
    %3106 = vmatprep.subr.mxu0 0.0
    %3107 = vmatpush2.msra.mxu0 0.0
    %3108 = vmatprep.subr.mxu0 0.0
    %3109 = vmatpush2.msra.mxu0 0.0
    %3110 = vmatprep.mubr.f32.mxu0 0.0
    %3111 = vmatmul.mubr.f32.gmra.mxu0 %v3044
    %v3112 = vpop.f32.mrf.mxu0
    %v3113 = vadd.f32 0.0, %v3112
    %v3114 = vpop.f32.mrf.mxu0
    %3115 = vdwg.mxu0
    %3116 = vrot.lane.b32.xlu0 %v2751, 96
    %v3117 = vpop.permute.xlu0 %3116
    %3118 = vrot.lane.b32.xlu0 %v2756, 96
    %v3119 = vpop.permute.xlu0 %3118
    %v3123 = vsel %vm439, %v3036, 0
    %3125 = vmatprep.subr.mxu0 0.0
    %3126 = vmatpush1.msra.mxu0 0.0
    %3127 = vmatprep.subr.mxu0 0.0
    %3128 = vmatpush1.msra.mxu0 0.0
    %3129 = vmatprep.subr.mxu0 0.0
    %3130 = vmatpush1.msra.mxu0 0.0
    %3131 = vmatprep.subr.mxu0 0.0
    %3132 = vmatpush1.msra.mxu0 0.0
    %3133 = vmatprep.subr.mxu0 0.0
    %3134 = vmatpush1.msra.mxu0 0.0
    %3135 = vmatprep.subr.mxu0 0.0
    %3136 = vmatpush1.msra.mxu0 0.0
    %3137 = vmatprep.subr.mxu0 0.0
    %3138 = vmatpush1.msra.mxu0 0.0
    %3139 = vmatprep.subr.mxu0 0.0
    %3140 = vmatpush1.msra.mxu0 0.0
    %3141 = vmatprep.subr.mxu0 0.0
    %3142 = vmatpush1.msra.mxu0 0.0
    %3143 = vmatprep.subr.mxu0 0.0
    %3144 = vmatpush1.msra.mxu0 0.0
    %3145 = vmatprep.subr.mxu0 0.0
    %3146 = vmatpush1.msra.mxu0 0.0
    %3147 = vmatprep.subr.mxu0 0.0
    %3148 = vmatpush1.msra.mxu0 0.0
    %3149 = vmatprep.subr.mxu0 0.0
    %3150 = vmatpush1.msra.mxu0 0.0
    %3151 = vmatprep.subr.mxu0 0.0
    %3152 = vmatpush1.msra.mxu0 0.0
    %3153 = vmatprep.subr.mxu0 0.0
    %3154 = vmatpush1.msra.mxu0 %v3119
    %3155 = vmatprep.subr.mxu0 0.0
    %3156 = vmatpush1.msra.mxu0 %v3117
    %3157 = vmatprep.subr.mxu0 0.0
    %3158 = vmatpush2.msra.mxu0 0.0
    %3159 = vmatprep.subr.mxu0 0.0
    %3160 = vmatpush2.msra.mxu0 0.0
    %3161 = vmatprep.subr.mxu0 0.0
    %3162 = vmatpush2.msra.mxu0 0.0
    %3163 = vmatprep.subr.mxu0 0.0
    %3164 = vmatpush2.msra.mxu0 0.0
    %3165 = vmatprep.subr.mxu0 0.0
    %3166 = vmatpush2.msra.mxu0 0.0
    %3167 = vmatprep.subr.mxu0 0.0
    %3168 = vmatpush2.msra.mxu0 0.0
    %3169 = vmatprep.subr.mxu0 0.0
    %3170 = vmatpush2.msra.mxu0 0.0
    %3171 = vmatprep.subr.mxu0 0.0
    %3172 = vmatpush2.msra.mxu0 0.0
    %3173 = vmatprep.subr.mxu0 0.0
    %3174 = vmatpush2.msra.mxu0 0.0
    %3175 = vmatprep.subr.mxu0 0.0
    %3176 = vmatpush2.msra.mxu0 0.0
    %3177 = vmatprep.subr.mxu0 0.0
    %3178 = vmatpush2.msra.mxu0 0.0
    %3179 = vmatprep.subr.mxu0 0.0
    %3180 = vmatpush2.msra.mxu0 0.0
    %3181 = vmatprep.subr.mxu0 0.0
    %3182 = vmatpush2.msra.mxu0 0.0
    %3183 = vmatprep.subr.mxu0 0.0
    %3184 = vmatpush2.msra.mxu0 0.0
    %3185 = vmatprep.subr.mxu0 0.0
    %3186 = vmatpush2.msra.mxu0 0.0
    %3187 = vmatprep.subr.mxu0 0.0
    %3188 = vmatpush2.msra.mxu0 0.0
    %3189 = vmatprep.mubr.f32.mxu0 0.0
    %3190 = vmatmul.mubr.f32.gmra.mxu0 %v3123
    %v3191 = vpop.f32.mrf.mxu0
    %v3192 = vadd.f32 0.0, %v3191
    %v3193 = vpop.f32.mrf.mxu0
    %3194 = vdwg.mxu0
    %v3195 = vlaneseq
    %v3196 = vshrl.u32 %v3195, 7
    %v3197 = vsub.s32 0, %v3196
    %v3198 = vrot.slane %v2850, %v3197
    %3199 = vrot.lane.b32.xlu0 %v3198, 120
    %v3200 = vpop.permute.xlu0 %3199
    %3201 = vrot.lane.b32.xlu0 %v2741, 120
    %v3202 = vpop.permute.xlu0 %3201
    %3203 = vrot.lane.b32.xlu0 %v2746, 120
    %v3204 = vpop.permute.xlu0 %3203
    %v3205 = vsel %vm266, %v3200, 0
    %v3207 = vsel %vm266, %v3202, 0
    %v3209 = vsel %vm266, %v3204, 0
    %3211 = vmatprep.subr.mxu0 0.0
    %3212 = vmatpush1.xpose.msra.mxu0 0.0
    %3213 = vmatprep.subr.mxu0 0.0
    %3214 = vmatpush1.xpose.msra.mxu0 0.0
    %3215 = vmatprep.subr.mxu0 0.0
    %3216 = vmatpush1.xpose.msra.mxu0 0.0
    %3217 = vmatprep.subr.mxu0 0.0
    %3218 = vmatpush1.xpose.msra.mxu0 0.0
    %3219 = vmatprep.subr.mxu0 0.0
    %3220 = vmatpush1.xpose.msra.mxu0 0.0
    %3221 = vmatprep.subr.mxu0 0.0
    %3222 = vmatpush1.xpose.msra.mxu0 0.0
    %3223 = vmatprep.subr.mxu0 0.0
    %3224 = vmatpush1.xpose.msra.mxu0 0.0
    %3225 = vmatprep.subr.mxu0 0.0
    %3226 = vmatpush1.xpose.msra.mxu0 0.0
    %3227 = vmatprep.subr.mxu0 0.0
    %3228 = vmatpush1.xpose.msra.mxu0 0.0
    %3229 = vmatprep.subr.mxu0 0.0
    %3230 = vmatpush1.xpose.msra.mxu0 0.0
    %3231 = vmatprep.subr.mxu0 0.0
    %3232 = vmatpush1.xpose.msra.mxu0 0.0
    %3233 = vmatprep.subr.mxu0 0.0
    %3234 = vmatpush1.xpose.msra.mxu0 0.0
    %3235 = vmatprep.subr.mxu0 0.0
    %3236 = vmatpush1.xpose.msra.mxu0 0.0
    %3237 = vmatprep.subr.mxu0 0.0
    %3238 = vmatpush1.xpose.msra.mxu0 0.0
    %3239 = vmatprep.subr.mxu0 0.0
    %3240 = vmatpush1.xpose.msra.mxu0 %v3209
    %3241 = vmatprep.subr.mxu0 0.0
    %3242 = vmatpush1.xpose.msra.mxu0 %v3207
    %3243 = vmatprep.subr.mxu0 0.0
    %3244 = vmatpush2.xpose.msra.mxu0 0.0
    %3245 = vmatprep.subr.mxu0 0.0
    %3246 = vmatpush2.xpose.msra.mxu0 0.0
    %3247 = vmatprep.subr.mxu0 0.0
    %3248 = vmatpush2.xpose.msra.mxu0 0.0
    %3249 = vmatprep.subr.mxu0 0.0
    %3250 = vmatpush2.xpose.msra.mxu0 0.0
    %3251 = vmatprep.subr.mxu0 0.0
    %3252 = vmatpush2.xpose.msra.mxu0 0.0
    %3253 = vmatprep.subr.mxu0 0.0
    %3254 = vmatpush2.xpose.msra.mxu0 0.0
    %3255 = vmatprep.subr.mxu0 0.0
    %3256 = vmatpush2.xpose.msra.mxu0 0.0
    %3257 = vmatprep.subr.mxu0 0.0
    %3258 = vmatpush2.xpose.msra.mxu0 0.0
    %3259 = vmatprep.subr.mxu0 0.0
    %3260 = vmatpush2.xpose.msra.mxu0 0.0
    %3261 = vmatprep.subr.mxu0 0.0
    %3262 = vmatpush2.xpose.msra.mxu0 0.0
    %3263 = vmatprep.subr.mxu0 0.0
    %3264 = vmatpush2.xpose.msra.mxu0 0.0
    %3265 = vmatprep.subr.mxu0 0.0
    %3266 = vmatpush2.xpose.msra.mxu0 0.0
    %3267 = vmatprep.subr.mxu0 0.0
    %3268 = vmatpush2.xpose.msra.mxu0 0.0
    %3269 = vmatprep.subr.mxu0 0.0
    %3270 = vmatpush2.xpose.msra.mxu0 0.0
    %3271 = vmatprep.subr.mxu0 0.0
    %3272 = vmatpush2.xpose.msra.mxu0 0.0
    %3273 = vmatprep.subr.mxu0 0.0
    %3274 = vmatpush2.xpose.msra.mxu0 0.0
    %3275 = vmatprep.mubr.f32.mxu0 0.0
    %3276 = vmatmul.mubr.f32.gmra.mxu0 %v3205
    %v3277 = vpop.f32.mrf.mxu0
    %v3278 = vadd.f32 0.0, %v3277
    %v3279 = vpop.f32.mrf.mxu0
    %3280 = vdwg.mxu0
    %v3281 = vlaneseq
    %v3282 = vshrl.u32 %v3281, 7
    %v3283 = vsub.s32 0, %v3282
    %v3284 = vrot.slane %v2857, %v3283
    %3285 = vrot.lane.b32.xlu0 %v3284, 120
    %v3286 = vpop.permute.xlu0 %3285
    %3287 = vrot.lane.b32.xlu0 %v2751, 120
    %v3288 = vpop.permute.xlu0 %3287
    %3289 = vrot.lane.b32.xlu0 %v2756, 120
    %v3290 = vpop.permute.xlu0 %3289
    %v3291 = vsel %vm266, %v3286, 0
    %v3293 = vsel %vm266, %v3288, 0
    %v3295 = vsel %vm266, %v3290, 0
    %3297 = vmatprep.subr.mxu0 0.0
    %3298 = vmatpush1.xpose.msra.mxu0 0.0
    %3299 = vmatprep.subr.mxu0 0.0
    %3300 = vmatpush1.xpose.msra.mxu0 0.0
    %3301 = vmatprep.subr.mxu0 0.0
    %3302 = vmatpush1.xpose.msra.mxu0 0.0
    %3303 = vmatprep.subr.mxu0 0.0
    %3304 = vmatpush1.xpose.msra.mxu0 0.0
    %3305 = vmatprep.subr.mxu0 0.0
    %3306 = vmatpush1.xpose.msra.mxu0 0.0
    %3307 = vmatprep.subr.mxu0 0.0
    %3308 = vmatpush1.xpose.msra.mxu0 0.0
    %3309 = vmatprep.subr.mxu0 0.0
    %3310 = vmatpush1.xpose.msra.mxu0 0.0
    %3311 = vmatprep.subr.mxu0 0.0
    %3312 = vmatpush1.xpose.msra.mxu0 0.0
    %3313 = vmatprep.subr.mxu0 0.0
    %3314 = vmatpush1.xpose.msra.mxu0 0.0
    %3315 = vmatprep.subr.mxu0 0.0
    %3316 = vmatpush1.xpose.msra.mxu0 0.0
    %3317 = vmatprep.subr.mxu0 0.0
    %3318 = vmatpush1.xpose.msra.mxu0 0.0
    %3319 = vmatprep.subr.mxu0 0.0
    %3320 = vmatpush1.xpose.msra.mxu0 0.0
    %3321 = vmatprep.subr.mxu0 0.0
    %3322 = vmatpush1.xpose.msra.mxu0 0.0
    %3323 = vmatprep.subr.mxu0 0.0
    %3324 = vmatpush1.xpose.msra.mxu0 0.0
    %3325 = vmatprep.subr.mxu0 0.0
    %3326 = vmatpush1.xpose.msra.mxu0 %v3295
    %3327 = vmatprep.subr.mxu0 0.0
    %3328 = vmatpush1.xpose.msra.mxu0 %v3293
    %3329 = vmatprep.subr.mxu0 0.0
    %3330 = vmatpush2.xpose.msra.mxu0 0.0
    %3331 = vmatprep.subr.mxu0 0.0
    %3332 = vmatpush2.xpose.msra.mxu0 0.0
    %3333 = vmatprep.subr.mxu0 0.0
    %3334 = vmatpush2.xpose.msra.mxu0 0.0
    %3335 = vmatprep.subr.mxu0 0.0
    %3336 = vmatpush2.xpose.msra.mxu0 0.0
    %3337 = vmatprep.subr.mxu0 0.0
    %3338 = vmatpush2.xpose.msra.mxu0 0.0
    %3339 = vmatprep.subr.mxu0 0.0
    %3340 = vmatpush2.xpose.msra.mxu0 0.0
    %3341 = vmatprep.subr.mxu0 0.0
    %3342 = vmatpush2.xpose.msra.mxu0 0.0
    %3343 = vmatprep.subr.mxu0 0.0
    %3344 = vmatpush2.xpose.msra.mxu0 0.0
    %3345 = vmatprep.subr.mxu0 0.0
    %3346 = vmatpush2.xpose.msra.mxu0 0.0
    %3347 = vmatprep.subr.mxu0 0.0
    %3348 = vmatpush2.xpose.msra.mxu0 0.0
    %3349 = vmatprep.subr.mxu0 0.0
    %3350 = vmatpush2.xpose.msra.mxu0 0.0
    %3351 = vmatprep.subr.mxu0 0.0
    %3352 = vmatpush2.xpose.msra.mxu0 0.0
    %3353 = vmatprep.subr.mxu0 0.0
    %3354 = vmatpush2.xpose.msra.mxu0 0.0
    %3355 = vmatprep.subr.mxu0 0.0
    %3356 = vmatpush2.xpose.msra.mxu0 0.0
    %3357 = vmatprep.subr.mxu0 0.0
    %3358 = vmatpush2.xpose.msra.mxu0 0.0
    %3359 = vmatprep.subr.mxu0 0.0
    %3360 = vmatpush2.xpose.msra.mxu0 0.0
    %3361 = vmatprep.mubr.f32.mxu0 0.0
    %3362 = vmatmul.mubr.f32.gmra.mxu0 %v3291
    %v3363 = vpop.f32.mrf.mxu0
    %v3364 = vadd.f32 0.0, %v3363
    %v3365 = vpop.f32.mrf.mxu0
    %3366 = vdwg.mxu0
    %v3367 = vsel %vm3014, %v3278, -inf
    %3368 = vmax.xlane.f32.xlu0 %v3367
    %v3369 = vpop.xlane.xlu0 %3368
    %v3370 = vsel %vm3014, %v3364, -inf
    %3371 = vmax.xlane.f32.xlu0 %v3370
    %v3372 = vpop.xlane.xlu0 %3371
    %v3373 = vsub.f32 %v3278, %v3369
    %v3374 = vsub.f32 %v3364, %v3372
    %v3375 = vmul.f32 %v3373, 1.442695
    %v3376 = vpow.pop %v3375
    %v3377 = vmul.f32 %v3374, 1.442695
    %v3378 = vpow.pop %v3377
    %v3379 = vsel %vm3014, %v3376, 0.0
    %3380 = vadd.xlane.f32.xlu0 %v3379
    %v3381 = vpop.xlane.xlu0 %3380
    %v3382 = vsel %vm3014, %v3378, 0.0
    %3383 = vadd.xlane.f32.xlu0 %v3382
    %v3384 = vpop.xlane.xlu0 %3383
    %v3385 = vrcp.pop %v3381
    %v3386 = vrcp.pop %v3384
    %v3387 = vmul.f32 %v3376, %v3385
    %v3388 = vmul.f32 %v3378, %v3386
    %3389 = vrot.lane.b32.xlu0 %v2741, 88
    %v3390 = vpop.permute.xlu0 %3389
    %3391 = vrot.lane.b32.xlu0 %v2746, 88
    %v3392 = vpop.permute.xlu0 %3391
    %v3396 = vsel %vm439, %v3387, 0
    %3398 = vmatprep.subr.mxu0 0.0
    %3399 = vmatpush1.msra.mxu0 0.0
    %3400 = vmatprep.subr.mxu0 0.0
    %3401 = vmatpush1.msra.mxu0 0.0
    %3402 = vmatprep.subr.mxu0 0.0
    %3403 = vmatpush1.msra.mxu0 0.0
    %3404 = vmatprep.subr.mxu0 0.0
    %3405 = vmatpush1.msra.mxu0 0.0
    %3406 = vmatprep.subr.mxu0 0.0
    %3407 = vmatpush1.msra.mxu0 0.0
    %3408 = vmatprep.subr.mxu0 0.0
    %3409 = vmatpush1.msra.mxu0 0.0
    %3410 = vmatprep.subr.mxu0 0.0
    %3411 = vmatpush1.msra.mxu0 0.0
    %3412 = vmatprep.subr.mxu0 0.0
    %3413 = vmatpush1.msra.mxu0 0.0
    %3414 = vmatprep.subr.mxu0 0.0
    %3415 = vmatpush1.msra.mxu0 0.0
    %3416 = vmatprep.subr.mxu0 0.0
    %3417 = vmatpush1.msra.mxu0 0.0
    %3418 = vmatprep.subr.mxu0 0.0
    %3419 = vmatpush1.msra.mxu0 0.0
    %3420 = vmatprep.subr.mxu0 0.0
    %3421 = vmatpush1.msra.mxu0 0.0
    %3422 = vmatprep.subr.mxu0 0.0
    %3423 = vmatpush1.msra.mxu0 0.0
    %3424 = vmatprep.subr.mxu0 0.0
    %3425 = vmatpush1.msra.mxu0 0.0
    %3426 = vmatprep.subr.mxu0 0.0
    %3427 = vmatpush1.msra.mxu0 %v3392
    %3428 = vmatprep.subr.mxu0 0.0
    %3429 = vmatpush1.msra.mxu0 %v3390
    %3430 = vmatprep.subr.mxu0 0.0
    %3431 = vmatpush2.msra.mxu0 0.0
    %3432 = vmatprep.subr.mxu0 0.0
    %3433 = vmatpush2.msra.mxu0 0.0
    %3434 = vmatprep.subr.mxu0 0.0
    %3435 = vmatpush2.msra.mxu0 0.0
    %3436 = vmatprep.subr.mxu0 0.0
    %3437 = vmatpush2.msra.mxu0 0.0
    %3438 = vmatprep.subr.mxu0 0.0
    %3439 = vmatpush2.msra.mxu0 0.0
    %3440 = vmatprep.subr.mxu0 0.0
    %3441 = vmatpush2.msra.mxu0 0.0
    %3442 = vmatprep.subr.mxu0 0.0
    %3443 = vmatpush2.msra.mxu0 0.0
    %3444 = vmatprep.subr.mxu0 0.0
    %3445 = vmatpush2.msra.mxu0 0.0
    %3446 = vmatprep.subr.mxu0 0.0
    %3447 = vmatpush2.msra.mxu0 0.0
    %3448 = vmatprep.subr.mxu0 0.0
    %3449 = vmatpush2.msra.mxu0 0.0
    %3450 = vmatprep.subr.mxu0 0.0
    %3451 = vmatpush2.msra.mxu0 0.0
    %3452 = vmatprep.subr.mxu0 0.0
    %3453 = vmatpush2.msra.mxu0 0.0
    %3454 = vmatprep.subr.mxu0 0.0
    %3455 = vmatpush2.msra.mxu0 0.0
    %3456 = vmatprep.subr.mxu0 0.0
    %3457 = vmatpush2.msra.mxu0 0.0
    %3458 = vmatprep.subr.mxu0 0.0
    %3459 = vmatpush2.msra.mxu0 0.0
    %3460 = vmatprep.subr.mxu0 0.0
    %3461 = vmatpush2.msra.mxu0 0.0
    %3462 = vmatprep.mubr.f32.mxu0 0.0
    %3463 = vmatmul.mubr.f32.gmra.mxu0 %v3396
    %v3464 = vpop.f32.mrf.mxu0
    %v3465 = vadd.f32 0.0, %v3464
    %v3466 = vpop.f32.mrf.mxu0
    %3467 = vdwg.mxu0
    %3468 = vrot.lane.b32.xlu0 %v2751, 88
    %v3469 = vpop.permute.xlu0 %3468
    %3470 = vrot.lane.b32.xlu0 %v2756, 88
    %v3471 = vpop.permute.xlu0 %3470
    %v3475 = vsel %vm439, %v3388, 0
    %3477 = vmatprep.subr.mxu0 0.0
    %3478 = vmatpush1.msra.mxu0 0.0
    %3479 = vmatprep.subr.mxu0 0.0
    %3480 = vmatpush1.msra.mxu0 0.0
    %3481 = vmatprep.subr.mxu0 0.0
    %3482 = vmatpush1.msra.mxu0 0.0
    %3483 = vmatprep.subr.mxu0 0.0
    %3484 = vmatpush1.msra.mxu0 0.0
    %3485 = vmatprep.subr.mxu0 0.0
    %3486 = vmatpush1.msra.mxu0 0.0
    %3487 = vmatprep.subr.mxu0 0.0
    %3488 = vmatpush1.msra.mxu0 0.0
    %3489 = vmatprep.subr.mxu0 0.0
    %3490 = vmatpush1.msra.mxu0 0.0
    %3491 = vmatprep.subr.mxu0 0.0
    %3492 = vmatpush1.msra.mxu0 0.0
    %3493 = vmatprep.subr.mxu0 0.0
    %3494 = vmatpush1.msra.mxu0 0.0
    %3495 = vmatprep.subr.mxu0 0.0
    %3496 = vmatpush1.msra.mxu0 0.0
    %3497 = vmatprep.subr.mxu0 0.0
    %3498 = vmatpush1.msra.mxu0 0.0
    %3499 = vmatprep.subr.mxu0 0.0
    %3500 = vmatpush1.msra.mxu0 0.0
    %3501 = vmatprep.subr.mxu0 0.0
    %3502 = vmatpush1.msra.mxu0 0.0
    %3503 = vmatprep.subr.mxu0 0.0
    %3504 = vmatpush1.msra.mxu0 0.0
    %3505 = vmatprep.subr.mxu0 0.0
    %3506 = vmatpush1.msra.mxu0 %v3471
    %3507 = vmatprep.subr.mxu0 0.0
    %3508 = vmatpush1.msra.mxu0 %v3469
    %3509 = vmatprep.subr.mxu0 0.0
    %3510 = vmatpush2.msra.mxu0 0.0
    %3511 = vmatprep.subr.mxu0 0.0
    %3512 = vmatpush2.msra.mxu0 0.0
    %3513 = vmatprep.subr.mxu0 0.0
    %3514 = vmatpush2.msra.mxu0 0.0
    %3515 = vmatprep.subr.mxu0 0.0
    %3516 = vmatpush2.msra.mxu0 0.0
    %3517 = vmatprep.subr.mxu0 0.0
    %3518 = vmatpush2.msra.mxu0 0.0
    %3519 = vmatprep.subr.mxu0 0.0
    %3520 = vmatpush2.msra.mxu0 0.0
    %3521 = vmatprep.subr.mxu0 0.0
    %3522 = vmatpush2.msra.mxu0 0.0
    %3523 = vmatprep.subr.mxu0 0.0
    %3524 = vmatpush2.msra.mxu0 0.0
    %3525 = vmatprep.subr.mxu0 0.0
    %3526 = vmatpush2.msra.mxu0 0.0
    %3527 = vmatprep.subr.mxu0 0.0
    %3528 = vmatpush2.msra.mxu0 0.0
    %3529 = vmatprep.subr.mxu0 0.0
    %3530 = vmatpush2.msra.mxu0 0.0
    %3531 = vmatprep.subr.mxu0 0.0
    %3532 = vmatpush2.msra.mxu0 0.0
    %3533 = vmatprep.subr.mxu0 0.0
    %3534 = vmatpush2.msra.mxu0 0.0
    %3535 = vmatprep.subr.mxu0 0.0
    %3536 = vmatpush2.msra.mxu0 0.0
    %3537 = vmatprep.subr.mxu0 0.0
    %3538 = vmatpush2.msra.mxu0 0.0
    %3539 = vmatprep.subr.mxu0 0.0
    %3540 = vmatpush2.msra.mxu0 0.0
    %3541 = vmatprep.mubr.f32.mxu0 0.0
    %3542 = vmatmul.mubr.f32.gmra.mxu0 %v3475
    %v3543 = vpop.f32.mrf.mxu0
    %v3544 = vadd.f32 0.0, %v3543
    %v3545 = vpop.f32.mrf.mxu0
    %3546 = vdwg.mxu0
    %v3549 = vrot.slane %v3544, 7
    %v3550 = vsel %vm2761, %v3549, %v3465
    %v3551 = vsel %vm266, %v3550, 0
    %3553 = vmatprep.subr.mxu0 0.0
    %3554 = vmatpush1.msra.mxu0 0.0
    %3555 = vmatprep.subr.mxu0 0.0
    %3556 = vmatpush1.msra.mxu0 0.0
    %3557 = vmatprep.subr.mxu0 0.0
    %3558 = vmatpush1.msra.mxu0 0.0
    %3559 = vmatprep.subr.mxu0 0.0
    %3560 = vmatpush1.msra.mxu0 0.0
    %3561 = vmatprep.subr.mxu0 0.0
    %3562 = vmatpush1.msra.mxu0 0.0
    %3563 = vmatprep.subr.mxu0 0.0
    %3564 = vmatpush1.msra.mxu0 0.0
    %3565 = vmatprep.subr.mxu0 0.0
    %3566 = vmatpush1.msra.mxu0 0.0
    %3567 = vmatprep.subr.mxu0 0.0
    %3568 = vmatpush1.msra.mxu0 0.0
    %3569 = vmatprep.subr.mxu0 0.0
    %3570 = vmatpush1.msra.mxu0 0.0
    %3571 = vmatprep.subr.mxu0 0.0
    %3572 = vmatpush1.msra.mxu0 0.0
    %3573 = vmatprep.subr.mxu0 0.0
    %3574 = vmatpush1.msra.mxu0 0.0
    %3575 = vmatprep.subr.mxu0 0.0
    %3576 = vmatpush1.msra.mxu0 0.0
    %3577 = vmatprep.subr.mxu0 0.0
    %3578 = vmatpush1.msra.mxu0 0.0
    %3579 = vmatprep.subr.mxu0 0.0
    %3580 = vmatpush1.msra.mxu0 0.0
    %3581 = vmatprep.subr.mxu0 0.0
    %3582 = vmatpush1.msra.mxu0 0.0
    %3583 = vmatprep.subr.mxu0 0.0
    %3584 = vmatpush1.msra.mxu0 %v2635
    %3585 = vmatprep.subr.mxu0 0.0
    %3586 = vmatpush2.msra.mxu0 0.0
    %3587 = vmatprep.subr.mxu0 0.0
    %3588 = vmatpush2.msra.mxu0 0.0
    %3589 = vmatprep.subr.mxu0 0.0
    %3590 = vmatpush2.msra.mxu0 0.0
    %3591 = vmatprep.subr.mxu0 0.0
    %3592 = vmatpush2.msra.mxu0 0.0
    %3593 = vmatprep.subr.mxu0 0.0
    %3594 = vmatpush2.msra.mxu0 0.0
    %3595 = vmatprep.subr.mxu0 0.0
    %3596 = vmatpush2.msra.mxu0 0.0
    %3597 = vmatprep.subr.mxu0 0.0
    %3598 = vmatpush2.msra.mxu0 0.0
    %3599 = vmatprep.subr.mxu0 0.0
    %3600 = vmatpush2.msra.mxu0 0.0
    %3601 = vmatprep.subr.mxu0 0.0
    %3602 = vmatpush2.msra.mxu0 0.0
    %3603 = vmatprep.subr.mxu0 0.0
    %3604 = vmatpush2.msra.mxu0 0.0
    %3605 = vmatprep.subr.mxu0 0.0
    %3606 = vmatpush2.msra.mxu0 0.0
    %3607 = vmatprep.subr.mxu0 0.0
    %3608 = vmatpush2.msra.mxu0 0.0
    %3609 = vmatprep.subr.mxu0 0.0
    %3610 = vmatpush2.msra.mxu0 0.0
    %3611 = vmatprep.subr.mxu0 0.0
    %3612 = vmatpush2.msra.mxu0 0.0
    %3613 = vmatprep.subr.mxu0 0.0
    %3614 = vmatpush2.msra.mxu0 0.0
    %3615 = vmatprep.subr.mxu0 0.0
    %3616 = vmatpush2.msra.mxu0 0.0
    %3617 = vmatprep.mubr.f32.mxu0 0.0
    %3618 = vmatmul.mubr.f32.gmra.mxu0 %v3551
    %v3619 = vpop.f32.mrf.mxu0
    %v3620 = vadd.f32 0.0, %v3619
    %v3621 = vpop.f32.mrf.mxu0
    %3622 = vdwg.mxu0
    %v3625 = vrot.slane %v3192, 7
    %v3626 = vsel %vm2761, %v3625, %v3113
    %v3627 = vsel %vm266, %v3626, 0
    %3629 = vmatprep.subr.mxu0 0.0
    %3630 = vmatpush1.msra.mxu0 0.0
    %3631 = vmatprep.subr.mxu0 0.0
    %3632 = vmatpush1.msra.mxu0 0.0
    %3633 = vmatprep.subr.mxu0 0.0
    %3634 = vmatpush1.msra.mxu0 0.0
    %3635 = vmatprep.subr.mxu0 0.0
    %3636 = vmatpush1.msra.mxu0 0.0
    %3637 = vmatprep.subr.mxu0 0.0
    %3638 = vmatpush1.msra.mxu0 0.0
    %3639 = vmatprep.subr.mxu0 0.0
    %3640 = vmatpush1.msra.mxu0 0.0
    %3641 = vmatprep.subr.mxu0 0.0
    %3642 = vmatpush1.msra.mxu0 0.0
    %3643 = vmatprep.subr.mxu0 0.0
    %3644 = vmatpush1.msra.mxu0 0.0
    %3645 = vmatprep.subr.mxu0 0.0
    %3646 = vmatpush1.msra.mxu0 0.0
    %3647 = vmatprep.subr.mxu0 0.0
    %3648 = vmatpush1.msra.mxu0 0.0
    %3649 = vmatprep.subr.mxu0 0.0
    %3650 = vmatpush1.msra.mxu0 0.0
    %3651 = vmatprep.subr.mxu0 0.0
    %3652 = vmatpush1.msra.mxu0 0.0
    %3653 = vmatprep.subr.mxu0 0.0
    %3654 = vmatpush1.msra.mxu0 0.0
    %3655 = vmatprep.subr.mxu0 0.0
    %3656 = vmatpush1.msra.mxu0 0.0
    %3657 = vmatprep.subr.mxu0 0.0
    %3658 = vmatpush1.msra.mxu0 0.0
    %3659 = vmatprep.subr.mxu0 0.0
    %3660 = vmatpush1.msra.mxu0 %v2634
    %3661 = vmatprep.subr.mxu0 0.0
    %3662 = vmatpush2.msra.mxu0 0.0
    %3663 = vmatprep.subr.mxu0 0.0
    %3664 = vmatpush2.msra.mxu0 0.0
    %3665 = vmatprep.subr.mxu0 0.0
    %3666 = vmatpush2.msra.mxu0 0.0
    %3667 = vmatprep.subr.mxu0 0.0
    %3668 = vmatpush2.msra.mxu0 0.0
    %3669 = vmatprep.subr.mxu0 0.0
    %3670 = vmatpush2.msra.mxu0 0.0
    %3671 = vmatprep.subr.mxu0 0.0
    %3672 = vmatpush2.msra.mxu0 0.0
    %3673 = vmatprep.subr.mxu0 0.0
    %3674 = vmatpush2.msra.mxu0 0.0
    %3675 = vmatprep.subr.mxu0 0.0
    %3676 = vmatpush2.msra.mxu0 0.0
    %3677 = vmatprep.subr.mxu0 0.0
    %3678 = vmatpush2.msra.mxu0 0.0
    %3679 = vmatprep.subr.mxu0 0.0
    %3680 = vmatpush2.msra.mxu0 0.0
    %3681 = vmatprep.subr.mxu0 0.0
    %3682 = vmatpush2.msra.mxu0 0.0
    %3683 = vmatprep.subr.mxu0 0.0
    %3684 = vmatpush2.msra.mxu0 0.0
    %3685 = vmatprep.subr.mxu0 0.0
    %3686 = vmatpush2.msra.mxu0 0.0
    %3687 = vmatprep.subr.mxu0 0.0
    %3688 = vmatpush2.msra.mxu0 0.0
    %3689 = vmatprep.subr.mxu0 0.0
    %3690 = vmatpush2.msra.mxu0 0.0
    %3691 = vmatprep.subr.mxu0 0.0
    %3692 = vmatpush2.msra.mxu0 0.0
    %3693 = vmatprep.mubr.f32.mxu0 0.0
    %3694 = vmatmul.mubr.f32.gmra.mxu0 %v3627
    %v3695 = vpop.f32.mrf.mxu0
    %v3696 = vadd.f32 %v3620, %v3695
    %v3697 = vpop.f32.mrf.mxu0
    %3698 = vdwg.mxu0
    %3699 = vrot.lane.b32.xlu0 %v3198, 112
    %v3700 = vpop.permute.xlu0 %3699
    %3701 = vrot.lane.b32.xlu0 %v2741, 112
    %v3702 = vpop.permute.xlu0 %3701
    %3703 = vrot.lane.b32.xlu0 %v2746, 112
    %v3704 = vpop.permute.xlu0 %3703
    %v3705 = vsel %vm266, %v3700, 0
    %v3707 = vsel %vm266, %v3702, 0
    %v3709 = vsel %vm266, %v3704, 0
    %3711 = vmatprep.subr.mxu0 0.0
    %3712 = vmatpush1.xpose.msra.mxu0 0.0
    %3713 = vmatprep.subr.mxu0 0.0
    %3714 = vmatpush1.xpose.msra.mxu0 0.0
    %3715 = vmatprep.subr.mxu0 0.0
    %3716 = vmatpush1.xpose.msra.mxu0 0.0
    %3717 = vmatprep.subr.mxu0 0.0
    %3718 = vmatpush1.xpose.msra.mxu0 0.0
    %3719 = vmatprep.subr.mxu0 0.0
    %3720 = vmatpush1.xpose.msra.mxu0 0.0
    %3721 = vmatprep.subr.mxu0 0.0
    %3722 = vmatpush1.xpose.msra.mxu0 0.0
    %3723 = vmatprep.subr.mxu0 0.0
    %3724 = vmatpush1.xpose.msra.mxu0 0.0
    %3725 = vmatprep.subr.mxu0 0.0
    %3726 = vmatpush1.xpose.msra.mxu0 0.0
    %3727 = vmatprep.subr.mxu0 0.0
    %3728 = vmatpush1.xpose.msra.mxu0 0.0
    %3729 = vmatprep.subr.mxu0 0.0
    %3730 = vmatpush1.xpose.msra.mxu0 0.0
    %3731 = vmatprep.subr.mxu0 0.0
    %3732 = vmatpush1.xpose.msra.mxu0 0.0
    %3733 = vmatprep.subr.mxu0 0.0
    %3734 = vmatpush1.xpose.msra.mxu0 0.0
    %3735 = vmatprep.subr.mxu0 0.0
    %3736 = vmatpush1.xpose.msra.mxu0 0.0
    %3737 = vmatprep.subr.mxu0 0.0
    %3738 = vmatpush1.xpose.msra.mxu0 0.0
    %3739 = vmatprep.subr.mxu0 0.0
    %3740 = vmatpush1.xpose.msra.mxu0 %v3709
    %3741 = vmatprep.subr.mxu0 0.0
    %3742 = vmatpush1.xpose.msra.mxu0 %v3707
    %3743 = vmatprep.subr.mxu0 0.0
    %3744 = vmatpush2.xpose.msra.mxu0 0.0
    %3745 = vmatprep.subr.mxu0 0.0
    %3746 = vmatpush2.xpose.msra.mxu0 0.0
    %3747 = vmatprep.subr.mxu0 0.0
    %3748 = vmatpush2.xpose.msra.mxu0 0.0
    %3749 = vmatprep.subr.mxu0 0.0
    %3750 = vmatpush2.xpose.msra.mxu0 0.0
    %3751 = vmatprep.subr.mxu0 0.0
    %3752 = vmatpush2.xpose.msra.mxu0 0.0
    %3753 = vmatprep.subr.mxu0 0.0
    %3754 = vmatpush2.xpose.msra.mxu0 0.0
    %3755 = vmatprep.subr.mxu0 0.0
    %3756 = vmatpush2.xpose.msra.mxu0 0.0
    %3757 = vmatprep.subr.mxu0 0.0
    %3758 = vmatpush2.xpose.msra.mxu0 0.0
    %3759 = vmatprep.subr.mxu0 0.0
    %3760 = vmatpush2.xpose.msra.mxu0 0.0
    %3761 = vmatprep.subr.mxu0 0.0
    %3762 = vmatpush2.xpose.msra.mxu0 0.0
    %3763 = vmatprep.subr.mxu0 0.0
    %3764 = vmatpush2.xpose.msra.mxu0 0.0
    %3765 = vmatprep.subr.mxu0 0.0
    %3766 = vmatpush2.xpose.msra.mxu0 0.0
    %3767 = vmatprep.subr.mxu0 0.0
    %3768 = vmatpush2.xpose.msra.mxu0 0.0
    %3769 = vmatprep.subr.mxu0 0.0
    %3770 = vmatpush2.xpose.msra.mxu0 0.0
    %3771 = vmatprep.subr.mxu0 0.0
    %3772 = vmatpush2.xpose.msra.mxu0 0.0
    %3773 = vmatprep.subr.mxu0 0.0
    %3774 = vmatpush2.xpose.msra.mxu0 0.0
    %3775 = vmatprep.mubr.f32.mxu0 0.0
    %3776 = vmatmul.mubr.f32.gmra.mxu0 %v3705
    %v3777 = vpop.f32.mrf.mxu0
    %v3778 = vadd.f32 0.0, %v3777
    %v3779 = vpop.f32.mrf.mxu0
    %3780 = vdwg.mxu0
    %3781 = vrot.lane.b32.xlu0 %v3284, 112
    %v3782 = vpop.permute.xlu0 %3781
    %3783 = vrot.lane.b32.xlu0 %v2751, 112
    %v3784 = vpop.permute.xlu0 %3783
    %3785 = vrot.lane.b32.xlu0 %v2756, 112
    %v3786 = vpop.permute.xlu0 %3785
    %v3787 = vsel %vm266, %v3782, 0
    %v3789 = vsel %vm266, %v3784, 0
    %v3791 = vsel %vm266, %v3786, 0
    %3793 = vmatprep.subr.mxu0 0.0
    %3794 = vmatpush1.xpose.msra.mxu0 0.0
    %3795 = vmatprep.subr.mxu0 0.0
    %3796 = vmatpush1.xpose.msra.mxu0 0.0
    %3797 = vmatprep.subr.mxu0 0.0
    %3798 = vmatpush1.xpose.msra.mxu0 0.0
    %3799 = vmatprep.subr.mxu0 0.0
    %3800 = vmatpush1.xpose.msra.mxu0 0.0
    %3801 = vmatprep.subr.mxu0 0.0
    %3802 = vmatpush1.xpose.msra.mxu0 0.0
    %3803 = vmatprep.subr.mxu0 0.0
    %3804 = vmatpush1.xpose.msra.mxu0 0.0
    %3805 = vmatprep.subr.mxu0 0.0
    %3806 = vmatpush1.xpose.msra.mxu0 0.0
    %3807 = vmatprep.subr.mxu0 0.0
    %3808 = vmatpush1.xpose.msra.mxu0 0.0
    %3809 = vmatprep.subr.mxu0 0.0
    %3810 = vmatpush1.xpose.msra.mxu0 0.0
    %3811 = vmatprep.subr.mxu0 0.0
    %3812 = vmatpush1.xpose.msra.mxu0 0.0
    %3813 = vmatprep.subr.mxu0 0.0
    %3814 = vmatpush1.xpose.msra.mxu0 0.0
    %3815 = vmatprep.subr.mxu0 0.0
    %3816 = vmatpush1.xpose.msra.mxu0 0.0
    %3817 = vmatprep.subr.mxu0 0.0
    %3818 = vmatpush1.xpose.msra.mxu0 0.0
    %3819 = vmatprep.subr.mxu0 0.0
    %3820 = vmatpush1.xpose.msra.mxu0 0.0
    %3821 = vmatprep.subr.mxu0 0.0
    %3822 = vmatpush1.xpose.msra.mxu0 %v3791
    %3823 = vmatprep.subr.mxu0 0.0
    %3824 = vmatpush1.xpose.msra.mxu0 %v3789
    %3825 = vmatprep.subr.mxu0 0.0
    %3826 = vmatpush2.xpose.msra.mxu0 0.0
    %3827 = vmatprep.subr.mxu0 0.0
    %3828 = vmatpush2.xpose.msra.mxu0 0.0
    %3829 = vmatprep.subr.mxu0 0.0
    %3830 = vmatpush2.xpose.msra.mxu0 0.0
    %3831 = vmatprep.subr.mxu0 0.0
    %3832 = vmatpush2.xpose.msra.mxu0 0.0
    %3833 = vmatprep.subr.mxu0 0.0
    %3834 = vmatpush2.xpose.msra.mxu0 0.0
    %3835 = vmatprep.subr.mxu0 0.0
    %3836 = vmatpush2.xpose.msra.mxu0 0.0
    %3837 = vmatprep.subr.mxu0 0.0
    %3838 = vmatpush2.xpose.msra.mxu0 0.0
    %3839 = vmatprep.subr.mxu0 0.0
    %3840 = vmatpush2.xpose.msra.mxu0 0.0
    %3841 = vmatprep.subr.mxu0 0.0
    %3842 = vmatpush2.xpose.msra.mxu0 0.0
    %3843 = vmatprep.subr.mxu0 0.0
    %3844 = vmatpush2.xpose.msra.mxu0 0.0
    %3845 = vmatprep.subr.mxu0 0.0
    %3846 = vmatpush2.xpose.msra.mxu0 0.0
    %3847 = vmatprep.subr.mxu0 0.0
    %3848 = vmatpush2.xpose.msra.mxu0 0.0
    %3849 = vmatprep.subr.mxu0 0.0
    %3850 = vmatpush2.xpose.msra.mxu0 0.0
    %3851 = vmatprep.subr.mxu0 0.0
    %3852 = vmatpush2.xpose.msra.mxu0 0.0
    %3853 = vmatprep.subr.mxu0 0.0
    %3854 = vmatpush2.xpose.msra.mxu0 0.0
    %3855 = vmatprep.subr.mxu0 0.0
    %3856 = vmatpush2.xpose.msra.mxu0 0.0
    %3857 = vmatprep.mubr.f32.mxu0 0.0
    %3858 = vmatmul.mubr.f32.gmra.mxu0 %v3787
    %v3859 = vpop.f32.mrf.mxu0
    %v3860 = vadd.f32 0.0, %v3859
    %v3861 = vpop.f32.mrf.mxu0
    %3862 = vdwg.mxu0
    %v3863 = vsel %vm3014, %v3778, -inf
    %3864 = vmax.xlane.f32.xlu0 %v3863
    %v3865 = vpop.xlane.xlu0 %3864
    %v3866 = vsel %vm3014, %v3860, -inf
    %3867 = vmax.xlane.f32.xlu0 %v3866
    %v3868 = vpop.xlane.xlu0 %3867
    %v3869 = vsub.f32 %v3778, %v3865
    %v3870 = vsub.f32 %v3860, %v3868
    %v3871 = vmul.f32 %v3869, 1.442695
    %v3872 = vpow.pop %v3871
    %v3873 = vmul.f32 %v3870, 1.442695
    %v3874 = vpow.pop %v3873
    %v3875 = vsel %vm3014, %v3872, 0.0
    %3876 = vadd.xlane.f32.xlu0 %v3875
    %v3877 = vpop.xlane.xlu0 %3876
    %v3878 = vsel %vm3014, %v3874, 0.0
    %3879 = vadd.xlane.f32.xlu0 %v3878
    %v3880 = vpop.xlane.xlu0 %3879
    %v3881 = vrcp.pop %v3877
    %v3882 = vrcp.pop %v3880
    %v3883 = vmul.f32 %v3872, %v3881
    %v3884 = vmul.f32 %v3874, %v3882
    %3885 = vrot.lane.b32.xlu0 %v2741, 80
    %v3886 = vpop.permute.xlu0 %3885
    %3887 = vrot.lane.b32.xlu0 %v2746, 80
    %v3888 = vpop.permute.xlu0 %3887
    %v3892 = vsel %vm439, %v3883, 0
    %3894 = vmatprep.subr.mxu0 0.0
    %3895 = vmatpush1.msra.mxu0 0.0
    %3896 = vmatprep.subr.mxu0 0.0
    %3897 = vmatpush1.msra.mxu0 0.0
    %3898 = vmatprep.subr.mxu0 0.0
    %3899 = vmatpush1.msra.mxu0 0.0
    %3900 = vmatprep.subr.mxu0 0.0
    %3901 = vmatpush1.msra.mxu0 0.0
    %3902 = vmatprep.subr.mxu0 0.0
    %3903 = vmatpush1.msra.mxu0 0.0
    %3904 = vmatprep.subr.mxu0 0.0
    %3905 = vmatpush1.msra.mxu0 0.0
    %3906 = vmatprep.subr.mxu0 0.0
    %3907 = vmatpush1.msra.mxu0 0.0
    %3908 = vmatprep.subr.mxu0 0.0
    %3909 = vmatpush1.msra.mxu0 0.0
    %3910 = vmatprep.subr.mxu0 0.0
    %3911 = vmatpush1.msra.mxu0 0.0
    %3912 = vmatprep.subr.mxu0 0.0
    %3913 = vmatpush1.msra.mxu0 0.0
    %3914 = vmatprep.subr.mxu0 0.0
    %3915 = vmatpush1.msra.mxu0 0.0
    %3916 = vmatprep.subr.mxu0 0.0
    %3917 = vmatpush1.msra.mxu0 0.0
    %3918 = vmatprep.subr.mxu0 0.0
    %3919 = vmatpush1.msra.mxu0 0.0
    %3920 = vmatprep.subr.mxu0 0.0
    %3921 = vmatpush1.msra.mxu0 0.0
    %3922 = vmatprep.subr.mxu0 0.0
    %3923 = vmatpush1.msra.mxu0 %v3888
    %3924 = vmatprep.subr.mxu0 0.0
    %3925 = vmatpush1.msra.mxu0 %v3886
    %3926 = vmatprep.subr.mxu0 0.0
    %3927 = vmatpush2.msra.mxu0 0.0
    %3928 = vmatprep.subr.mxu0 0.0
    %3929 = vmatpush2.msra.mxu0 0.0
    %3930 = vmatprep.subr.mxu0 0.0
    %3931 = vmatpush2.msra.mxu0 0.0
    %3932 = vmatprep.subr.mxu0 0.0
    %3933 = vmatpush2.msra.mxu0 0.0
    %3934 = vmatprep.subr.mxu0 0.0
    %3935 = vmatpush2.msra.mxu0 0.0
    %3936 = vmatprep.subr.mxu0 0.0
    %3937 = vmatpush2.msra.mxu0 0.0
    %3938 = vmatprep.subr.mxu0 0.0
    %3939 = vmatpush2.msra.mxu0 0.0
    %3940 = vmatprep.subr.mxu0 0.0
    %3941 = vmatpush2.msra.mxu0 0.0
    %3942 = vmatprep.subr.mxu0 0.0
    %3943 = vmatpush2.msra.mxu0 0.0
    %3944 = vmatprep.subr.mxu0 0.0
    %3945 = vmatpush2.msra.mxu0 0.0
    %3946 = vmatprep.subr.mxu0 0.0
    %3947 = vmatpush2.msra.mxu0 0.0
    %3948 = vmatprep.subr.mxu0 0.0
    %3949 = vmatpush2.msra.mxu0 0.0
    %3950 = vmatprep.subr.mxu0 0.0
    %3951 = vmatpush2.msra.mxu0 0.0
    %3952 = vmatprep.subr.mxu0 0.0
    %3953 = vmatpush2.msra.mxu0 0.0
    %3954 = vmatprep.subr.mxu0 0.0
    %3955 = vmatpush2.msra.mxu0 0.0
    %3956 = vmatprep.subr.mxu0 0.0
    %3957 = vmatpush2.msra.mxu0 0.0
    %3958 = vmatprep.mubr.f32.mxu0 0.0
    %3959 = vmatmul.mubr.f32.gmra.mxu0 %v3892
    %v3960 = vpop.f32.mrf.mxu0
    %v3961 = vadd.f32 0.0, %v3960
    %v3962 = vpop.f32.mrf.mxu0
    %3963 = vdwg.mxu0
    %3964 = vrot.lane.b32.xlu0 %v2751, 80
    %v3965 = vpop.permute.xlu0 %3964
    %3966 = vrot.lane.b32.xlu0 %v2756, 80
    %v3967 = vpop.permute.xlu0 %3966
    %v3971 = vsel %vm439, %v3884, 0
    %3973 = vmatprep.subr.mxu0 0.0
    %3974 = vmatpush1.msra.mxu0 0.0
    %3975 = vmatprep.subr.mxu0 0.0
    %3976 = vmatpush1.msra.mxu0 0.0
    %3977 = vmatprep.subr.mxu0 0.0
    %3978 = vmatpush1.msra.mxu0 0.0
    %3979 = vmatprep.subr.mxu0 0.0
    %3980 = vmatpush1.msra.mxu0 0.0
    %3981 = vmatprep.subr.mxu0 0.0
    %3982 = vmatpush1.msra.mxu0 0.0
    %3983 = vmatprep.subr.mxu0 0.0
    %3984 = vmatpush1.msra.mxu0 0.0
    %3985 = vmatprep.subr.mxu0 0.0
    %3986 = vmatpush1.msra.mxu0 0.0
    %3987 = vmatprep.subr.mxu0 0.0
    %3988 = vmatpush1.msra.mxu0 0.0
    %3989 = vmatprep.subr.mxu0 0.0
    %3990 = vmatpush1.msra.mxu0 0.0
    %3991 = vmatprep.subr.mxu0 0.0
    %3992 = vmatpush1.msra.mxu0 0.0
    %3993 = vmatprep.subr.mxu0 0.0
    %3994 = vmatpush1.msra.mxu0 0.0
    %3995 = vmatprep.subr.mxu0 0.0
    %3996 = vmatpush1.msra.mxu0 0.0
    %3997 = vmatprep.subr.mxu0 0.0
    %3998 = vmatpush1.msra.mxu0 0.0
    %3999 = vmatprep.subr.mxu0 0.0
    %4000 = vmatpush1.msra.mxu0 0.0
    %4001 = vmatprep.subr.mxu0 0.0
    %4002 = vmatpush1.msra.mxu0 %v3967
    %4003 = vmatprep.subr.mxu0 0.0
    %4004 = vmatpush1.msra.mxu0 %v3965
    %4005 = vmatprep.subr.mxu0 0.0
    %4006 = vmatpush2.msra.mxu0 0.0
    %4007 = vmatprep.subr.mxu0 0.0
    %4008 = vmatpush2.msra.mxu0 0.0
    %4009 = vmatprep.subr.mxu0 0.0
    %4010 = vmatpush2.msra.mxu0 0.0
    %4011 = vmatprep.subr.mxu0 0.0
    %4012 = vmatpush2.msra.mxu0 0.0
    %4013 = vmatprep.subr.mxu0 0.0
    %4014 = vmatpush2.msra.mxu0 0.0
    %4015 = vmatprep.subr.mxu0 0.0
    %4016 = vmatpush2.msra.mxu0 0.0
    %4017 = vmatprep.subr.mxu0 0.0
    %4018 = vmatpush2.msra.mxu0 0.0
    %4019 = vmatprep.subr.mxu0 0.0
    %4020 = vmatpush2.msra.mxu0 0.0
    %4021 = vmatprep.subr.mxu0 0.0
    %4022 = vmatpush2.msra.mxu0 0.0
    %4023 = vmatprep.subr.mxu0 0.0
    %4024 = vmatpush2.msra.mxu0 0.0
    %4025 = vmatprep.subr.mxu0 0.0
    %4026 = vmatpush2.msra.mxu0 0.0
    %4027 = vmatprep.subr.mxu0 0.0
    %4028 = vmatpush2.msra.mxu0 0.0
    %4029 = vmatprep.subr.mxu0 0.0
    %4030 = vmatpush2.msra.mxu0 0.0
    %4031 = vmatprep.subr.mxu0 0.0
    %4032 = vmatpush2.msra.mxu0 0.0
    %4033 = vmatprep.subr.mxu0 0.0
    %4034 = vmatpush2.msra.mxu0 0.0
    %4035 = vmatprep.subr.mxu0 0.0
    %4036 = vmatpush2.msra.mxu0 0.0
    %4037 = vmatprep.mubr.f32.mxu0 0.0
    %4038 = vmatmul.mubr.f32.gmra.mxu0 %v3971
    %v4039 = vpop.f32.mrf.mxu0
    %v4040 = vadd.f32 0.0, %v4039
    %v4041 = vpop.f32.mrf.mxu0
    %4042 = vdwg.mxu0
    %v4045 = vrot.slane %v4040, 7
    %v4046 = vsel %vm2761, %v4045, %v3961
    %v4047 = vsel %vm266, %v4046, 0
    %4049 = vmatprep.subr.mxu0 0.0
    %4050 = vmatpush1.msra.mxu0 0.0
    %4051 = vmatprep.subr.mxu0 0.0
    %4052 = vmatpush1.msra.mxu0 0.0
    %4053 = vmatprep.subr.mxu0 0.0
    %4054 = vmatpush1.msra.mxu0 0.0
    %4055 = vmatprep.subr.mxu0 0.0
    %4056 = vmatpush1.msra.mxu0 0.0
    %4057 = vmatprep.subr.mxu0 0.0
    %4058 = vmatpush1.msra.mxu0 0.0
    %4059 = vmatprep.subr.mxu0 0.0
    %4060 = vmatpush1.msra.mxu0 0.0
    %4061 = vmatprep.subr.mxu0 0.0
    %4062 = vmatpush1.msra.mxu0 0.0
    %4063 = vmatprep.subr.mxu0 0.0
    %4064 = vmatpush1.msra.mxu0 0.0
    %4065 = vmatprep.subr.mxu0 0.0
    %4066 = vmatpush1.msra.mxu0 0.0
    %4067 = vmatprep.subr.mxu0 0.0
    %4068 = vmatpush1.msra.mxu0 0.0
    %4069 = vmatprep.subr.mxu0 0.0
    %4070 = vmatpush1.msra.mxu0 0.0
    %4071 = vmatprep.subr.mxu0 0.0
    %4072 = vmatpush1.msra.mxu0 0.0
    %4073 = vmatprep.subr.mxu0 0.0
    %4074 = vmatpush1.msra.mxu0 0.0
    %4075 = vmatprep.subr.mxu0 0.0
    %4076 = vmatpush1.msra.mxu0 0.0
    %4077 = vmatprep.subr.mxu0 0.0
    %4078 = vmatpush1.msra.mxu0 0.0
    %4079 = vmatprep.subr.mxu0 0.0
    %4080 = vmatpush1.msra.mxu0 %v2636
    %4081 = vmatprep.subr.mxu0 0.0
    %4082 = vmatpush2.msra.mxu0 0.0
    %4083 = vmatprep.subr.mxu0 0.0
    %4084 = vmatpush2.msra.mxu0 0.0
    %4085 = vmatprep.subr.mxu0 0.0
    %4086 = vmatpush2.msra.mxu0 0.0
    %4087 = vmatprep.subr.mxu0 0.0
    %4088 = vmatpush2.msra.mxu0 0.0
    %4089 = vmatprep.subr.mxu0 0.0
    %4090 = vmatpush2.msra.mxu0 0.0
    %4091 = vmatprep.subr.mxu0 0.0
    %4092 = vmatpush2.msra.mxu0 0.0
    %4093 = vmatprep.subr.mxu0 0.0
    %4094 = vmatpush2.msra.mxu0 0.0
    %4095 = vmatprep.subr.mxu0 0.0
    %4096 = vmatpush2.msra.mxu0 0.0
    %4097 = vmatprep.subr.mxu0 0.0
    %4098 = vmatpush2.msra.mxu0 0.0
    %4099 = vmatprep.subr.mxu0 0.0
    %4100 = vmatpush2.msra.mxu0 0.0
    %4101 = vmatprep.subr.mxu0 0.0
    %4102 = vmatpush2.msra.mxu0 0.0
    %4103 = vmatprep.subr.mxu0 0.0
    %4104 = vmatpush2.msra.mxu0 0.0
    %4105 = vmatprep.subr.mxu0 0.0
    %4106 = vmatpush2.msra.mxu0 0.0
    %4107 = vmatprep.subr.mxu0 0.0
    %4108 = vmatpush2.msra.mxu0 0.0
    %4109 = vmatprep.subr.mxu0 0.0
    %4110 = vmatpush2.msra.mxu0 0.0
    %4111 = vmatprep.subr.mxu0 0.0
    %4112 = vmatpush2.msra.mxu0 0.0
    %4113 = vmatprep.mubr.f32.mxu0 0.0
    %4114 = vmatmul.mubr.f32.gmra.mxu0 %v4047
    %v4115 = vpop.f32.mrf.mxu0
    %v4116 = vadd.f32 0.0, %v4115
    %v4117 = vpop.f32.mrf.mxu0
    %4118 = vdwg.mxu0
    %v4119 = vadd.f32 %v3696, %v4116
    %4120 = vrot.lane.b32.xlu0 %v3198, 104
    %v4121 = vpop.permute.xlu0 %4120
    %4122 = vrot.lane.b32.xlu0 %v2741, 104
    %v4123 = vpop.permute.xlu0 %4122
    %4124 = vrot.lane.b32.xlu0 %v2746, 104
    %v4125 = vpop.permute.xlu0 %4124
    %v4126 = vsel %vm266, %v4121, 0
    %v4128 = vsel %vm266, %v4123, 0
    %v4130 = vsel %vm266, %v4125, 0
    %4132 = vmatprep.subr.mxu0 0.0
    %4133 = vmatpush1.xpose.msra.mxu0 0.0
    %4134 = vmatprep.subr.mxu0 0.0
    %4135 = vmatpush1.xpose.msra.mxu0 0.0
    %4136 = vmatprep.subr.mxu0 0.0
    %4137 = vmatpush1.xpose.msra.mxu0 0.0
    %4138 = vmatprep.subr.mxu0 0.0
    %4139 = vmatpush1.xpose.msra.mxu0 0.0
    %4140 = vmatprep.subr.mxu0 0.0
    %4141 = vmatpush1.xpose.msra.mxu0 0.0
    %4142 = vmatprep.subr.mxu0 0.0
    %4143 = vmatpush1.xpose.msra.mxu0 0.0
    %4144 = vmatprep.subr.mxu0 0.0
    %4145 = vmatpush1.xpose.msra.mxu0 0.0
    %4146 = vmatprep.subr.mxu0 0.0
    %4147 = vmatpush1.xpose.msra.mxu0 0.0
    %4148 = vmatprep.subr.mxu0 0.0
    %4149 = vmatpush1.xpose.msra.mxu0 0.0
    %4150 = vmatprep.subr.mxu0 0.0
    %4151 = vmatpush1.xpose.msra.mxu0 0.0
    %4152 = vmatprep.subr.mxu0 0.0
    %4153 = vmatpush1.xpose.msra.mxu0 0.0
    %4154 = vmatprep.subr.mxu0 0.0
    %4155 = vmatpush1.xpose.msra.mxu0 0.0
    %4156 = vmatprep.subr.mxu0 0.0
    %4157 = vmatpush1.xpose.msra.mxu0 0.0
    %4158 = vmatprep.subr.mxu0 0.0
    %4159 = vmatpush1.xpose.msra.mxu0 0.0
    %4160 = vmatprep.subr.mxu0 0.0
    %4161 = vmatpush1.xpose.msra.mxu0 %v4130
    %4162 = vmatprep.subr.mxu0 0.0
    %4163 = vmatpush1.xpose.msra.mxu0 %v4128
    %4164 = vmatprep.subr.mxu0 0.0
    %4165 = vmatpush2.xpose.msra.mxu0 0.0
    %4166 = vmatprep.subr.mxu0 0.0
    %4167 = vmatpush2.xpose.msra.mxu0 0.0
    %4168 = vmatprep.subr.mxu0 0.0
    %4169 = vmatpush2.xpose.msra.mxu0 0.0
    %4170 = vmatprep.subr.mxu0 0.0
    %4171 = vmatpush2.xpose.msra.mxu0 0.0
    %4172 = vmatprep.subr.mxu0 0.0
    %4173 = vmatpush2.xpose.msra.mxu0 0.0
    %4174 = vmatprep.subr.mxu0 0.0
    %4175 = vmatpush2.xpose.msra.mxu0 0.0
    %4176 = vmatprep.subr.mxu0 0.0
    %4177 = vmatpush2.xpose.msra.mxu0 0.0
    %4178 = vmatprep.subr.mxu0 0.0
    %4179 = vmatpush2.xpose.msra.mxu0 0.0
    %4180 = vmatprep.subr.mxu0 0.0
    %4181 = vmatpush2.xpose.msra.mxu0 0.0
    %4182 = vmatprep.subr.mxu0 0.0
    %4183 = vmatpush2.xpose.msra.mxu0 0.0
    %4184 = vmatprep.subr.mxu0 0.0
    %4185 = vmatpush2.xpose.msra.mxu0 0.0
    %4186 = vmatprep.subr.mxu0 0.0
    %4187 = vmatpush2.xpose.msra.mxu0 0.0
    %4188 = vmatprep.subr.mxu0 0.0
    %4189 = vmatpush2.xpose.msra.mxu0 0.0
    %4190 = vmatprep.subr.mxu0 0.0
    %4191 = vmatpush2.xpose.msra.mxu0 0.0
    %4192 = vmatprep.subr.mxu0 0.0
    %4193 = vmatpush2.xpose.msra.mxu0 0.0
    %4194 = vmatprep.subr.mxu0 0.0
    %4195 = vmatpush2.xpose.msra.mxu0 0.0
    %4196 = vmatprep.mubr.f32.mxu0 0.0
    %4197 = vmatmul.mubr.f32.gmra.mxu0 %v4126
    %v4198 = vpop.f32.mrf.mxu0
    %v4199 = vadd.f32 0.0, %v4198
    %v4200 = vpop.f32.mrf.mxu0
    %4201 = vdwg.mxu0
    %4202 = vrot.lane.b32.xlu0 %v3284, 104
    %v4203 = vpop.permute.xlu0 %4202
    %4204 = vrot.lane.b32.xlu0 %v2751, 104
    %v4205 = vpop.permute.xlu0 %4204
    %4206 = vrot.lane.b32.xlu0 %v2756, 104
    %v4207 = vpop.permute.xlu0 %4206
    %v4208 = vsel %vm266, %v4203, 0
    %v4210 = vsel %vm266, %v4205, 0
    %v4212 = vsel %vm266, %v4207, 0
    %4214 = vmatprep.subr.mxu0 0.0
    %4215 = vmatpush1.xpose.msra.mxu0 0.0
    %4216 = vmatprep.subr.mxu0 0.0
    %4217 = vmatpush1.xpose.msra.mxu0 0.0
    %4218 = vmatprep.subr.mxu0 0.0
    %4219 = vmatpush1.xpose.msra.mxu0 0.0
    %4220 = vmatprep.subr.mxu0 0.0
    %4221 = vmatpush1.xpose.msra.mxu0 0.0
    %4222 = vmatprep.subr.mxu0 0.0
    %4223 = vmatpush1.xpose.msra.mxu0 0.0
    %4224 = vmatprep.subr.mxu0 0.0
    %4225 = vmatpush1.xpose.msra.mxu0 0.0
    %4226 = vmatprep.subr.mxu0 0.0
    %4227 = vmatpush1.xpose.msra.mxu0 0.0
    %4228 = vmatprep.subr.mxu0 0.0
    %4229 = vmatpush1.xpose.msra.mxu0 0.0
    %4230 = vmatprep.subr.mxu0 0.0
    %4231 = vmatpush1.xpose.msra.mxu0 0.0
    %4232 = vmatprep.subr.mxu0 0.0
    %4233 = vmatpush1.xpose.msra.mxu0 0.0
    %4234 = vmatprep.subr.mxu0 0.0
    %4235 = vmatpush1.xpose.msra.mxu0 0.0
    %4236 = vmatprep.subr.mxu0 0.0
    %4237 = vmatpush1.xpose.msra.mxu0 0.0
    %4238 = vmatprep.subr.mxu0 0.0
    %4239 = vmatpush1.xpose.msra.mxu0 0.0
    %4240 = vmatprep.subr.mxu0 0.0
    %4241 = vmatpush1.xpose.msra.mxu0 0.0
    %4242 = vmatprep.subr.mxu0 0.0
    %4243 = vmatpush1.xpose.msra.mxu0 %v4212
    %4244 = vmatprep.subr.mxu0 0.0
    %4245 = vmatpush1.xpose.msra.mxu0 %v4210
    %4246 = vmatprep.subr.mxu0 0.0
    %4247 = vmatpush2.xpose.msra.mxu0 0.0
    %4248 = vmatprep.subr.mxu0 0.0
    %4249 = vmatpush2.xpose.msra.mxu0 0.0
    %4250 = vmatprep.subr.mxu0 0.0
    %4251 = vmatpush2.xpose.msra.mxu0 0.0
    %4252 = vmatprep.subr.mxu0 0.0
    %4253 = vmatpush2.xpose.msra.mxu0 0.0
    %4254 = vmatprep.subr.mxu0 0.0
    %4255 = vmatpush2.xpose.msra.mxu0 0.0
    %4256 = vmatprep.subr.mxu0 0.0
    %4257 = vmatpush2.xpose.msra.mxu0 0.0
    %4258 = vmatprep.subr.mxu0 0.0
    %4259 = vmatpush2.xpose.msra.mxu0 0.0
    %4260 = vmatprep.subr.mxu0 0.0
    %4261 = vmatpush2.xpose.msra.mxu0 0.0
    %4262 = vmatprep.subr.mxu0 0.0
    %4263 = vmatpush2.xpose.msra.mxu0 0.0
    %4264 = vmatprep.subr.mxu0 0.0
    %4265 = vmatpush2.xpose.msra.mxu0 0.0
    %4266 = vmatprep.subr.mxu0 0.0
    %4267 = vmatpush2.xpose.msra.mxu0 0.0
    %4268 = vmatprep.subr.mxu0 0.0
    %4269 = vmatpush2.xpose.msra.mxu0 0.0
    %4270 = vmatprep.subr.mxu0 0.0
    %4271 = vmatpush2.xpose.msra.mxu0 0.0
    %4272 = vmatprep.subr.mxu0 0.0
    %4273 = vmatpush2.xpose.msra.mxu0 0.0
    %4274 = vmatprep.subr.mxu0 0.0
    %4275 = vmatpush2.xpose.msra.mxu0 0.0
    %4276 = vmatprep.subr.mxu0 0.0
    %4277 = vmatpush2.xpose.msra.mxu0 0.0
    %4278 = vmatprep.mubr.f32.mxu0 0.0
    %4279 = vmatmul.mubr.f32.gmra.mxu0 %v4208
    %v4280 = vpop.f32.mrf.mxu0
    %v4281 = vadd.f32 0.0, %v4280
    %v4282 = vpop.f32.mrf.mxu0
    %4283 = vdwg.mxu0
    %v4284 = vsel %vm3014, %v4199, -inf
    %4285 = vmax.xlane.f32.xlu0 %v4284
    %v4286 = vpop.xlane.xlu0 %4285
    %v4287 = vsel %vm3014, %v4281, -inf
    %4288 = vmax.xlane.f32.xlu0 %v4287
    %v4289 = vpop.xlane.xlu0 %4288
    %v4290 = vsub.f32 %v4199, %v4286
    %v4291 = vsub.f32 %v4281, %v4289
    %v4292 = vmul.f32 %v4290, 1.442695
    %v4293 = vpow.pop %v4292
    %v4294 = vmul.f32 %v4291, 1.442695
    %v4295 = vpow.pop %v4294
    %v4296 = vsel %vm3014, %v4293, 0.0
    %4297 = vadd.xlane.f32.xlu0 %v4296
    %v4298 = vpop.xlane.xlu0 %4297
    %v4299 = vsel %vm3014, %v4295, 0.0
    %4300 = vadd.xlane.f32.xlu0 %v4299
    %v4301 = vpop.xlane.xlu0 %4300
    %v4302 = vrcp.pop %v4298
    %v4303 = vrcp.pop %v4301
    %v4304 = vmul.f32 %v4293, %v4302
    %v4305 = vmul.f32 %v4295, %v4303
    %4306 = vrot.lane.b32.xlu0 %v2741, 72
    %v4307 = vpop.permute.xlu0 %4306
    %4308 = vrot.lane.b32.xlu0 %v2746, 72
    %v4309 = vpop.permute.xlu0 %4308
    %v4313 = vsel %vm439, %v4304, 0
    %4315 = vmatprep.subr.mxu0 0.0
    %4316 = vmatpush1.msra.mxu0 0.0
    %4317 = vmatprep.subr.mxu0 0.0
    %4318 = vmatpush1.msra.mxu0 0.0
    %4319 = vmatprep.subr.mxu0 0.0
    %4320 = vmatpush1.msra.mxu0 0.0
    %4321 = vmatprep.subr.mxu0 0.0
    %4322 = vmatpush1.msra.mxu0 0.0
    %4323 = vmatprep.subr.mxu0 0.0
    %4324 = vmatpush1.msra.mxu0 0.0
    %4325 = vmatprep.subr.mxu0 0.0
    %4326 = vmatpush1.msra.mxu0 0.0
    %4327 = vmatprep.subr.mxu0 0.0
    %4328 = vmatpush1.msra.mxu0 0.0
    %4329 = vmatprep.subr.mxu0 0.0
    %4330 = vmatpush1.msra.mxu0 0.0
    %4331 = vmatprep.subr.mxu0 0.0
    %4332 = vmatpush1.msra.mxu0 0.0
    %4333 = vmatprep.subr.mxu0 0.0
    %4334 = vmatpush1.msra.mxu0 0.0
    %4335 = vmatprep.subr.mxu0 0.0
    %4336 = vmatpush1.msra.mxu0 0.0
    %4337 = vmatprep.subr.mxu0 0.0
    %4338 = vmatpush1.msra.mxu0 0.0
    %4339 = vmatprep.subr.mxu0 0.0
    %4340 = vmatpush1.msra.mxu0 0.0
    %4341 = vmatprep.subr.mxu0 0.0
    %4342 = vmatpush1.msra.mxu0 0.0
    %4343 = vmatprep.subr.mxu0 0.0
    %4344 = vmatpush1.msra.mxu0 %v4309
    %4345 = vmatprep.subr.mxu0 0.0
    %4346 = vmatpush1.msra.mxu0 %v4307
    %4347 = vmatprep.subr.mxu0 0.0
    %4348 = vmatpush2.msra.mxu0 0.0
    %4349 = vmatprep.subr.mxu0 0.0
    %4350 = vmatpush2.msra.mxu0 0.0
    %4351 = vmatprep.subr.mxu0 0.0
    %4352 = vmatpush2.msra.mxu0 0.0
    %4353 = vmatprep.subr.mxu0 0.0
    %4354 = vmatpush2.msra.mxu0 0.0
    %4355 = vmatprep.subr.mxu0 0.0
    %4356 = vmatpush2.msra.mxu0 0.0
    %4357 = vmatprep.subr.mxu0 0.0
    %4358 = vmatpush2.msra.mxu0 0.0
    %4359 = vmatprep.subr.mxu0 0.0
    %4360 = vmatpush2.msra.mxu0 0.0
    %4361 = vmatprep.subr.mxu0 0.0
    %4362 = vmatpush2.msra.mxu0 0.0
    %4363 = vmatprep.subr.mxu0 0.0
    %4364 = vmatpush2.msra.mxu0 0.0
    %4365 = vmatprep.subr.mxu0 0.0
    %4366 = vmatpush2.msra.mxu0 0.0
    %4367 = vmatprep.subr.mxu0 0.0
    %4368 = vmatpush2.msra.mxu0 0.0
    %4369 = vmatprep.subr.mxu0 0.0
    %4370 = vmatpush2.msra.mxu0 0.0
    %4371 = vmatprep.subr.mxu0 0.0
    %4372 = vmatpush2.msra.mxu0 0.0
    %4373 = vmatprep.subr.mxu0 0.0
    %4374 = vmatpush2.msra.mxu0 0.0
    %4375 = vmatprep.subr.mxu0 0.0
    %4376 = vmatpush2.msra.mxu0 0.0
    %4377 = vmatprep.subr.mxu0 0.0
    %4378 = vmatpush2.msra.mxu0 0.0
    %4379 = vmatprep.mubr.f32.mxu0 0.0
    %4380 = vmatmul.mubr.f32.gmra.mxu0 %v4313
    %v4381 = vpop.f32.mrf.mxu0
    %v4382 = vadd.f32 0.0, %v4381
    %v4383 = vpop.f32.mrf.mxu0
    %4384 = vdwg.mxu0
    %4385 = vrot.lane.b32.xlu0 %v2751, 72
    %v4386 = vpop.permute.xlu0 %4385
    %4387 = vrot.lane.b32.xlu0 %v2756, 72
    %v4388 = vpop.permute.xlu0 %4387
    %v4392 = vsel %vm439, %v4305, 0
    %4394 = vmatprep.subr.mxu0 0.0
    %4395 = vmatpush1.msra.mxu0 0.0
    %4396 = vmatprep.subr.mxu0 0.0
    %4397 = vmatpush1.msra.mxu0 0.0
    %4398 = vmatprep.subr.mxu0 0.0
    %4399 = vmatpush1.msra.mxu0 0.0
    %4400 = vmatprep.subr.mxu0 0.0
    %4401 = vmatpush1.msra.mxu0 0.0
    %4402 = vmatprep.subr.mxu0 0.0
    %4403 = vmatpush1.msra.mxu0 0.0
    %4404 = vmatprep.subr.mxu0 0.0
    %4405 = vmatpush1.msra.mxu0 0.0
    %4406 = vmatprep.subr.mxu0 0.0
    %4407 = vmatpush1.msra.mxu0 0.0
    %4408 = vmatprep.subr.mxu0 0.0
    %4409 = vmatpush1.msra.mxu0 0.0
    %4410 = vmatprep.subr.mxu0 0.0
    %4411 = vmatpush1.msra.mxu0 0.0
    %4412 = vmatprep.subr.mxu0 0.0
    %4413 = vmatpush1.msra.mxu0 0.0
    %4414 = vmatprep.subr.mxu0 0.0
    %4415 = vmatpush1.msra.mxu0 0.0
    %4416 = vmatprep.subr.mxu0 0.0
    %4417 = vmatpush1.msra.mxu0 0.0
    %4418 = vmatprep.subr.mxu0 0.0
    %4419 = vmatpush1.msra.mxu0 0.0
    %4420 = vmatprep.subr.mxu0 0.0
    %4421 = vmatpush1.msra.mxu0 0.0
    %4422 = vmatprep.subr.mxu0 0.0
    %4423 = vmatpush1.msra.mxu0 %v4388
    %4424 = vmatprep.subr.mxu0 0.0
    %4425 = vmatpush1.msra.mxu0 %v4386
    %4426 = vmatprep.subr.mxu0 0.0
    %4427 = vmatpush2.msra.mxu0 0.0
    %4428 = vmatprep.subr.mxu0 0.0
    %4429 = vmatpush2.msra.mxu0 0.0
    %4430 = vmatprep.subr.mxu0 0.0
    %4431 = vmatpush2.msra.mxu0 0.0
    %4432 = vmatprep.subr.mxu0 0.0
    %4433 = vmatpush2.msra.mxu0 0.0
    %4434 = vmatprep.subr.mxu0 0.0
    %4435 = vmatpush2.msra.mxu0 0.0
    %4436 = vmatprep.subr.mxu0 0.0
    %4437 = vmatpush2.msra.mxu0 0.0
    %4438 = vmatprep.subr.mxu0 0.0
    %4439 = vmatpush2.msra.mxu0 0.0
    %4440 = vmatprep.subr.mxu0 0.0
    %4441 = vmatpush2.msra.mxu0 0.0
    %4442 = vmatprep.subr.mxu0 0.0
    %4443 = vmatpush2.msra.mxu0 0.0
    %4444 = vmatprep.subr.mxu0 0.0
    %4445 = vmatpush2.msra.mxu0 0.0
    %4446 = vmatprep.subr.mxu0 0.0
    %4447 = vmatpush2.msra.mxu0 0.0
    %4448 = vmatprep.subr.mxu0 0.0
    %4449 = vmatpush2.msra.mxu0 0.0
    %4450 = vmatprep.subr.mxu0 0.0
    %4451 = vmatpush2.msra.mxu0 0.0
    %4452 = vmatprep.subr.mxu0 0.0
    %4453 = vmatpush2.msra.mxu0 0.0
    %4454 = vmatprep.subr.mxu0 0.0
    %4455 = vmatpush2.msra.mxu0 0.0
    %4456 = vmatprep.subr.mxu0 0.0
    %4457 = vmatpush2.msra.mxu0 0.0
    %4458 = vmatprep.mubr.f32.mxu0 0.0
    %4459 = vmatmul.mubr.f32.gmra.mxu0 %v4392
    %v4460 = vpop.f32.mrf.mxu0
    %v4461 = vadd.f32 0.0, %v4460
    %v4462 = vpop.f32.mrf.mxu0
    %4463 = vdwg.mxu0
    %v4466 = vrot.slane %v4461, 7
    %v4467 = vsel %vm2761, %v4466, %v4382
    %v4468 = vsel %vm266, %v4467, 0
    %4470 = vmatprep.subr.mxu0 0.0
    %4471 = vmatpush1.msra.mxu0 0.0
    %4472 = vmatprep.subr.mxu0 0.0
    %4473 = vmatpush1.msra.mxu0 0.0
    %4474 = vmatprep.subr.mxu0 0.0
    %4475 = vmatpush1.msra.mxu0 0.0
    %4476 = vmatprep.subr.mxu0 0.0
    %4477 = vmatpush1.msra.mxu0 0.0
    %4478 = vmatprep.subr.mxu0 0.0
    %4479 = vmatpush1.msra.mxu0 0.0
    %4480 = vmatprep.subr.mxu0 0.0
    %4481 = vmatpush1.msra.mxu0 0.0
    %4482 = vmatprep.subr.mxu0 0.0
    %4483 = vmatpush1.msra.mxu0 0.0
    %4484 = vmatprep.subr.mxu0 0.0
    %4485 = vmatpush1.msra.mxu0 0.0
    %4486 = vmatprep.subr.mxu0 0.0
    %4487 = vmatpush1.msra.mxu0 0.0
    %4488 = vmatprep.subr.mxu0 0.0
    %4489 = vmatpush1.msra.mxu0 0.0
    %4490 = vmatprep.subr.mxu0 0.0
    %4491 = vmatpush1.msra.mxu0 0.0
    %4492 = vmatprep.subr.mxu0 0.0
    %4493 = vmatpush1.msra.mxu0 0.0
    %4494 = vmatprep.subr.mxu0 0.0
    %4495 = vmatpush1.msra.mxu0 0.0
    %4496 = vmatprep.subr.mxu0 0.0
    %4497 = vmatpush1.msra.mxu0 0.0
    %4498 = vmatprep.subr.mxu0 0.0
    %4499 = vmatpush1.msra.mxu0 0.0
    %4500 = vmatprep.subr.mxu0 0.0
    %4501 = vmatpush1.msra.mxu0 %v2637
    %4502 = vmatprep.subr.mxu0 0.0
    %4503 = vmatpush2.msra.mxu0 0.0
    %4504 = vmatprep.subr.mxu0 0.0
    %4505 = vmatpush2.msra.mxu0 0.0
    %4506 = vmatprep.subr.mxu0 0.0
    %4507 = vmatpush2.msra.mxu0 0.0
    %4508 = vmatprep.subr.mxu0 0.0
    %4509 = vmatpush2.msra.mxu0 0.0
    %4510 = vmatprep.subr.mxu0 0.0
    %4511 = vmatpush2.msra.mxu0 0.0
    %4512 = vmatprep.subr.mxu0 0.0
    %4513 = vmatpush2.msra.mxu0 0.0
    %4514 = vmatprep.subr.mxu0 0.0
    %4515 = vmatpush2.msra.mxu0 0.0
    %4516 = vmatprep.subr.mxu0 0.0
    %4517 = vmatpush2.msra.mxu0 0.0
    %4518 = vmatprep.subr.mxu0 0.0
    %4519 = vmatpush2.msra.mxu0 0.0
    %4520 = vmatprep.subr.mxu0 0.0
    %4521 = vmatpush2.msra.mxu0 0.0
    %4522 = vmatprep.subr.mxu0 0.0
    %4523 = vmatpush2.msra.mxu0 0.0
    %4524 = vmatprep.subr.mxu0 0.0
    %4525 = vmatpush2.msra.mxu0 0.0
    %4526 = vmatprep.subr.mxu0 0.0
    %4527 = vmatpush2.msra.mxu0 0.0
    %4528 = vmatprep.subr.mxu0 0.0
    %4529 = vmatpush2.msra.mxu0 0.0
    %4530 = vmatprep.subr.mxu0 0.0
    %4531 = vmatpush2.msra.mxu0 0.0
    %4532 = vmatprep.subr.mxu0 0.0
    %4533 = vmatpush2.msra.mxu0 0.0
    %4534 = vmatprep.mubr.f32.mxu0 0.0
    %4535 = vmatmul.mubr.f32.gmra.mxu0 %v4468
    %v4536 = vpop.f32.mrf.mxu0
    %v4537 = vadd.f32 0.0, %v4536
    %v4538 = vpop.f32.mrf.mxu0
    %4539 = vdwg.mxu0
    %v4540 = vadd.f32 %v4119, %v4537
    %v4542 = vrot.slane %v4540, 1
    %v4543 = vrot.slane %v4540, 2
    %v4546 = vadd.f32 %v2623, %v4542
    %v4547 = vadd.f32 %v2625, %v4543
    %v4548 = vlaneseq
    %v4549 = vshrl.u32 %v4548, 7
    %v4550 = vsub.s32 1, %v4549
    %v4551 = vrot.slane %v2627, %v4550
    %v4552 = vadd.f32 %v4546, %v4551
    %v4553 = vadd.f32 %v4547, %v4551
    %v4556 = vrot.slane %v4553, 7
    %vm4559 = vcmask 261127
    %v4560 = vsel %vm4559, %v4552, 0.0
    %4561 = vadd.xlane.f32.xlu0 %v4560
    %v4562 = vpop.xlane.xlu0 %4561
    %vm4563 = vcmask 253952
    %v4564 = vsel %vm4563, %v4556, 0.0
    %4565 = vadd.xlane.f32.xlu0 %v4564
    %v4566 = vpop.xlane.xlu0 %4565
    %v4567 = vmul.f32 %v4562, %v2278
    %v4568 = vmul.f32 %v4566, %v2278
    %v4571 = vrot.slane %v4568, 1
    %v4574 = vsub.f32 %v4552, %v4567
    %v4575 = vsub.f32 %v4553, %v4571
    %v4576 = vmul.f32 %v4574, %v4574
    %v4577 = vmul.f32 %v4575, %v4575
    %v4580 = vrot.slane %v4577, 7
    %v4583 = vsel %vm4559, %v4576, 0.0
    %4584 = vadd.xlane.f32.xlu0 %v4583
    %v4585 = vpop.xlane.xlu0 %4584
    %v4586 = vsel %vm4563, %v4580, 0.0
    %4587 = vadd.xlane.f32.xlu0 %v4586
    %v4588 = vpop.xlane.xlu0 %4587
    %v4589 = vmul.f32 %v4585, %v2278
    %v4590 = vmul.f32 %v4588, %v2278
    %v4591 = vadd.f32 %v4589, 1e-05
    %v4592 = vadd.f32 %v4590, 1e-05
    %v4593 = vrsqrt.pop %v4591
    %v4594 = vrsqrt.pop %v4592
    %v4597 = vrot.slane %v4594, 1
    %v4600 = vmul.f32 %v4574, %v4593
    %v4601 = vmul.f32 %v4575, %v4597
    %v4602 = vlaneseq
    %v4603 = vshrl.u32 %v4602, 7
    %v4604 = vsub.s32 2, %v4603
    %v4605 = vrot.slane %v2627, %v4604
    %v4606 = vmul.f32 %v4600, %v4605
    %v4607 = vmul.f32 %v4601, %v4605
    %v4608 = vlaneseq
    %v4609 = vshrl.u32 %v4608, 7
    %v4610 = vsub.s32 3, %v4609
    %v4611 = vrot.slane %v2627, %v4610
    %v4612 = vadd.f32 %v4606, %v4611
    %v4613 = vadd.f32 %v4607, %v4611
    %s4614 = scalar_lea.vmem %s5, 32
    %v4615 = vld [vmem:[%s4614] sm:$0xff]
    %v4616 = vld [vmem:[%s4614 + $0x8] sm:$0xff]
    %v4617 = vld [vmem:[%s4614 + $0x10] sm:$0xff]
    %v4618 = vld [vmem:[%s4614 + $0x18] sm:$0xff]
    %s4619 = scalar_lea.vmem %s6, 64
    %v4620 = vld [vmem:[%s4619] sm:$0xff]
    %v4621 = vld [vmem:[%s4619 + $0x8] sm:$0xff]
    %v4622 = vld [vmem:[%s4619 + $0x10] sm:$0xff]
    %v4623 = vld [vmem:[%s4619 + $0x18] sm:$0xff]
    %v4624 = vld [vmem:[%s4619 + $0x20] sm:$0xff]
    %v4625 = vld [vmem:[%s4619 + $0x28] sm:$0xff]
    %v4626 = vld [vmem:[%s4619 + $0x30] sm:$0xff]
    %v4627 = vld [vmem:[%s4619 + $0x38] sm:$0xff]
    %v4628 = vlaneseq
    %v4629 = vshrl.u32 %v4628, 7
    %v4630 = vsub.s32 4, %v4629
    %v4631 = vrot.slane %v2627, %v4630
    %v4634 = vrot.slane %v4612, 7
    %v4635 = vrot.slane %v4613, 6
    %v4636 = vsel %vm2761, %v4635, %v4634
    %v4637 = vsel %vm162, %v4636, 0
    %4639 = vmatprep.subr.mxu0 0.0
    %4640 = vmatpush1.msra.mxu0 0.0
    %4641 = vmatprep.subr.mxu0 0.0
    %4642 = vmatpush1.msra.mxu0 0.0
    %4643 = vmatprep.subr.mxu0 0.0
    %4644 = vmatpush1.msra.mxu0 0.0
    %4645 = vmatprep.subr.mxu0 0.0
    %4646 = vmatpush1.msra.mxu0 0.0
    %4647 = vmatprep.subr.mxu0 0.0
    %4648 = vmatpush1.msra.mxu0 0.0
    %4649 = vmatprep.subr.mxu0 0.0
    %4650 = vmatpush1.msra.mxu0 0.0
    %4651 = vmatprep.subr.mxu0 0.0
    %4652 = vmatpush1.msra.mxu0 0.0
    %4653 = vmatprep.subr.mxu0 0.0
    %4654 = vmatpush1.msra.mxu0 0.0
    %4655 = vmatprep.subr.mxu0 0.0
    %4656 = vmatpush1.msra.mxu0 0.0
    %4657 = vmatprep.subr.mxu0 0.0
    %4658 = vmatpush1.msra.mxu0 0.0
    %4659 = vmatprep.subr.mxu0 0.0
    %4660 = vmatpush1.msra.mxu0 0.0
    %4661 = vmatprep.subr.mxu0 0.0
    %4662 = vmatpush1.msra.mxu0 0.0
    %4663 = vmatprep.subr.mxu0 0.0
    %4664 = vmatpush1.msra.mxu0 %v4618
    %4665 = vmatprep.subr.mxu0 0.0
    %4666 = vmatpush1.msra.mxu0 %v4617
    %4667 = vmatprep.subr.mxu0 0.0
    %4668 = vmatpush1.msra.mxu0 %v4616
    %4669 = vmatprep.subr.mxu0 0.0
    %4670 = vmatpush1.msra.mxu0 %v4615
    %4671 = vmatprep.subr.mxu0 0.0
    %4672 = vmatpush2.msra.mxu0 0.0
    %4673 = vmatprep.subr.mxu0 0.0
    %4674 = vmatpush2.msra.mxu0 0.0
    %4675 = vmatprep.subr.mxu0 0.0
    %4676 = vmatpush2.msra.mxu0 0.0
    %4677 = vmatprep.subr.mxu0 0.0
    %4678 = vmatpush2.msra.mxu0 0.0
    %4679 = vmatprep.subr.mxu0 0.0
    %4680 = vmatpush2.msra.mxu0 0.0
    %4681 = vmatprep.subr.mxu0 0.0
    %4682 = vmatpush2.msra.mxu0 0.0
    %4683 = vmatprep.subr.mxu0 0.0
    %4684 = vmatpush2.msra.mxu0 0.0
    %4685 = vmatprep.subr.mxu0 0.0
    %4686 = vmatpush2.msra.mxu0 0.0
    %4687 = vmatprep.subr.mxu0 0.0
    %4688 = vmatpush2.msra.mxu0 0.0
    %4689 = vmatprep.subr.mxu0 0.0
    %4690 = vmatpush2.msra.mxu0 0.0
    %4691 = vmatprep.subr.mxu0 0.0
    %4692 = vmatpush2.msra.mxu0 0.0
    %4693 = vmatprep.subr.mxu0 0.0
    %4694 = vmatpush2.msra.mxu0 0.0
    %4695 = vmatprep.subr.mxu0 0.0
    %4696 = vmatpush2.msra.mxu0 0.0
    %4697 = vmatprep.subr.mxu0 0.0
    %4698 = vmatpush2.msra.mxu0 0.0
    %4699 = vmatprep.subr.mxu0 0.0
    %4700 = vmatpush2.msra.mxu0 0.0
    %4701 = vmatprep.subr.mxu0 0.0
    %4702 = vmatpush2.msra.mxu0 0.0
    %4703 = vmatprep.mubr.f32.mxu0 0.0
    %4704 = vmatmul.mubr.f32.gmra.mxu0 %v4637
    %v4705 = vpop.f32.mrf.mxu0
    %v4706 = vadd.f32 %v4631, %v4705
    %v4707 = vpop.f32.mrf.mxu0
    %4708 = vdwg.mxu0
    %v4709 = vmax.f32 %v4706, 0.0
    %v4710 = vlaneseq
    %v4711 = vshrl.u32 %v4710, 7
    %v4712 = vsub.s32 5, %v4711
    %v4713 = vrot.slane %v2627, %v4712
    %v4715 = vsel %vm2456, %v4709, 0
    %4717 = vmatprep.subr.mxu0 0.0
    %4718 = vmatpush1.msra.mxu0 0.0
    %4719 = vmatprep.subr.mxu0 0.0
    %4720 = vmatpush1.msra.mxu0 0.0
    %4721 = vmatprep.subr.mxu0 0.0
    %4722 = vmatpush1.msra.mxu0 0.0
    %4723 = vmatprep.subr.mxu0 0.0
    %4724 = vmatpush1.msra.mxu0 0.0
    %4725 = vmatprep.subr.mxu0 0.0
    %4726 = vmatpush1.msra.mxu0 0.0
    %4727 = vmatprep.subr.mxu0 0.0
    %4728 = vmatpush1.msra.mxu0 0.0
    %4729 = vmatprep.subr.mxu0 0.0
    %4730 = vmatpush1.msra.mxu0 0.0
    %4731 = vmatprep.subr.mxu0 0.0
    %4732 = vmatpush1.msra.mxu0 0.0
    %4733 = vmatprep.subr.mxu0 0.0
    %4734 = vmatpush1.msra.mxu0 %v4627
    %4735 = vmatprep.subr.mxu0 0.0
    %4736 = vmatpush1.msra.mxu0 %v4626
    %4737 = vmatprep.subr.mxu0 0.0
    %4738 = vmatpush1.msra.mxu0 %v4625
    %4739 = vmatprep.subr.mxu0 0.0
    %4740 = vmatpush1.msra.mxu0 %v4624
    %4741 = vmatprep.subr.mxu0 0.0
    %4742 = vmatpush1.msra.mxu0 %v4623
    %4743 = vmatprep.subr.mxu0 0.0
    %4744 = vmatpush1.msra.mxu0 %v4622
    %4745 = vmatprep.subr.mxu0 0.0
    %4746 = vmatpush1.msra.mxu0 %v4621
    %4747 = vmatprep.subr.mxu0 0.0
    %4748 = vmatpush1.msra.mxu0 %v4620
    %4749 = vmatprep.subr.mxu0 0.0
    %4750 = vmatpush2.msra.mxu0 0.0
    %4751 = vmatprep.subr.mxu0 0.0
    %4752 = vmatpush2.msra.mxu0 0.0
    %4753 = vmatprep.subr.mxu0 0.0
    %4754 = vmatpush2.msra.mxu0 0.0
    %4755 = vmatprep.subr.mxu0 0.0
    %4756 = vmatpush2.msra.mxu0 0.0
    %4757 = vmatprep.subr.mxu0 0.0
    %4758 = vmatpush2.msra.mxu0 0.0
    %4759 = vmatprep.subr.mxu0 0.0
    %4760 = vmatpush2.msra.mxu0 0.0
    %4761 = vmatprep.subr.mxu0 0.0
    %4762 = vmatpush2.msra.mxu0 0.0
    %4763 = vmatprep.subr.mxu0 0.0
    %4764 = vmatpush2.msra.mxu0 0.0
    %4765 = vmatprep.subr.mxu0 0.0
    %4766 = vmatpush2.msra.mxu0 0.0
    %4767 = vmatprep.subr.mxu0 0.0
    %4768 = vmatpush2.msra.mxu0 0.0
    %4769 = vmatprep.subr.mxu0 0.0
    %4770 = vmatpush2.msra.mxu0 0.0
    %4771 = vmatprep.subr.mxu0 0.0
    %4772 = vmatpush2.msra.mxu0 0.0
    %4773 = vmatprep.subr.mxu0 0.0
    %4774 = vmatpush2.msra.mxu0 0.0
    %4775 = vmatprep.subr.mxu0 0.0
    %4776 = vmatpush2.msra.mxu0 0.0
    %4777 = vmatprep.subr.mxu0 0.0
    %4778 = vmatpush2.msra.mxu0 0.0
    %4779 = vmatprep.subr.mxu0 0.0
    %4780 = vmatpush2.msra.mxu0 0.0
    %4781 = vmatprep.mubr.f32.mxu0 0.0
    %4782 = vmatmul.mubr.f32.gmra.mxu0 %v4715
    %v4783 = vpop.f32.mrf.mxu0
    %v4784 = vadd.f32 %v4713, %v4783
    %v4785 = vpop.f32.mrf.mxu0
    %4786 = vdwg.mxu0
    %v4788 = vrot.slane %v4784, 1
    %v4789 = vrot.slane %v4784, 2
    %v4792 = vadd.f32 %v4612, %v4788
    %v4793 = vadd.f32 %v4613, %v4789
    %v4796 = vrot.slane %v4793, 7
    %v4799 = vsel %vm4559, %v4792, 0.0
    %4800 = vadd.xlane.f32.xlu0 %v4799
    %v4801 = vpop.xlane.xlu0 %4800
    %v4802 = vsel %vm4563, %v4796, 0.0
    %4803 = vadd.xlane.f32.xlu0 %v4802
    %v4804 = vpop.xlane.xlu0 %4803
    %v4805 = vmul.f32 %v4801, %v2278
    %v4806 = vmul.f32 %v4804, %v2278
    %v4809 = vrot.slane %v4806, 1
    %v4812 = vsub.f32 %v4792, %v4805
    %v4813 = vsub.f32 %v4793, %v4809
    %v4814 = vmul.f32 %v4812, %v4812
    %v4815 = vmul.f32 %v4813, %v4813
    %v4818 = vrot.slane %v4815, 7
    %v4821 = vsel %vm4559, %v4814, 0.0
    %4822 = vadd.xlane.f32.xlu0 %v4821
    %v4823 = vpop.xlane.xlu0 %4822
    %v4824 = vsel %vm4563, %v4818, 0.0
    %4825 = vadd.xlane.f32.xlu0 %v4824
    %v4826 = vpop.xlane.xlu0 %4825
    %v4827 = vmul.f32 %v4823, %v2278
    %v4828 = vmul.f32 %v4826, %v2278
    %v4829 = vadd.f32 %v4827, 1e-05
    %v4830 = vadd.f32 %v4828, 1e-05
    %v4831 = vrsqrt.pop %v4829
    %v4832 = vrsqrt.pop %v4830
    %v4835 = vrot.slane %v4832, 1
    %v4838 = vmul.f32 %v4812, %v4831
    %v4839 = vmul.f32 %v4813, %v4835
    %v4840 = vlaneseq
    %v4841 = vshrl.u32 %v4840, 7
    %v4842 = vsub.s32 6, %v4841
    %v4843 = vrot.slane %v2627, %v4842
    %v4844 = vmul.f32 %v4838, %v4843
    %v4845 = vmul.f32 %v4839, %v4843
    %v4846 = vlaneseq
    %v4847 = vshrl.u32 %v4846, 7
    %v4848 = vsub.s32 7, %v4847
    %v4849 = vrot.slane %v2627, %v4848
    %v4850 = vadd.f32 %v4844, %v4849
    %v4851 = vadd.f32 %v4845, %v4849
    %v4852 = vld [vmem:[%s9] sm:$0xff]
    %v4855 = vrot.slane %v4851, 7
    %v4858 = vsel %vm4559, %v4850, 0.0
    %4859 = vadd.xlane.f32.xlu0 %v4858
    %v4860 = vpop.xlane.xlu0 %4859
    %v4861 = vsel %vm4563, %v4855, 0.0
    %4862 = vadd.xlane.f32.xlu0 %v4861
    %v4863 = vpop.xlane.xlu0 %4862
    %v4864 = vmul.f32 %v4860, %v2278
    %v4865 = vmul.f32 %v4863, %v2278
    %v4868 = vrot.slane %v4865, 1
    %v4871 = vsub.f32 %v4850, %v4864
    %v4872 = vsub.f32 %v4851, %v4868
    %v4873 = vmul.f32 %v4871, %v4871
    %v4874 = vmul.f32 %v4872, %v4872
    %v4877 = vrot.slane %v4874, 7
    %v4880 = vsel %vm4559, %v4873, 0.0
    %4881 = vadd.xlane.f32.xlu0 %v4880
    %v4882 = vpop.xlane.xlu0 %4881
    %v4883 = vsel %vm4563, %v4877, 0.0
    %4884 = vadd.xlane.f32.xlu0 %v4883
    %v4885 = vpop.xlane.xlu0 %4884
    %v4886 = vmul.f32 %v4882, %v2278
    %v4887 = vmul.f32 %v4885, %v2278
    %v4888 = vadd.f32 %v4886, 1e-05
    %v4889 = vadd.f32 %v4887, 1e-05
    %v4890 = vrsqrt.pop %v4888
    %v4891 = vrsqrt.pop %v4889
    %v4894 = vrot.slane %v4891, 1
    %v4897 = vmul.f32 %v4871, %v4890
    %v4898 = vmul.f32 %v4872, %v4894
    %v4899 = vlaneseq
    %v4900 = vshrl.u32 %v4899, 7
    %v4901 = vsub.s32 0, %v4900
    %v4902 = vrot.slane %v4852, %v4901
    %v4903 = vmul.f32 %v4897, %v4902
    %v4904 = vmul.f32 %v4898, %v4902
    %v4905 = vlaneseq
    %v4906 = vshrl.u32 %v4905, 7
    %v4907 = vsub.s32 1, %v4906
    %v4908 = vrot.slane %v4852, %v4907
    %v4909 = vadd.f32 %v4903, %v4908
    %v4910 = vadd.f32 %v4904, %v4908
    %v4911 = vld [vmem:[%s8] sm:$0xff]
    %v4912 = vld [vmem:[%s8 + $0x8] sm:$0xff]
    %v4913 = vld [vmem:[%s8 + $0x10] sm:$0xff]
    %v4914 = vld [vmem:[%s8 + $0x18] sm:$0xff]
    %v4915 = vlaneseq
    %v4916 = vshrl.u32 %v4915, 7
    %v4917 = vsub.s32 2, %v4916
    %v4918 = vrot.slane %v4852, %v4917
    %v4921 = vrot.slane %v4909, 7
    %v4922 = vrot.slane %v4910, 6
    %v4923 = vsel %vm2761, %v4922, %v4921
    %v4924 = vsel %vm162, %v4923, 0
    %4926 = vmatprep.subr.mxu0 0.0
    %4927 = vmatpush1.msra.mxu0 0.0
    %4928 = vmatprep.subr.mxu0 0.0
    %4929 = vmatpush1.msra.mxu0 0.0
    %4930 = vmatprep.subr.mxu0 0.0
    %4931 = vmatpush1.msra.mxu0 0.0
    %4932 = vmatprep.subr.mxu0 0.0
    %4933 = vmatpush1.msra.mxu0 0.0
    %4934 = vmatprep.subr.mxu0 0.0
    %4935 = vmatpush1.msra.mxu0 0.0
    %4936 = vmatprep.subr.mxu0 0.0
    %4937 = vmatpush1.msra.mxu0 0.0
    %4938 = vmatprep.subr.mxu0 0.0
    %4939 = vmatpush1.msra.mxu0 0.0
    %4940 = vmatprep.subr.mxu0 0.0
    %4941 = vmatpush1.msra.mxu0 0.0
    %4942 = vmatprep.subr.mxu0 0.0
    %4943 = vmatpush1.msra.mxu0 0.0
    %4944 = vmatprep.subr.mxu0 0.0
    %4945 = vmatpush1.msra.mxu0 0.0
    %4946 = vmatprep.subr.mxu0 0.0
    %4947 = vmatpush1.msra.mxu0 0.0
    %4948 = vmatprep.subr.mxu0 0.0
    %4949 = vmatpush1.msra.mxu0 0.0
    %4950 = vmatprep.subr.mxu0 0.0
    %4951 = vmatpush1.msra.mxu0 %v4914
    %4952 = vmatprep.subr.mxu0 0.0
    %4953 = vmatpush1.msra.mxu0 %v4913
    %4954 = vmatprep.subr.mxu0 0.0
    %4955 = vmatpush1.msra.mxu0 %v4912
    %4956 = vmatprep.subr.mxu0 0.0
    %4957 = vmatpush1.msra.mxu0 %v4911
    %4958 = vmatprep.subr.mxu0 0.0
    %4959 = vmatpush2.msra.mxu0 0.0
    %4960 = vmatprep.subr.mxu0 0.0
    %4961 = vmatpush2.msra.mxu0 0.0
    %4962 = vmatprep.subr.mxu0 0.0
    %4963 = vmatpush2.msra.mxu0 0.0
    %4964 = vmatprep.subr.mxu0 0.0
    %4965 = vmatpush2.msra.mxu0 0.0
    %4966 = vmatprep.subr.mxu0 0.0
    %4967 = vmatpush2.msra.mxu0 0.0
    %4968 = vmatprep.subr.mxu0 0.0
    %4969 = vmatpush2.msra.mxu0 0.0
    %4970 = vmatprep.subr.mxu0 0.0
    %4971 = vmatpush2.msra.mxu0 0.0
    %4972 = vmatprep.subr.mxu0 0.0
    %4973 = vmatpush2.msra.mxu0 0.0
    %4974 = vmatprep.subr.mxu0 0.0
    %4975 = vmatpush2.msra.mxu0 0.0
    %4976 = vmatprep.subr.mxu0 0.0
    %4977 = vmatpush2.msra.mxu0 0.0
    %4978 = vmatprep.subr.mxu0 0.0
    %4979 = vmatpush2.msra.mxu0 0.0
    %4980 = vmatprep.subr.mxu0 0.0
    %4981 = vmatpush2.msra.mxu0 0.0
    %4982 = vmatprep.subr.mxu0 0.0
    %4983 = vmatpush2.msra.mxu0 0.0
    %4984 = vmatprep.subr.mxu0 0.0
    %4985 = vmatpush2.msra.mxu0 0.0
    %4986 = vmatprep.subr.mxu0 0.0
    %4987 = vmatpush2.msra.mxu0 0.0
    %4988 = vmatprep.subr.mxu0 0.0
    %4989 = vmatpush2.msra.mxu0 0.0
    %4990 = vmatprep.mubr.f32.mxu0 0.0
    %4991 = vmatmul.mubr.f32.gmra.mxu0 %v4924
    %v4992 = vpop.f32.mrf.mxu0
    %v4993 = vadd.f32 %v4918, %v4992
    %v4994 = vpop.f32.mrf.mxu0
    %4995 = vdwg.mxu0
    %v4998 = vunpack.c.l.s4 1966171168
    %v4999 = vunpack.c.0.s8 %v4998
    %v5000 = vlaneseq
    %v5001 = vshrl.u32 %v5000, 7
    %v5002 = vsub.s32 %v4999, %v5001
    %v5003 = vrot.slane %v4993, %v5002
    %v5004 = vcombine.high %v5003, %v5003
    %v5006 = vunpack.c.l.s4 1966171168
    %v5007 = vunpack.c.0.s8 %v5006
    %v5008 = vlaneseq
    %v5009 = vshrl.u32 %v5008, 7
    %v5010 = vsub.s32 %v5007, %v5009
    %v5011 = vrot.slane %v5003, %v5010
    %v5013 = vunpack.c.l.s4 1966171168
    %v5014 = vunpack.c.0.s8 %v5013
    %v5015 = vlaneseq
    %v5016 = vshrl.u32 %v5015, 7
    %v5017 = vsub.s32 %v5014, %v5016
    %v5018 = vrot.slane %v5004, %v5017
    %vm5021 = vcmask 49152
    %5022 = vst.msk [vmem:[#allocation2] sm:$0x1] %vm5021, %v5011
    %5023 = vst.msk [vmem:[#allocation2 + $0x1] sm:$0x1] %vm5021, %v5018
    // Predicated region
    $region42: #{au_forward.1} parent=1 // pred_check
      _
    $region43: #{au_forward.1} parent=1 // pred_check_branch
      %5025 = sbr.rel (0) target = $region45
    $region44: #{au_forward.1} parent=1 // pred_region
      %s5027 = ssub.s32 32, 32
      %5028 = vsyncadd [#allocation3], %s5027
      %s5029 = sshll.u32 [#allocation2], 4
      %s5030 = int_to_ptr.vmem [resolvable:$true] %s5029
      %5035 = dma.vmem_to_hbm [thread:$0]  %s5030, 32, %s10, [#allocation3], 16, 16, 1
    $region45: #{au_forward.1} parent=1 // pred_fallthru
      _
    // Predicated region
    $region46: #{au_forward.1} parent=1 // pred_check
      _
    $region47: #{au_forward.1} parent=1 // pred_check_branch
      %5037 = sbr.rel (0) target = $region49
    $region48: #{au_forward.1} parent=1 // pred_region
      %5038 = dma.done [#allocation3], 32
    $region49: #{au_forward.1} parent=1 // pred_fallthru
      _
    %5039 = vsyncpa [#allocation3], 1

</llo_original>
